<compile_context>
chip_gen: v7x
topology: tpu7x:2x2x1
jax: 0.10.0
libtpu: 0.0.40
codegen_flags: <defaults>
</compile_context>

<pallas_src>
import functools
from typing import NamedTuple

import jax
import jax.numpy as jnp
from jax.experimental import pallas as pl
from jax.experimental.pallas import tpu as pltpu


def _silu(v):
    return v * jax.nn.sigmoid(v)


def _round_up(a, m):
    return ((a + m - 1) // m) * m


class CBMMeta(NamedTuple):
    K: int      # real number of concepts
    Cd: int     # context_dim
    D: int      # input_dim
    kt: int     # concepts per tile
    n_k: int    # number of concept tiles
    HT: int     # padded per-tile h width     = round_up(kt*Cd, 128)
    PT: int     # padded per-tile probs width = round_up(kt, 128)


# ---------------------------------------------------------------------------
# Kernel: one (concept-tile, batch-tile) grid cell, all 4 matmuls fused.
# ---------------------------------------------------------------------------
def cbm_fused_kernel(x_ref,
                     w_in_ref, b_in_ref,
                     w_pre_ref, b_pre_ref,
                     w_diff_ref, b_diff_ref,
                     expand_ref,
                     h_ref, p_ref):
    cdt = w_in_ref.dtype                       # MXU input dtype (f32 or bf16)
    ht = h_ref.shape[-1]

    x = x_ref[...].astype(cdt)                 # (TB, D)

    # Layer 1: fused pos|neg input projection for this tile's concepts + SiLU.
    # Column layout: [pos (HT) | neg (HT)], concept-major, zero-padded.
    pn = jnp.dot(x, w_in_ref[0], preferred_element_type=jnp.float32)
    pn = _silu(pn + b_in_ref[0])               # (TB, 2*HT) f32

    # Layer 2: per-concept pre_prob Linear(2*Cd -> Cd) as a per-tile
    # block-diagonal matmul (built in the wrapper; no in-kernel slicing) + SiLU.
    z = jnp.dot(pn.astype(cdt), w_pre_ref[0], preferred_element_type=jnp.float32)
    z = _silu(z + b_pre_ref[0])                # (TB, HT) f32

    # Layer 3: per-concept Linear(Cd -> 2) + Softmax(dim=1), folded into a
    # logit-difference matmul + sigmoid (mathematically identical).
    logit = jnp.dot(z.astype(cdt), w_diff_ref[0], preferred_element_type=jnp.float32)
    p = jax.nn.sigmoid(logit + b_diff_ref[0])  # (TB, PT) f32  == prob_pos

    # Broadcast prob_pos over each concept's Cd columns via a 0/1 matmul
    # (MXU) instead of an in-kernel reshape/relayout (XLU).
    p_exp = jnp.dot(p.astype(cdt), expand_ref[...],
                    preferred_element_type=jnp.float32)      # (TB, HT)

    pos = pn[:, :ht]
    neg = pn[:, ht:]
    # context = p_pos*pos + p_neg*neg, with p_neg = 1 - p_pos.
    h_ref[...] = (neg + p_exp * (pos - neg)).astype(h_ref.dtype)
    p_ref[...] = p.astype(p_ref.dtype)


# ---------------------------------------------------------------------------
# Wrapper-side weight packing (runs ONCE, not per forward call).
# ---------------------------------------------------------------------------
def _block_diag(blocks):
    """blocks: (n_k, kt, r, c) -> per-tile block-diagonal (n_k, kt*r, kt*c)."""
    n_k, kt, r, c = blocks.shape
    eye = jnp.eye(kt, dtype=blocks.dtype)
    out = jnp.einsum('nkij,kl->nkilj', blocks, eye)
    return out.reshape(n_k, kt * r, kt * c)


def _pad_last(a, new_sizes):
    """Zero-pad the trailing len(new_sizes) dims of `a` up to new_sizes."""
    lead = a.ndim - len(new_sizes)
    pads = [(0, 0)] * lead + [(0, n - s) for s, n in zip(a.shape[lead:], new_sizes)]
    return jnp.pad(a, pads)


def pack_cbm_params(params, *, kt=None, compute_dtype=jnp.float32):
    """Pack per-concept weights into concept-tiled, lane-dense, pre-transposed
    slabs.  Padded concepts / columns carry zero weights (their outputs are
    sliced off in the wrapper)."""
    K, Cd, D = params["w_pos"].shape

    if kt is None:
        # Target ~256 output columns per concept tile (MXU-friendly on v5e/v6e/v7x).
        kt = max(1, min(K, 256 // Cd)) if Cd <= 256 else 1
    n_k = -(-K // kt)
    K_pad = n_k * kt
    HT = _round_up(kt * Cd, 128)
    PT = _round_up(kt, 128)

    def pad_k(a):       # pad concept axis (leading) to K_pad with zeros
        return jnp.pad(a, [(0, K_pad - K)] + [(0, 0)] * (a.ndim - 1))

    w_pos, b_pos = pad_k(params["w_pos"]), pad_k(params["b_pos"])
    w_neg, b_neg = pad_k(params["w_neg"]), pad_k(params["b_neg"])
    w_pre, b_pre = pad_k(params["w_pre"]), pad_k(params["b_pre"])
    w_prob, b_prob = pad_k(params["w_prob"]), pad_k(params["b_prob"])

    def in_proj(w):     # (K_pad, Cd, D) -> (n_k, D, HT), concept-major columns
        w = w.reshape(n_k, kt, Cd, D).transpose(0, 3, 1, 2).reshape(n_k, D, kt * Cd)
        return _pad_last(w, (HT,))

    def in_bias(b):     # (K_pad, Cd) -> (n_k, 1, HT)
        return _pad_last(b.reshape(n_k, 1, kt * Cd), (HT,))

    w_in = jnp.concatenate([in_proj(w_pos), in_proj(w_neg)], axis=2)   # (n_k, D, 2*HT)
    b_in = jnp.concatenate([in_bias(b_pos), in_bias(b_neg)], axis=2)   # (n_k, 1, 2*HT)

    # Per-tile block-diagonal pre_prob weight, matching the [pos | neg] layout.
    def pre_bd(w_part):  # (K_pad, Cd_out, Cd_in) -> block-diag of (in, out)
        blocks = jnp.transpose(w_part, (0, 2, 1)).reshape(n_k, kt, Cd, Cd)
        return _pad_last(_block_diag(blocks), (HT, HT))                # (n_k, HT, HT)

    w_pre_t = jnp.concatenate([pre_bd(w_pre[:, :, :Cd]),
                               pre_bd(w_pre[:, :, Cd:])], axis=1)      # (n_k, 2*HT, HT)
    b_pre_t = _pad_last(b_pre.reshape(n_k, 1, kt * Cd), (HT,))         # (n_k, 1, HT)

    # Softmax over 2 classes == sigmoid(logit_pos - logit_neg).
    w_d = (w_prob[:, 0, :] - w_prob[:, 1, :]).reshape(n_k, kt, Cd, 1)
    w_diff = _pad_last(_block_diag(w_d), (HT, PT))                     # (n_k, HT, PT)
    b_diff = _pad_last((b_prob[:, 0] - b_prob[:, 1]).reshape(n_k, 1, kt), (PT,))

    # Shared 0/1 expansion matrix: prob column m -> h columns [m*Cd, (m+1)*Cd).
    expand = _block_diag(jnp.ones((1, kt, 1, Cd), jnp.float32))[0]     # (kt, kt*Cd)
    expand = _pad_last(expand, (PT, HT))                               # (PT, HT)

    cdt = jnp.dtype(compute_dtype)
    packed = {
        "w_in": w_in.astype(cdt),   "b_in": b_in.astype(jnp.float32),
        "w_pre": w_pre_t.astype(cdt), "b_pre": b_pre_t.astype(jnp.float32),
        "w_diff": w_diff.astype(cdt), "b_diff": b_diff.astype(jnp.float32),
        "expand": expand.astype(cdt),
    }
    meta = CBMMeta(K=K, Cd=Cd, D=D, kt=kt, n_k=n_k, HT=HT, PT=PT)
    return packed, meta


# ---------------------------------------------------------------------------
# Forward.
# ---------------------------------------------------------------------------
def _vmem_bytes(TB, D, HT, PT, wsize, wbuf):
    wt = (D * 2 * HT + 2 * HT * HT + HT * PT + PT * HT) * wsize \
         + (2 * HT + HT + PT) * 4
    io = 2 * TB * D * 4 + 2 * TB * (HT + PT) * 4          # double-buffered x / outs
    tmp = TB * (2 * HT + 2 * HT + 2 * HT + PT + HT) * 4   # live f32 intermediates
    return wbuf * wt + io + tmp


def _cbm_forward_impl(x, packed, *, meta, single_buffer_weights):
    B, D = x.shape
    assert D == meta.D, "input_dim mismatch with packed params"
    K, Cd, kt, n_k, HT, PT = meta.K, meta.Cd, meta.kt, meta.n_k, meta.HT, meta.PT
    wsize = jnp.dtype(packed["w_in"].dtype).itemsize
    wbuf = 1 if single_buffer_weights else 2

    # Batch tile: always tiled, multiple of 8, >= 2 steps when B > 8 (so the
    # "parallel" axes shard across v7x's two TensorCores), shrunk if needed to
    # respect the VMEM budget.
    budget = 40 * (1 << 20)
    TB = B if B <= 8 else min(256, _round_up(-(-B // 2), 8))
    while TB > 8 and _vmem_bytes(TB, D, HT, PT, wsize, wbuf) > budget:
        TB = max(8, _round_up(TB // 2, 8))
    n_b = pl.cdiv(B, TB)

    vmem_limit = int(min(48 * (1 << 20),
                         max(32 * (1 << 20),
                             int(1.4 * _vmem_bytes(TB, D, HT, PT, wsize, wbuf)))))

    def wspec(shape, index_map):
        # Weight / bias / expand operands: single-buffered (they only change on
        # the outer concept-tile axis, so the extra pipeline buffer is waste).
        if single_buffer_weights:
            return pl.BlockSpec(shape, index_map, pipeline_mode=pl.Buffered(1))
        return pl.BlockSpec(shape, index_map)

    grid_spec = pltpu.PrefetchScalarGridSpec(
        num_scalar_prefetch=0,
        # Concept tiles outer -> each tile's weight blocks are fetched once and
        # reused (deduped) across all inner batch steps.
        grid=(n_k, n_b),
        in_specs=[
            pl.BlockSpec((TB, D), lambda k, b: (b, 0)),              # x
            wspec((1, D, 2 * HT), lambda k, b: (k, 0, 0)),           # W_in
            wspec((1, 1, 2 * HT), lambda k, b: (k, 0, 0)),           # b_in
            wspec((1, 2 * HT, HT), lambda k, b: (k, 0, 0)),          # W_pre (block-diag)
            wspec((1, 1, HT), lambda k, b: (k, 0, 0)),               # b_pre
            wspec((1, HT, PT), lambda k, b: (k, 0, 0)),              # W_diff
            wspec((1, 1, PT), lambda k, b: (k, 0, 0)),               # b_diff
            wspec((PT, HT), lambda k, b: (0, 0)),                    # expand (shared)
        ],
        out_specs=[
            pl.BlockSpec((TB, HT), lambda k, b: (b, k)),             # h  (padded)
            pl.BlockSpec((TB, PT), lambda k, b: (b, k)),             # probs (padded)
        ],
    )

    h_pad, p_pad = pl.pallas_call(
        cbm_fused_kernel,
        out_shape=(jax.ShapeDtypeStruct((B, n_k * HT), jnp.float32),
                   jax.ShapeDtypeStruct((B, n_k * PT), jnp.float32)),
        grid_spec=grid_spec,
        compiler_params=pltpu.CompilerParams(
            dimension_semantics=("parallel", "parallel"),
            vmem_limit_bytes=vmem_limit),
    )(x, packed["w_in"], packed["b_in"], packed["w_pre"], packed["b_pre"],
      packed["w_diff"], packed["b_diff"], packed["expand"])

    # Strip lane/concept padding (wrapper-side layout plumbing only).
    h = h_pad.reshape(B, n_k, HT)[:, :, :kt * Cd].reshape(B, n_k * kt * Cd)[:, :K * Cd]
    probs = p_pad.reshape(B, n_k, PT)[:, :, :kt].reshape(B, n_k * kt)[:, :K]
    return h, probs


def make_cbm_forward(params, *, compute_dtype=jnp.float32, kt=None,
                     single_buffer_weights=True):
    """Pack weights once and return a jitted forward(x) -> (h, probs)."""
    packed, meta = pack_cbm_params(params, kt=kt, compute_dtype=compute_dtype)
    fwd = jax.jit(functools.partial(_cbm_forward_impl, meta=meta,
                                    single_buffer_weights=single_buffer_weights))
    return lambda x: fwd(x, packed)


# ---------------------------------------------------------------------------
# Pure-JAX reference mirroring the PyTorch forward (no interventions).
# ---------------------------------------------------------------------------
def cbm_new_reference(x, params):
    K = params["w_pos"].shape[0]
    concepts, probs = [], []
    for i in range(K):
        pos = _silu(x @ params["w_pos"][i].T + params["b_pos"][i])
        neg = _silu(x @ params["w_neg"][i].T + params["b_neg"][i])
        z = jnp.concatenate([pos, neg], axis=1)
        z = _silu(z @ params["w_pre"][i].T + params["b_pre"][i])
        logits = z @ params["w_prob"][i].T + params["b_prob"][i]
        p = jax.nn.softmax(logits, axis=1)
        concepts.append(p[:, 0:1] * pos + p[:, 1:2] * neg)
        probs.append(p[:, 0])
    return jnp.concatenate(concepts, axis=1), jnp.stack(probs, axis=1)


def init_params(key, input_dim, num_concepts, context_dim):
    """Deterministic PyTorch-Linear-style init, stacked over concepts."""
    def uniform(k, shape, fan_in):
        bound = 1.0 / jnp.sqrt(jnp.float32(fan_in))
        return jax.random.uniform(k, shape, jnp.float32, -bound, bound)

    ks = jax.random.split(key, 8)
    K, Cd, D = num_concepts, context_dim, input_dim
    return {
        "w_pos":  uniform(ks[0], (K, Cd, D), D),
        "b_pos":  uniform(ks[1], (K, Cd), D),
        "w_neg":  uniform(ks[2], (K, Cd, D), D),
        "b_neg":  uniform(ks[3], (K, Cd), D),
        "w_pre":  uniform(ks[4], (K, Cd, 2 * Cd), 2 * Cd),
        "b_pre":  uniform(ks[5], (K, Cd), 2 * Cd),
        "w_prob": uniform(ks[6], (K, 2, Cd), Cd),
        "b_prob": uniform(ks[7], (K, 2), Cd),
    }


if __name__ == "__main__":
    # B=24 deliberately exercises a partial last batch block (TB=16 -> 16+8).
    B, input_dim, num_concepts, context_dim = 24, 32, 3, 5

    key = jax.random.PRNGKey(0)
    kx, kp = jax.random.split(key)
    x = jax.random.normal(kx, (B, input_dim), jnp.float32)
    params = init_params(kp, input_dim, num_concepts, context_dim)

    h_ref, probs_ref = cbm_new_reference(x, params)

    def build_and_run(**opts):
        # pl.Buffered(1) single-buffering may not be supported on every jax
        # version; fall back to default double buffering if it is rejected.
        try:
            return make_cbm_forward(params, single_buffer_weights=True, **opts)(x)
        except Exception:
            return make_cbm_forward(params, single_buffer_weights=False, **opts)(x)

    # Config A: f32 MXU inputs, default concept tiling (single tile), tight tol.
    h, probs = build_and_run()
    h = jax.block_until_ready(h)
    probs = jax.block_until_ready(probs)
    assert h.shape == (B, num_concepts * context_dim)
    assert probs.shape == (B, num_concepts)
    assert jnp.allclose(h, h_ref, atol=1e-5, rtol=1e-5)
    assert jnp.allclose(probs, probs_ref, atol=1e-5, rtol=1e-5)

    # Config B: bf16 MXU inputs + forced multi-concept-tile path (kt=2 -> two
    # tiles with a padded concept) + partial last batch block; bf16 tolerance.
    h2, probs2 = build_and_run(compute_dtype=jnp.bfloat16, kt=2)
    h2 = jax.block_until_ready(h2)
    probs2 = jax.block_until_ready(probs2)
    assert h2.shape == (B, num_concepts * context_dim)
    assert probs2.shape == (B, num_concepts)
    assert jnp.allclose(h2, h_ref, atol=3e-2, rtol=3e-2)
    assert jnp.allclose(probs2, probs_ref, atol=3e-2, rtol=3e-2)

    print("KERNEL_OK")
</pallas_src>

<mosaic_0001>
module attributes {stable_mosaic.version = 11 : i64} {
  func.func @cbm_fused_kernel(%arg0: i32, %arg1: i32, %arg2: memref<16x32xf32, #tpu.memory_space<vmem>>, %arg3: memref<1x32x256xf32, #tpu.memory_space<vmem>>, %arg4: memref<1x1x256xf32, #tpu.memory_space<vmem>>, %arg5: memref<1x256x128xf32, #tpu.memory_space<vmem>>, %arg6: memref<1x1x128xf32, #tpu.memory_space<vmem>>, %arg7: memref<1x128x128xf32, #tpu.memory_space<vmem>>, %arg8: memref<1x1x128xf32, #tpu.memory_space<vmem>>, %arg9: memref<128x128xf32, #tpu.memory_space<vmem>>, %arg10: memref<16x128xf32, #tpu.memory_space<vmem>>, %arg11: memref<16x128xf32, #tpu.memory_space<vmem>>) attributes {dimension_semantics = [#tpu.dimension_semantics<parallel>, #tpu.dimension_semantics<parallel>], iteration_bounds = array<i64: 1, 2>, scalar_prefetch = 0 : i64, scratch_operands = 0 : i64, tpu.core_type = #tpu.core_type<tc>, window_params = [{transform_indices = @transform_0, window_bounds = array<i64: 16, 32>}, {pipeline_mode = #tpu.pipeline_mode<synchronous>, transform_indices = @transform_1, window_bounds = array<i64: 1, 32, 256>}, {pipeline_mode = #tpu.pipeline_mode<synchronous>, transform_indices = @transform_2, window_bounds = array<i64: 1, 1, 256>}, {pipeline_mode = #tpu.pipeline_mode<synchronous>, transform_indices = @transform_3, window_bounds = array<i64: 1, 256, 128>}, {pipeline_mode = #tpu.pipeline_mode<synchronous>, transform_indices = @transform_4, window_bounds = array<i64: 1, 1, 128>}, {pipeline_mode = #tpu.pipeline_mode<synchronous>, transform_indices = @transform_5, window_bounds = array<i64: 1, 128, 128>}, {pipeline_mode = #tpu.pipeline_mode<synchronous>, transform_indices = @transform_6, window_bounds = array<i64: 1, 1, 128>}, {pipeline_mode = #tpu.pipeline_mode<synchronous>, transform_indices = @transform_7, window_bounds = array<i64: 128, 128>}, {transform_indices = @transform_8, window_bounds = array<i64: 16, 128>}, {transform_indices = @transform_9, window_bounds = array<i64: 16, 128>}]} {
    %c0 = arith.constant 0 : index
    %c0_0 = arith.constant 0 : index
    %0 = vector.load %arg2[%c0, %c0_0] : memref<16x32xf32, #tpu.memory_space<vmem>>, vector<16x32xf32>
    %c0_1 = arith.constant 0 : index
    %c0_2 = arith.constant 0 : index
    %c0_3 = arith.constant 0 : index
    %1 = vector.load %arg3[%c0_1, %c0_2, %c0_3] : memref<1x32x256xf32, #tpu.memory_space<vmem>>, vector<1x32x256xf32>
    %2 = vector.shape_cast %1 : vector<1x32x256xf32> to vector<32x256xf32>
    %cst = arith.constant dense<0.000000e+00> : vector<16x256xf32>
    %3 = tpu.matmul %0, %2, %cst {dimension_numbers = #tpu.dot_dimension_numbers<[1], [0], [0], [1], [0, 0, 1, 1], [], []>} : vector<16x32xf32>, vector<32x256xf32>, vector<16x256xf32> -> vector<16x256xf32>
    %c0_4 = arith.constant 0 : index
    %c0_5 = arith.constant 0 : index
    %c0_6 = arith.constant 0 : index
    %4 = vector.load %arg4[%c0_4, %c0_5, %c0_6] : memref<1x1x256xf32, #tpu.memory_space<vmem>>, vector<1x1x256xf32>
    %5 = vector.shape_cast %4 : vector<1x1x256xf32> to vector<1x256xf32>
    %6 = vector.broadcast %5 : vector<1x256xf32> to vector<16x256xf32>
    %7 = arith.addf %3, %6 : vector<16x256xf32>
    %8 = arith.negf %7 : vector<16x256xf32>
    %9 = math.exp %8 : vector<16x256xf32>
    %cst_7 = arith.constant 1.000000e+00 : f32
    %10 = vector.broadcast %cst_7 : f32 to vector<16x256xf32>
    %11 = arith.addf %10, %9 : vector<16x256xf32>
    %12 = arith.divf %10, %11 : vector<16x256xf32>
    %13 = arith.mulf %7, %12 : vector<16x256xf32>
    %c0_8 = arith.constant 0 : index
    %c0_9 = arith.constant 0 : index
    %c0_10 = arith.constant 0 : index
    %14 = vector.load %arg5[%c0_8, %c0_9, %c0_10] : memref<1x256x128xf32, #tpu.memory_space<vmem>>, vector<1x256x128xf32>
    %15 = vector.shape_cast %14 : vector<1x256x128xf32> to vector<256x128xf32>
    %cst_11 = arith.constant dense<0.000000e+00> : vector<16x128xf32>
    %16 = tpu.matmul %13, %15, %cst_11 {dimension_numbers = #tpu.dot_dimension_numbers<[1], [0], [0], [1], [0, 0, 1, 1], [], []>} : vector<16x256xf32>, vector<256x128xf32>, vector<16x128xf32> -> vector<16x128xf32>
    %c0_12 = arith.constant 0 : index
    %c0_13 = arith.constant 0 : index
    %c0_14 = arith.constant 0 : index
    %17 = vector.load %arg6[%c0_12, %c0_13, %c0_14] : memref<1x1x128xf32, #tpu.memory_space<vmem>>, vector<1x1x128xf32>
    %18 = vector.shape_cast %17 : vector<1x1x128xf32> to vector<1x128xf32>
    %19 = vector.broadcast %18 : vector<1x128xf32> to vector<16x128xf32>
    %20 = arith.addf %16, %19 : vector<16x128xf32>
    %21 = arith.negf %20 : vector<16x128xf32>
    %22 = math.exp %21 : vector<16x128xf32>
    %cst_15 = arith.constant 1.000000e+00 : f32
    %23 = vector.broadcast %cst_15 : f32 to vector<16x128xf32>
    %24 = arith.addf %23, %22 : vector<16x128xf32>
    %25 = arith.divf %23, %24 : vector<16x128xf32>
    %26 = arith.mulf %20, %25 : vector<16x128xf32>
    %c0_16 = arith.constant 0 : index
    %c0_17 = arith.constant 0 : index
    %c0_18 = arith.constant 0 : index
    %27 = vector.load %arg7[%c0_16, %c0_17, %c0_18] : memref<1x128x128xf32, #tpu.memory_space<vmem>>, vector<1x128x128xf32>
    %28 = vector.shape_cast %27 : vector<1x128x128xf32> to vector<128x128xf32>
    %cst_19 = arith.constant dense<0.000000e+00> : vector<16x128xf32>
    %29 = tpu.matmul %26, %28, %cst_19 {dimension_numbers = #tpu.dot_dimension_numbers<[1], [0], [0], [1], [0, 0, 1, 1], [], []>} : vector<16x128xf32>, vector<128x128xf32>, vector<16x128xf32> -> vector<16x128xf32>
    %c0_20 = arith.constant 0 : index
    %c0_21 = arith.constant 0 : index
    %c0_22 = arith.constant 0 : index
    %30 = vector.load %arg8[%c0_20, %c0_21, %c0_22] : memref<1x1x128xf32, #tpu.memory_space<vmem>>, vector<1x1x128xf32>
    %31 = vector.shape_cast %30 : vector<1x1x128xf32> to vector<1x128xf32>
    %32 = vector.broadcast %31 : vector<1x128xf32> to vector<16x128xf32>
    %33 = arith.addf %29, %32 : vector<16x128xf32>
    %34 = arith.negf %33 : vector<16x128xf32>
    %35 = math.exp %34 : vector<16x128xf32>
    %cst_23 = arith.constant 1.000000e+00 : f32
    %36 = vector.broadcast %cst_23 : f32 to vector<16x128xf32>
    %37 = arith.addf %36, %35 : vector<16x128xf32>
    %38 = arith.divf %36, %37 : vector<16x128xf32>
    %c0_24 = arith.constant 0 : index
    %c0_25 = arith.constant 0 : index
    %39 = vector.load %arg9[%c0_24, %c0_25] : memref<128x128xf32, #tpu.memory_space<vmem>>, vector<128x128xf32>
    %cst_26 = arith.constant dense<0.000000e+00> : vector<16x128xf32>
    %40 = tpu.matmul %38, %39, %cst_26 {dimension_numbers = #tpu.dot_dimension_numbers<[1], [0], [0], [1], [0, 0, 1, 1], [], []>} : vector<16x128xf32>, vector<128x128xf32>, vector<16x128xf32> -> vector<16x128xf32>
    %41 = vector.extract_strided_slice %13 {offsets = [0, 0], sizes = [16, 128], strides = [1, 1]} : vector<16x256xf32> to vector<16x128xf32>
    %42 = vector.extract_strided_slice %13 {offsets = [0, 128], sizes = [16, 128], strides = [1, 1]} : vector<16x256xf32> to vector<16x128xf32>
    %43 = arith.subf %41, %42 : vector<16x128xf32>
    %44 = arith.mulf %40, %43 : vector<16x128xf32>
    %45 = arith.addf %42, %44 : vector<16x128xf32>
    %c0_27 = arith.constant 0 : index
    %c0_28 = arith.constant 0 : index
    %46 = vector.load %arg10[%c0_27, %c0_28] : memref<16x128xf32, #tpu.memory_space<vmem>>, vector<16x128xf32>
    tpu.vector_store %arg10[%c0_27, %c0_28], %45 {strides = array<i32>} : memref<16x128xf32, #tpu.memory_space<vmem>>, vector<16x128xf32>,
    %c0_29 = arith.constant 0 : index
    %c0_30 = arith.constant 0 : index
    %47 = vector.load %arg11[%c0_29, %c0_30] : memref<16x128xf32, #tpu.memory_space<vmem>>, vector<16x128xf32>
    tpu.vector_store %arg11[%c0_29, %c0_30], %38 {strides = array<i32>} : memref<16x128xf32, #tpu.memory_space<vmem>>, vector<16x128xf32>,
    return
  }
  func.func @transform_0(%arg0: i32, %arg1: i32) -> (i32, i32) {
    %c0_i32 = arith.constant 0 : i32
    %c0_i32_0 = arith.constant 0 : i32
    return %arg1, %c0_i32 : i32, i32
  }
  func.func @transform_1(%arg0: i32, %arg1: i32) -> (i32, i32, i32) {
    %c0_i32 = arith.constant 0 : i32
    %c0_i32_0 = arith.constant 0 : i32
    %c0_i32_1 = arith.constant 0 : i32
    return %arg0, %c0_i32, %c0_i32_0 : i32, i32, i32
  }
  func.func @transform_2(%arg0: i32, %arg1: i32) -> (i32, i32, i32) {
    %c0_i32 = arith.constant 0 : i32
    %c0_i32_0 = arith.constant 0 : i32
    %c0_i32_1 = arith.constant 0 : i32
    return %arg0, %c0_i32, %c0_i32_0 : i32, i32, i32
  }
  func.func @transform_3(%arg0: i32, %arg1: i32) -> (i32, i32, i32) {
    %c0_i32 = arith.constant 0 : i32
    %c0_i32_0 = arith.constant 0 : i32
    %c0_i32_1 = arith.constant 0 : i32
    return %arg0, %c0_i32, %c0_i32_0 : i32, i32, i32
  }
  func.func @transform_4(%arg0: i32, %arg1: i32) -> (i32, i32, i32) {
    %c0_i32 = arith.constant 0 : i32
    %c0_i32_0 = arith.constant 0 : i32
    %c0_i32_1 = arith.constant 0 : i32
    return %arg0, %c0_i32, %c0_i32_0 : i32, i32, i32
  }
  func.func @transform_5(%arg0: i32, %arg1: i32) -> (i32, i32, i32) {
    %c0_i32 = arith.constant 0 : i32
    %c0_i32_0 = arith.constant 0 : i32
    %c0_i32_1 = arith.constant 0 : i32
    return %arg0, %c0_i32, %c0_i32_0 : i32, i32, i32
  }
  func.func @transform_6(%arg0: i32, %arg1: i32) -> (i32, i32, i32) {
    %c0_i32 = arith.constant 0 : i32
    %c0_i32_0 = arith.constant 0 : i32
    %c0_i32_1 = arith.constant 0 : i32
    return %arg0, %c0_i32, %c0_i32_0 : i32, i32, i32
  }
  func.func @transform_7(%arg0: i32, %arg1: i32) -> (i32, i32) {
    %c0_i32 = arith.constant 0 : i32
    %c0_i32_0 = arith.constant 0 : i32
    %c0_i32_1 = arith.constant 0 : i32
    return %c0_i32, %c0_i32_0 : i32, i32
  }
  func.func @transform_8(%arg0: i32, %arg1: i32) -> (i32, i32) {
    %c0_i32 = arith.constant 0 : i32
    return %arg1, %arg0 : i32, i32
  }
  func.func @transform_9(%arg0: i32, %arg1: i32) -> (i32, i32) {
    %c0_i32 = arith.constant 0 : i32
    return %arg1, %arg0 : i32, i32
  }
}

module attributes {stable_mosaic.version = 11 : i64} {
  func.func @cbm_fused_kernel(%arg0: i32, %arg1: i32, %arg2: memref<16x32xf32, #tpu.memory_space<vmem>>, %arg3: memref<1x32x256xf32, #tpu.memory_space<vmem>>, %arg4: memref<1x1x256xf32, #tpu.memory_space<vmem>>, %arg5: memref<1x256x128xf32, #tpu.memory_space<vmem>>, %arg6: memref<1x1x128xf32, #tpu.memory_space<vmem>>, %arg7: memref<1x128x128xf32, #tpu.memory_space<vmem>>, %arg8: memref<1x1x128xf32, #tpu.memory_space<vmem>>, %arg9: memref<128x128xf32, #tpu.memory_space<vmem>>, %arg10: memref<16x128xf32, #tpu.memory_space<vmem>>, %arg11: memref<16x128xf32, #tpu.memory_space<vmem>>) attributes {dimension_semantics = [#tpu.dimension_semantics<parallel>, #tpu.dimension_semantics<parallel>], iteration_bounds = array<i64: 1, 2>, scalar_prefetch = 0 : i64, scratch_operands = 0 : i64, tpu.core_type = #tpu.core_type<tc>, window_params = [{transform_indices = @transform_0, window_bounds = array<i64: 16, 32>}, {transform_indices = @transform_1, window_bounds = array<i64: 1, 32, 256>}, {transform_indices = @transform_2, window_bounds = array<i64: 1, 1, 256>}, {transform_indices = @transform_3, window_bounds = array<i64: 1, 256, 128>}, {transform_indices = @transform_4, window_bounds = array<i64: 1, 1, 128>}, {transform_indices = @transform_5, window_bounds = array<i64: 1, 128, 128>}, {transform_indices = @transform_6, window_bounds = array<i64: 1, 1, 128>}, {pipeline_mode = #tpu.pipeline_mode<synchronous>, transform_indices = @transform_7, window_bounds = array<i64: 128, 128>}, {transform_indices = @transform_8, window_bounds = array<i64: 16, 128>}, {transform_indices = @transform_9, window_bounds = array<i64: 16, 128>}]} {
    %c0 = arith.constant 0 : index
    %c0_0 = arith.constant 0 : index
    %0 = vector.load %arg2[%c0, %c0_0] : memref<16x32xf32, #tpu.memory_space<vmem>>, vector<16x32xf32>
    %c0_1 = arith.constant 0 : index
    %c0_2 = arith.constant 0 : index
    %c0_3 = arith.constant 0 : index
    %1 = vector.load %arg3[%c0_1, %c0_2, %c0_3] : memref<1x32x256xf32, #tpu.memory_space<vmem>>, vector<1x32x256xf32>
    %2 = vector.shape_cast %1 : vector<1x32x256xf32> to vector<32x256xf32>
    %cst = arith.constant dense<0.000000e+00> : vector<16x256xf32>
    %3 = tpu.matmul %0, %2, %cst {dimension_numbers = #tpu.dot_dimension_numbers<[1], [0], [0], [1], [0, 0, 1, 1], [], []>} : vector<16x32xf32>, vector<32x256xf32>, vector<16x256xf32> -> vector<16x256xf32>
    %c0_4 = arith.constant 0 : index
    %c0_5 = arith.constant 0 : index
    %c0_6 = arith.constant 0 : index
    %4 = vector.load %arg4[%c0_4, %c0_5, %c0_6] : memref<1x1x256xf32, #tpu.memory_space<vmem>>, vector<1x1x256xf32>
    %5 = vector.shape_cast %4 : vector<1x1x256xf32> to vector<1x256xf32>
    %6 = vector.broadcast %5 : vector<1x256xf32> to vector<16x256xf32>
    %7 = arith.addf %3, %6 : vector<16x256xf32>
    %8 = arith.negf %7 : vector<16x256xf32>
    %9 = math.exp %8 : vector<16x256xf32>
    %cst_7 = arith.constant 1.000000e+00 : f32
    %10 = vector.broadcast %cst_7 : f32 to vector<16x256xf32>
    %11 = arith.addf %10, %9 : vector<16x256xf32>
    %12 = arith.divf %10, %11 : vector<16x256xf32>
    %13 = arith.mulf %7, %12 : vector<16x256xf32>
    %c0_8 = arith.constant 0 : index
    %c0_9 = arith.constant 0 : index
    %c0_10 = arith.constant 0 : index
    %14 = vector.load %arg5[%c0_8, %c0_9, %c0_10] : memref<1x256x128xf32, #tpu.memory_space<vmem>>, vector<1x256x128xf32>
    %15 = vector.shape_cast %14 : vector<1x256x128xf32> to vector<256x128xf32>
    %cst_11 = arith.constant dense<0.000000e+00> : vector<16x128xf32>
    %16 = tpu.matmul %13, %15, %cst_11 {dimension_numbers = #tpu.dot_dimension_numbers<[1], [0], [0], [1], [0, 0, 1, 1], [], []>} : vector<16x256xf32>, vector<256x128xf32>, vector<16x128xf32> -> vector<16x128xf32>
    %c0_12 = arith.constant 0 : index
    %c0_13 = arith.constant 0 : index
    %c0_14 = arith.constant 0 : index
    %17 = vector.load %arg6[%c0_12, %c0_13, %c0_14] : memref<1x1x128xf32, #tpu.memory_space<vmem>>, vector<1x1x128xf32>
    %18 = vector.shape_cast %17 : vector<1x1x128xf32> to vector<1x128xf32>
    %19 = vector.broadcast %18 : vector<1x128xf32> to vector<16x128xf32>
    %20 = arith.addf %16, %19 : vector<16x128xf32>
    %21 = arith.negf %20 : vector<16x128xf32>
    %22 = math.exp %21 : vector<16x128xf32>
    %cst_15 = arith.constant 1.000000e+00 : f32
    %23 = vector.broadcast %cst_15 : f32 to vector<16x128xf32>
    %24 = arith.addf %23, %22 : vector<16x128xf32>
    %25 = arith.divf %23, %24 : vector<16x128xf32>
    %26 = arith.mulf %20, %25 : vector<16x128xf32>
    %c0_16 = arith.constant 0 : index
    %c0_17 = arith.constant 0 : index
    %c0_18 = arith.constant 0 : index
    %27 = vector.load %arg7[%c0_16, %c0_17, %c0_18] : memref<1x128x128xf32, #tpu.memory_space<vmem>>, vector<1x128x128xf32>
    %28 = vector.shape_cast %27 : vector<1x128x128xf32> to vector<128x128xf32>
    %cst_19 = arith.constant dense<0.000000e+00> : vector<16x128xf32>
    %29 = tpu.matmul %26, %28, %cst_19 {dimension_numbers = #tpu.dot_dimension_numbers<[1], [0], [0], [1], [0, 0, 1, 1], [], []>} : vector<16x128xf32>, vector<128x128xf32>, vector<16x128xf32> -> vector<16x128xf32>
    %c0_20 = arith.constant 0 : index
    %c0_21 = arith.constant 0 : index
    %c0_22 = arith.constant 0 : index
    %30 = vector.load %arg8[%c0_20, %c0_21, %c0_22] : memref<1x1x128xf32, #tpu.memory_space<vmem>>, vector<1x1x128xf32>
    %31 = vector.shape_cast %30 : vector<1x1x128xf32> to vector<1x128xf32>
    %32 = vector.broadcast %31 : vector<1x128xf32> to vector<16x128xf32>
    %33 = arith.addf %29, %32 : vector<16x128xf32>
    %34 = arith.negf %33 : vector<16x128xf32>
    %35 = math.exp %34 : vector<16x128xf32>
    %cst_23 = arith.constant 1.000000e+00 : f32
    %36 = vector.broadcast %cst_23 : f32 to vector<16x128xf32>
    %37 = arith.addf %36, %35 : vector<16x128xf32>
    %38 = arith.divf %36, %37 : vector<16x128xf32>
    %c0_24 = arith.constant 0 : index
    %c0_25 = arith.constant 0 : index
    %39 = vector.load %arg9[%c0_24, %c0_25] : memref<128x128xf32, #tpu.memory_space<vmem>>, vector<128x128xf32>
    %cst_26 = arith.constant dense<0.000000e+00> : vector<16x128xf32>
    %40 = tpu.matmul %38, %39, %cst_26 {dimension_numbers = #tpu.dot_dimension_numbers<[1], [0], [0], [1], [0, 0, 1, 1], [], []>} : vector<16x128xf32>, vector<128x128xf32>, vector<16x128xf32> -> vector<16x128xf32>
    %41 = vector.extract_strided_slice %13 {offsets = [0, 0], sizes = [16, 128], strides = [1, 1]} : vector<16x256xf32> to vector<16x128xf32>
    %42 = vector.extract_strided_slice %13 {offsets = [0, 128], sizes = [16, 128], strides = [1, 1]} : vector<16x256xf32> to vector<16x128xf32>
    %43 = arith.subf %41, %42 : vector<16x128xf32>
    %44 = arith.mulf %40, %43 : vector<16x128xf32>
    %45 = arith.addf %42, %44 : vector<16x128xf32>
    %c0_27 = arith.constant 0 : index
    %c0_28 = arith.constant 0 : index
    %46 = vector.load %arg10[%c0_27, %c0_28] : memref<16x128xf32, #tpu.memory_space<vmem>>, vector<16x128xf32>
    tpu.vector_store %arg10[%c0_27, %c0_28], %45 {strides = array<i32>} : memref<16x128xf32, #tpu.memory_space<vmem>>, vector<16x128xf32>,
    %c0_29 = arith.constant 0 : index
    %c0_30 = arith.constant 0 : index
    %47 = vector.load %arg11[%c0_29, %c0_30] : memref<16x128xf32, #tpu.memory_space<vmem>>, vector<16x128xf32>
    tpu.vector_store %arg11[%c0_29, %c0_30], %38 {strides = array<i32>} : memref<16x128xf32, #tpu.memory_space<vmem>>, vector<16x128xf32>,
    return
  }
  func.func @transform_0(%arg0: i32, %arg1: i32) -> (i32, i32) {
    %c0_i32 = arith.constant 0 : i32
    %c0_i32_0 = arith.constant 0 : i32
    return %arg1, %c0_i32 : i32, i32
  }
  func.func @transform_1(%arg0: i32, %arg1: i32) -> (i32, i32, i32) {
    %c0_i32 = arith.constant 0 : i32
    %c0_i32_0 = arith.constant 0 : i32
    %c0_i32_1 = arith.constant 0 : i32
    return %arg0, %c0_i32, %c0_i32_0 : i32, i32, i32
  }
  func.func @transform_2(%arg0: i32, %arg1: i32) -> (i32, i32, i32) {
    %c0_i32 = arith.constant 0 : i32
    %c0_i32_0 = arith.constant 0 : i32
    %c0_i32_1 = arith.constant 0 : i32
    return %arg0, %c0_i32, %c0_i32_0 : i32, i32, i32
  }
  func.func @transform_3(%arg0: i32, %arg1: i32) -> (i32, i32, i32) {
    %c0_i32 = arith.constant 0 : i32
    %c0_i32_0 = arith.constant 0 : i32
    %c0_i32_1 = arith.constant 0 : i32
    return %arg0, %c0_i32, %c0_i32_0 : i32, i32, i32
  }
  func.func @transform_4(%arg0: i32, %arg1: i32) -> (i32, i32, i32) {
    %c0_i32 = arith.constant 0 : i32
    %c0_i32_0 = arith.constant 0 : i32
    %c0_i32_1 = arith.constant 0 : i32
    return %arg0, %c0_i32, %c0_i32_0 : i32, i32, i32
  }
  func.func @transform_5(%arg0: i32, %arg1: i32) -> (i32, i32, i32) {
    %c0_i32 = arith.constant 0 : i32
    %c0_i32_0 = arith.constant 0 : i32
    %c0_i32_1 = arith.constant 0 : i32
    return %arg0, %c0_i32, %c0_i32_0 : i32, i32, i32
  }
  func.func @transform_6(%arg0: i32, %arg1: i32) -> (i32, i32, i32) {
    %c0_i32 = arith.constant 0 : i32
    %c0_i32_0 = arith.constant 0 : i32
    %c0_i32_1 = arith.constant 0 : i32
    return %arg0, %c0_i32, %c0_i32_0 : i32, i32, i32
  }
  func.func @transform_7(%arg0: i32, %arg1: i32) -> (i32, i32) {
    %c0_i32 = arith.constant 0 : i32
    %c0_i32_0 = arith.constant 0 : i32
    %c0_i32_1 = arith.constant 0 : i32
    return %c0_i32, %c0_i32_0 : i32, i32
  }
  func.func @transform_8(%arg0: i32, %arg1: i32) -> (i32, i32) {
    %c0_i32 = arith.constant 0 : i32
    return %arg1, %arg0 : i32, i32
  }
  func.func @transform_9(%arg0: i32, %arg1: i32) -> (i32, i32) {
    %c0_i32 = arith.constant 0 : i32
    return %arg1, %arg0 : i32, i32
  }
}

</mosaic_0001>

<llo_original>
// kernel: _cbm_forward_impl.1
$region0: #{_cbm_forward_impl.1}
  #allocation0 [shape = 'u32[]', space=smem, size = 0x4, offset = 0x4, fixed_abs, tag = 'smem constant byte address 0x4 - core index']
  #allocation1 [shape = 'u32[144,128]{1,0:T(1,128)}', space=vmem, size = 0x12000, scoped, tag = 'internal scratch']
  %s0 = inlined_call_operand.hbm [shape: f32[24,32], index: 0, kind: input, shape index: {}]
  %s1 = inlined_call_operand.hbm [shape: f32[1,32,256], index: 1, kind: input, shape index: {}]
  %s2 = inlined_call_operand.vmem [shape: f32[1,1,256], index: 2, kind: input, shape index: {}]
  %s3 = inlined_call_operand.hbm [shape: f32[1,256,128], index: 3, kind: input, shape index: {}]
  %s4 = inlined_call_operand.vmem [shape: f32[1,1,128], index: 4, kind: input, shape index: {}]
  %s5 = inlined_call_operand.hbm [shape: f32[1,128,128], index: 5, kind: input, shape index: {}]
  %s6 = inlined_call_operand.hbm [shape: f32[1,1,128], index: 6, kind: input, shape index: {}]
  %s7 = inlined_call_operand.hbm [shape: f32[128,128], index: 7, kind: input, shape index: {}]
  %s8 = inlined_call_operand.vmem [shape: f32[24,128], index: 8, kind: output, shape index: {0}]
  %s9 = inlined_call_operand.vmem [shape: f32[24,128], index: 9, kind: output, shape index: {1}]
  %10 = xla_tuple %s8, %s9
  %s11 = sld [smem:[#allocation0]]
  $region193: #{_cbm_forward_impl.1} parent=0
    _
  %s13 = ssub.s32 1, %s11
  %s14 = scalar_select 0, %s13, %s11
  $region1: #{_cbm_forward_impl.1} parent=0
    #allocation2 [shape = 'u8[16384]{0}', space=vmem, size = 0x4000, scoped, tag = 'input window, operand 0']
    #allocation3 [shape = 's32[2]{0}', space=sflag, size = 0x8, scoped, tag = 'scoped memory for _cbm_forward_impl.1']
    #allocation4 [shape = 'u8[32768]{0}', space=vmem, size = 0x8000, scoped, tag = 'input window, operand 1, single buffered']
    #allocation5 [shape = 's32[1]{0}', space=sflag, size = 0x4, scoped, tag = 'scoped memory for _cbm_forward_impl.1']
    #allocation6 [shape = 'u8[131072]{0}', space=vmem, size = 0x20000, scoped, tag = 'input window, operand 3, single buffered']
    #allocation7 [shape = 'u8[65536]{0}', space=vmem, size = 0x10000, scoped, tag = 'input window, operand 5, single buffered']
    #allocation8 [shape = 's32[1]{0}', space=sflag, size = 0x4, scoped, tag = 'scoped memory for _cbm_forward_impl.1']
    #allocation9 [shape = 'u8[512]{0}', space=vmem, size = 0x400, scoped, tag = 'input window, operand 6, single buffered']
    #allocation10 [shape = 'u8[65536]{0}', space=vmem, size = 0x10000, scoped, tag = 'input window, operand 7, single buffered']
    #allocation11 [shape = 's32[1]{0}', space=sflag, size = 0x4, scoped, tag = 'scoped memory for _cbm_forward_impl.1']
    #allocation12 [shape = 'u8[16384]{0}', space=vmem, size = 0x4000, scoped, tag = 'output window, operand 0']
    #allocation13 [shape = 'u8[16384]{0}', space=vmem, size = 0x4000, scoped, tag = 'output window, operand 1']
    %15 = vsyncpa [#allocation3], 0
    %s16 = scalar_lea.sflag [#allocation3], 1
    %17 = vsyncpa %s16, 0
    %18 = vsyncpa [#allocation5], 0
    %19 = vsyncpa [#allocation8], 0
    %20 = vsyncpa [#allocation11], 0
    loop: start=0, step=1, limit=4
    $region2: #{_cbm_forward_impl.1} parent=1 // loop_pre_header
      _
    $region3: #{_cbm_forward_impl.1} parent=1 // loop_header
      %s22 = sphi 0, %s26
      %p23 = scmp.ge.s32.totalorder %s22, 4
      %s29 = sphi 0, %s41
      %s30 = sphi 0, %s37
      %s31 = sphi 0, %s29
      %s32 = sphi 0, %s30
      %s33 = sphi 0, %s31
      %s34 = sphi 0, %s32
      %s44 = sphi 0, %s46
      %s47 = sphi 0, %s44
      %s48 = sphi 0, %s47
      %s64 = sphi 0, %s48
      %s70 = sphi 0, %s72
      %s73 = sphi 0, %s70
      %s74 = sphi 0, %s73
      %s90 = sphi 0, %s74
      %s96 = sphi 0, %s98
      %s99 = sphi 0, %s96
      %s100 = sphi 0, %s99
      %s116 = sphi 0, %s100
      %s122 = sphi 0, %s124
      %s125 = sphi 0, %s122
      %s126 = sphi 0, %s125
      %s142 = sphi 0, %s126
      %s148 = sphi 0, %s150
      %s151 = sphi 0, %s148
      %s152 = sphi 0, %s151
      %s168 = sphi 0, %s152
      %s174 = sphi 0, %s176
      %s177 = sphi 0, %s174
      %s178 = sphi 0, %s177
      %s194 = sphi 0, %s178
      %s200 = sphi 0, %s202
      %s203 = sphi 0, %s200
      %s204 = sphi 0, %s203
      %s220 = sphi 0, %s204
      %s224 = sphi 0, %s224
      %s226 = sphi 0, %s224
      %s227 = sphi 0, %s226
      %s241 = sphi 0, %s227
      %s249 = sphi 0, %s251
      %s252 = sphi 0, %s249
      %s253 = sphi 0, %s252
      %s269 = sphi 0, %s253
      %s277 = sphi 0, %s279
      %s280 = sphi 0, %s277
      %s281 = sphi 0, %s280
      %s297 = sphi 0, %s281
    $region4: #{_cbm_forward_impl.1} parent=1 // loop_header_branch
      %25 = sbr.rel (%p23) target = $region8
    $region5: #{_cbm_forward_impl.1} parent=1 // loop_body
      %s27 = ssub.s32 %s22, 1
      %s28 = ssub.s32 %s22, 2
      %s35 = sadd.s32 1, %s30
      %p36 = scmp.ge.s32.totalorder %s35, 2
      %s37 = scalar_select %p36, 0, %s35
      %s38 = sadd.s32 1, %s29
      %s39 = scalar_select %p36, %s38, %s29
      %p40 = scmp.ge.s32.totalorder %s39, 1
      %s41 = scalar_select %p40, 0, %s39
      %s42 = ssub.s32 %s30, %s37
      %p43 = scmp.eq.s32.totalorder %s42, 0
      %s45 = sadd.s32 %s44, 1
      %s46 = scalar_select %p43, %s44, %s45
      %p49 = pneg %p43
      %p50 = scmp.eq.s32.totalorder %s22, 1
      %p51 = por %p49, %p50
      %p52 = scmp.ne.s32.totalorder %s44, %s47
      %p53 = scmp.eq.s32.totalorder %s22, 0
      %p54 = por %p52, %p53
      %p55 = scmp.ne.s32.totalorder %s44, %s47
      %p56 = scmp.eq.s32.totalorder %s27, 1
      %p57 = por %p55, %p56
      %p58 = scmp.ne.s32.totalorder %s47, %s48
      %p59 = scmp.eq.s32.totalorder %s27, 0
      %p60 = por %p58, %p59
      %p61 = scmp.ne.s32.totalorder %s47, %s48
      %p62 = scmp.eq.s32.totalorder %s28, 1
      %p63 = por %p61, %p62
      %p65 = scmp.ne.s32.totalorder %s48, %s64
      %p66 = scmp.eq.s32.totalorder %s28, 0
      %p67 = por %p65, %p66
      %s68 = ssub.s32 %s29, %s41
      %p69 = scmp.eq.s32.totalorder %s68, 0
      %s71 = sadd.s32 %s70, 1
      %s72 = scalar_select %p69, %s70, %s71
      %p75 = pneg %p69
      %p76 = scmp.eq.s32.totalorder %s22, 1
      %p77 = por %p75, %p76
      %p78 = scmp.ne.s32.totalorder %s70, %s73
      %p79 = scmp.eq.s32.totalorder %s22, 0
      %p80 = por %p78, %p79
      %p81 = scmp.ne.s32.totalorder %s70, %s73
      %p82 = scmp.eq.s32.totalorder %s27, 1
      %p83 = por %p81, %p82
      %p84 = scmp.ne.s32.totalorder %s73, %s74
      %p85 = scmp.eq.s32.totalorder %s27, 0
      %p86 = por %p84, %p85
      %p87 = scmp.ne.s32.totalorder %s73, %s74
      %p88 = scmp.eq.s32.totalorder %s28, 1
      %p89 = por %p87, %p88
      %p91 = scmp.ne.s32.totalorder %s74, %s90
      %p92 = scmp.eq.s32.totalorder %s28, 0
      %p93 = por %p91, %p92
      %s94 = ssub.s32 %s29, %s41
      %p95 = scmp.eq.s32.totalorder %s94, 0
      %s97 = sadd.s32 %s96, 1
      %s98 = scalar_select %p95, %s96, %s97
      %p101 = pneg %p95
      %p102 = scmp.eq.s32.totalorder %s22, 1
      %p103 = por %p101, %p102
      %p104 = scmp.ne.s32.totalorder %s96, %s99
      %p105 = scmp.eq.s32.totalorder %s22, 0
      %p106 = por %p104, %p105
      %p107 = scmp.ne.s32.totalorder %s96, %s99
      %p108 = scmp.eq.s32.totalorder %s27, 1
      %p109 = por %p107, %p108
      %p110 = scmp.ne.s32.totalorder %s99, %s100
      %p111 = scmp.eq.s32.totalorder %s27, 0
      %p112 = por %p110, %p111
      %p113 = scmp.ne.s32.totalorder %s99, %s100
      %p114 = scmp.eq.s32.totalorder %s28, 1
      %p115 = por %p113, %p114
      %p117 = scmp.ne.s32.totalorder %s100, %s116
      %p118 = scmp.eq.s32.totalorder %s28, 0
      %p119 = por %p117, %p118
      %s120 = ssub.s32 %s29, %s41
      %p121 = scmp.eq.s32.totalorder %s120, 0
      %s123 = sadd.s32 %s122, 1
      %s124 = scalar_select %p121, %s122, %s123
      %p127 = pneg %p121
      %p128 = scmp.eq.s32.totalorder %s22, 1
      %p129 = por %p127, %p128
      %p130 = scmp.ne.s32.totalorder %s122, %s125
      %p131 = scmp.eq.s32.totalorder %s22, 0
      %p132 = por %p130, %p131
      %p133 = scmp.ne.s32.totalorder %s122, %s125
      %p134 = scmp.eq.s32.totalorder %s27, 1
      %p135 = por %p133, %p134
      %p136 = scmp.ne.s32.totalorder %s125, %s126
      %p137 = scmp.eq.s32.totalorder %s27, 0
      %p138 = por %p136, %p137
      %p139 = scmp.ne.s32.totalorder %s125, %s126
      %p140 = scmp.eq.s32.totalorder %s28, 1
      %p141 = por %p139, %p140
      %p143 = scmp.ne.s32.totalorder %s126, %s142
      %p144 = scmp.eq.s32.totalorder %s28, 0
      %p145 = por %p143, %p144
      %s146 = ssub.s32 %s29, %s41
      %p147 = scmp.eq.s32.totalorder %s146, 0
      %s149 = sadd.s32 %s148, 1
      %s150 = scalar_select %p147, %s148, %s149
      %p153 = pneg %p147
      %p154 = scmp.eq.s32.totalorder %s22, 1
      %p155 = por %p153, %p154
      %p156 = scmp.ne.s32.totalorder %s148, %s151
      %p157 = scmp.eq.s32.totalorder %s22, 0
      %p158 = por %p156, %p157
      %p159 = scmp.ne.s32.totalorder %s148, %s151
      %p160 = scmp.eq.s32.totalorder %s27, 1
      %p161 = por %p159, %p160
      %p162 = scmp.ne.s32.totalorder %s151, %s152
      %p163 = scmp.eq.s32.totalorder %s27, 0
      %p164 = por %p162, %p163
      %p165 = scmp.ne.s32.totalorder %s151, %s152
      %p166 = scmp.eq.s32.totalorder %s28, 1
      %p167 = por %p165, %p166
      %p169 = scmp.ne.s32.totalorder %s152, %s168
      %p170 = scmp.eq.s32.totalorder %s28, 0
      %p171 = por %p169, %p170
      %s172 = ssub.s32 %s29, %s41
      %p173 = scmp.eq.s32.totalorder %s172, 0
      %s175 = sadd.s32 %s174, 1
      %s176 = scalar_select %p173, %s174, %s175
      %p179 = pneg %p173
      %p180 = scmp.eq.s32.totalorder %s22, 1
      %p181 = por %p179, %p180
      %p182 = scmp.ne.s32.totalorder %s174, %s177
      %p183 = scmp.eq.s32.totalorder %s22, 0
      %p184 = por %p182, %p183
      %p185 = scmp.ne.s32.totalorder %s174, %s177
      %p186 = scmp.eq.s32.totalorder %s27, 1
      %p187 = por %p185, %p186
      %p188 = scmp.ne.s32.totalorder %s177, %s178
      %p189 = scmp.eq.s32.totalorder %s27, 0
      %p190 = por %p188, %p189
      %p191 = scmp.ne.s32.totalorder %s177, %s178
      %p192 = scmp.eq.s32.totalorder %s28, 1
      %p193 = por %p191, %p192
      %p195 = scmp.ne.s32.totalorder %s178, %s194
      %p196 = scmp.eq.s32.totalorder %s28, 0
      %p197 = por %p195, %p196
      %s198 = ssub.s32 %s29, %s41
      %p199 = scmp.eq.s32.totalorder %s198, 0
      %s201 = sadd.s32 %s200, 1
      %s202 = scalar_select %p199, %s200, %s201
      %p205 = pneg %p199
      %p206 = scmp.eq.s32.totalorder %s22, 1
      %p207 = por %p205, %p206
      %p208 = scmp.ne.s32.totalorder %s200, %s203
      %p209 = scmp.eq.s32.totalorder %s22, 0
      %p210 = por %p208, %p209
      %p211 = scmp.ne.s32.totalorder %s200, %s203
      %p212 = scmp.eq.s32.totalorder %s27, 1
      %p213 = por %p211, %p212
      %p214 = scmp.ne.s32.totalorder %s203, %s204
      %p215 = scmp.eq.s32.totalorder %s27, 0
      %p216 = por %p214, %p215
      %p217 = scmp.ne.s32.totalorder %s203, %s204
      %p218 = scmp.eq.s32.totalorder %s28, 1
      %p219 = por %p217, %p218
      %p221 = scmp.ne.s32.totalorder %s204, %s220
      %p222 = scmp.eq.s32.totalorder %s28, 0
      %p223 = por %p221, %p222
      %s225 = sadd.s32 %s224, 1
      %p228 = scmp.eq.s32.totalorder %s22, 1
      %p229 = scmp.ne.s32.totalorder %s224, %s226
      %p230 = scmp.eq.s32.totalorder %s22, 0
      %p231 = por %p229, %p230
      %p232 = scmp.ne.s32.totalorder %s224, %s226
      %p233 = scmp.eq.s32.totalorder %s27, 1
      %p234 = por %p232, %p233
      %p235 = scmp.ne.s32.totalorder %s226, %s227
      %p236 = scmp.eq.s32.totalorder %s27, 0
      %p237 = por %p235, %p236
      %p238 = scmp.ne.s32.totalorder %s226, %s227
      %p239 = scmp.eq.s32.totalorder %s28, 1
      %p240 = por %p238, %p239
      %p242 = scmp.ne.s32.totalorder %s227, %s241
      %p243 = scmp.eq.s32.totalorder %s28, 0
      %p244 = por %p242, %p243
      %s245 = ssub.s32 %s30, %s37
      %s246 = ssub.s32 %s29, %s41
      %s247 = sor.u32 %s245, %s246
      %p248 = scmp.eq.s32.totalorder %s247, 0
      %s250 = sadd.s32 %s249, 1
      %s251 = scalar_select %p248, %s249, %s250
      %p254 = pneg %p248
      %p255 = scmp.eq.s32.totalorder %s22, 1
      %p256 = por %p254, %p255
      %p257 = scmp.ne.s32.totalorder %s249, %s252
      %p258 = scmp.eq.s32.totalorder %s22, 0
      %p259 = por %p257, %p258
      %p260 = scmp.ne.s32.totalorder %s249, %s252
      %p261 = scmp.eq.s32.totalorder %s27, 1
      %p262 = por %p260, %p261
      %p263 = scmp.ne.s32.totalorder %s252, %s253
      %p264 = scmp.eq.s32.totalorder %s27, 0
      %p265 = por %p263, %p264
      %p266 = scmp.ne.s32.totalorder %s252, %s253
      %p267 = scmp.eq.s32.totalorder %s28, 1
      %p268 = por %p266, %p267
      %p270 = scmp.ne.s32.totalorder %s253, %s269
      %p271 = scmp.eq.s32.totalorder %s28, 0
      %p272 = por %p270, %p271
      %s273 = ssub.s32 %s30, %s37
      %s274 = ssub.s32 %s29, %s41
      %s275 = sor.u32 %s273, %s274
      %p276 = scmp.eq.s32.totalorder %s275, 0
      %s278 = sadd.s32 %s277, 1
      %s279 = scalar_select %p276, %s277, %s278
      %p282 = pneg %p276
      %p283 = scmp.eq.s32.totalorder %s22, 1
      %p284 = por %p282, %p283
      %p285 = scmp.ne.s32.totalorder %s277, %s280
      %p286 = scmp.eq.s32.totalorder %s22, 0
      %p287 = por %p285, %p286
      %p288 = scmp.ne.s32.totalorder %s277, %s280
      %p289 = scmp.eq.s32.totalorder %s27, 1
      %p290 = por %p288, %p289
      %p291 = scmp.ne.s32.totalorder %s280, %s281
      %p292 = scmp.eq.s32.totalorder %s27, 0
      %p293 = por %p291, %p292
      %p294 = scmp.ne.s32.totalorder %s280, %s281
      %p295 = scmp.eq.s32.totalorder %s28, 1
      %p296 = por %p294, %p295
      %p298 = scmp.ne.s32.totalorder %s281, %s297
      %p299 = scmp.eq.s32.totalorder %s28, 0
      %p300 = por %p298, %p299
      %p301 = scmp.le.s32.totalorder 1, %s22
      %p302 = scmp.lt.s32.totalorder %s22, 3
      %p303 = pnand %p301, %p302
      %p304 = pneg %p303
      // Predicated region
      $region9: #{_cbm_forward_impl.1} parent=5 // pred_check
        _
      $region10: #{_cbm_forward_impl.1} parent=5 // pred_check_branch
        %306 = sbr.rel (%p303) target = $region12
      $region11: #{_cbm_forward_impl.1} parent=5 // pred_region
        %s307 = ssub.s32 %s22, 1
        // Predicated region
        $region13: #{_cbm_forward_impl.1} parent=11 // pred_check
          %p308 = pneg %p86
        $region14: #{_cbm_forward_impl.1} parent=11 // pred_check_branch
          %310 = sbr.rel (%p308) target = $region16
        $region15: #{_cbm_forward_impl.1} parent=11 // pred_region
          %s312 = ssub.s32 1024, 1024
          %313 = vsyncadd [#allocation5], %s312
          %s314 = smul.addr %s31, 8
          %s315 = smul.addr %s314, 128
          %s316 = scalar_lea.hbm %s1, %s315
          %s317 = sshll.u32 [#allocation4], 4
          %s318 = int_to_ptr.vmem [resolvable:$true] %s317
          %323 = dma.hbm_to_vmem [thread:$0]  %s316, 1024, %s318, [#allocation5], 256, 256, 16
        $region16: #{_cbm_forward_impl.1} parent=11 // pred_fallthru
          _
        // Predicated region
        $region17: #{_cbm_forward_impl.1} parent=11 // pred_check
          %p324 = pneg %p112
        $region18: #{_cbm_forward_impl.1} parent=11 // pred_check_branch
          %326 = sbr.rel (%p324) target = $region20
        $region19: #{_cbm_forward_impl.1} parent=11 // pred_region
          %p327 = scmp.lt.s32.totalorder %s31, 0
          %s328 = scalar_select %p327, %s31, 0
          %s329 = smul.addr %s328, 2
          %s330 = scalar_lea.vmem %s2, %s329
        $region20: #{_cbm_forward_impl.1} parent=11 // pred_fallthru
          _
        // Predicated region
        $region21: #{_cbm_forward_impl.1} parent=11 // pred_check
          %p331 = pneg %p138
        $region22: #{_cbm_forward_impl.1} parent=11 // pred_check_branch
          %333 = sbr.rel (%p331) target = $region24
        $region23: #{_cbm_forward_impl.1} parent=11 // pred_region
          %s335 = ssub.s32 4096, 4096
          %336 = vsyncadd [#allocation5], %s335
          %s337 = smul.addr %s31, 32
          %s338 = smul.addr %s337, 128
          %s339 = scalar_lea.hbm %s3, %s338
          %s340 = sshll.u32 [#allocation6], 4
          %s341 = int_to_ptr.vmem [resolvable:$true] %s340
          %346 = dma.hbm_to_vmem [thread:$0]  %s339, 4096, %s341, [#allocation5], 128, 128, 8
        $region24: #{_cbm_forward_impl.1} parent=11 // pred_fallthru
          _
        // Predicated region
        $region25: #{_cbm_forward_impl.1} parent=11 // pred_check
          %p347 = pneg %p164
        $region26: #{_cbm_forward_impl.1} parent=11 // pred_check_branch
          %349 = sbr.rel (%p347) target = $region28
        $region27: #{_cbm_forward_impl.1} parent=11 // pred_region
          %p350 = scmp.lt.s32.totalorder %s31, 0
          %s351 = scalar_select %p350, %s31, 0
          %s352 = scalar_lea.vmem %s4, %s351
        $region28: #{_cbm_forward_impl.1} parent=11 // pred_fallthru
          _
        // Predicated region
        $region29: #{_cbm_forward_impl.1} parent=11 // pred_check
          %p353 = pneg %p190
        $region30: #{_cbm_forward_impl.1} parent=11 // pred_check_branch
          %355 = sbr.rel (%p353) target = $region32
        $region31: #{_cbm_forward_impl.1} parent=11 // pred_region
          %s357 = ssub.s32 2048, 2048
          %358 = vsyncadd [#allocation8], %s357
          %s359 = smul.addr %s31, 16
          %s360 = smul.addr %s359, 128
          %s361 = scalar_lea.hbm %s5, %s360
          %s362 = sshll.u32 [#allocation7], 4
          %s363 = int_to_ptr.vmem [resolvable:$true] %s362
          %368 = dma.hbm_to_vmem [thread:$0]  %s361, 2048, %s363, [#allocation8], 128, 128, 8
        $region32: #{_cbm_forward_impl.1} parent=11 // pred_fallthru
          _
        // Predicated region
        $region33: #{_cbm_forward_impl.1} parent=11 // pred_check
          %p369 = pneg %p216
        $region34: #{_cbm_forward_impl.1} parent=11 // pred_check_branch
          %371 = sbr.rel (%p369) target = $region36
        $region35: #{_cbm_forward_impl.1} parent=11 // pred_region
          %s373 = ssub.s32 16, 16
          %374 = vsyncadd [#allocation8], %s373
          %s375 = smul.addr %s31, 16
          %s376 = scalar_lea.hbm %s6, %s375
          %s378 = sshll.u32 [#allocation9], 4
          %s379 = int_to_ptr.vmem [resolvable:$true] %s378
          %381 = dma.hbm_to_vmem [thread:$0]  %s376, 16, %s379, [#allocation8]
        $region36: #{_cbm_forward_impl.1} parent=11 // pred_fallthru
          _
        // Predicated region
        $region37: #{_cbm_forward_impl.1} parent=11 // pred_check
          %p382 = pneg %p237
        $region38: #{_cbm_forward_impl.1} parent=11 // pred_check_branch
          %384 = sbr.rel (%p382) target = $region40
        $region39: #{_cbm_forward_impl.1} parent=11 // pred_region
          %s386 = ssub.s32 2048, 2048
          %387 = vsyncadd [#allocation11], %s386
          %s388 = sshll.u32 [#allocation10], 4
          %s389 = int_to_ptr.vmem [resolvable:$true] %s388
          %394 = dma.hbm_to_vmem [thread:$0]  %s7, 2048, %s389, [#allocation11], 128, 128, 8
        $region40: #{_cbm_forward_impl.1} parent=11 // pred_fallthru
          _
      $region12: #{_cbm_forward_impl.1} parent=5 // pred_fallthru
        _
      %p395 = scmp.lt.s32.totalorder %s22, 2
      // Predicated region
      $region41: #{_cbm_forward_impl.1} parent=5 // pred_check
        %p396 = pneg %p395
      $region42: #{_cbm_forward_impl.1} parent=5 // pred_check_branch
        %398 = sbr.rel (%p396) target = $region44
      $region43: #{_cbm_forward_impl.1} parent=5 // pred_region
        // Predicated region
        $region45: #{_cbm_forward_impl.1} parent=43 // pred_check
          %p399 = pneg %p54
        $region46: #{_cbm_forward_impl.1} parent=43 // pred_check_branch
          %401 = sbr.rel (%p399) target = $region48
        $region47: #{_cbm_forward_impl.1} parent=43 // pred_region
          %s402 = sand.u32 %s44, 1
          %s403 = scalar_lea.sflag [#allocation3], %s402
          %s404 = sand.u32 %s44, 1
          %s405 = smul.addr %s404, 16
          %s406 = scalar_lea.vmem [#allocation2], %s405
          %s407 = smul.u32 2, %s30
          %s408 = ssub.s32 3, %s407
          %p409 = scmp.lt.s32.totalorder %s408, 2
          %s410 = scalar_select %p409, %s408, 2
          %s411 = smul.u32 128, %s410
          %s413 = ssub.s32 256, %s411
          %414 = vsyncadd %s403, %s413
          %p415 = scmp.ne.s32.totalorder 0, %s411
          %s416 = smul.addr %s407, 128
          %s417 = scalar_lea.hbm %s0, %s416
          %s418 = smul.u32 8, %s410
          %s419 = sshll.u32 %s406, 4
          %s420 = int_to_ptr.vmem [resolvable:$true] %s419
          %s421 = sshll.u32 %s418, 4
          %425 = dma.hbm_to_vmem [thread:$0]  (%p415), %s417, %s421, %s420, %s403, 128, 128, 8
        $region48: #{_cbm_forward_impl.1} parent=43 // pred_fallthru
          _
      $region44: #{_cbm_forward_impl.1} parent=5 // pred_fallthru
        _
      %p426 = scmp.le.s32.totalorder 1, %s22
      %p427 = scmp.lt.s32.totalorder %s22, 3
      %p428 = pnand %p426, %p427
      %p429 = pneg %p428
      // Predicated region
      $region49: #{_cbm_forward_impl.1} parent=5 // pred_check
        _
      $region50: #{_cbm_forward_impl.1} parent=5 // pred_check_branch
        %431 = sbr.rel (%p428) target = $region52
      $region51: #{_cbm_forward_impl.1} parent=5 // pred_region
        %s432 = ssub.s32 %s22, 1
        %s433 = sand.u32 %s47, 1
        %s434 = scalar_lea.sflag [#allocation3], %s433
        %s435 = sand.u32 %s47, 1
        %s436 = smul.addr %s435, 16
        %s437 = scalar_lea.vmem [#allocation2], %s436
        // Predicated region
        $region53: #{_cbm_forward_impl.1} parent=51 // pred_check
          %p438 = pneg %p60
        $region54: #{_cbm_forward_impl.1} parent=51 // pred_check_branch
          %440 = sbr.rel (%p438) target = $region56
        $region55: #{_cbm_forward_impl.1} parent=51 // pred_region
          %441 = dma.done %s434, 256
        $region56: #{_cbm_forward_impl.1} parent=51 // pred_fallthru
          _
        // Predicated region
        $region57: #{_cbm_forward_impl.1} parent=51 // pred_check
          %p442 = pneg %p86
        $region58: #{_cbm_forward_impl.1} parent=51 // pred_check_branch
          %444 = sbr.rel (%p442) target = $region60
        $region59: #{_cbm_forward_impl.1} parent=51 // pred_region
          %445 = dma.done [#allocation5], 1024
        $region60: #{_cbm_forward_impl.1} parent=51 // pred_fallthru
          _
        // Predicated region
        $region61: #{_cbm_forward_impl.1} parent=51 // pred_check
          %p446 = pneg %p138
        $region62: #{_cbm_forward_impl.1} parent=51 // pred_check_branch
          %448 = sbr.rel (%p446) target = $region64
        $region63: #{_cbm_forward_impl.1} parent=51 // pred_region
          %449 = dma.done [#allocation5], 4096
        $region64: #{_cbm_forward_impl.1} parent=51 // pred_fallthru
          _
        // Predicated region
        $region65: #{_cbm_forward_impl.1} parent=51 // pred_check
          %p450 = pneg %p190
        $region66: #{_cbm_forward_impl.1} parent=51 // pred_check_branch
          %452 = sbr.rel (%p450) target = $region68
        $region67: #{_cbm_forward_impl.1} parent=51 // pred_region
          %453 = dma.done [#allocation8], 2048
        $region68: #{_cbm_forward_impl.1} parent=51 // pred_fallthru
          _
        // Predicated region
        $region69: #{_cbm_forward_impl.1} parent=51 // pred_check
          %p454 = pneg %p216
        $region70: #{_cbm_forward_impl.1} parent=51 // pred_check_branch
          %456 = sbr.rel (%p454) target = $region72
        $region71: #{_cbm_forward_impl.1} parent=51 // pred_region
          %457 = dma.done [#allocation8], 16
        $region72: #{_cbm_forward_impl.1} parent=51 // pred_fallthru
          _
        // Predicated region
        $region73: #{_cbm_forward_impl.1} parent=51 // pred_check
          %p458 = pneg %p237
        $region74: #{_cbm_forward_impl.1} parent=51 // pred_check_branch
          %460 = sbr.rel (%p458) target = $region76
        $region75: #{_cbm_forward_impl.1} parent=51 // pred_region
          %461 = dma.done [#allocation11], 2048
        $region76: #{_cbm_forward_impl.1} parent=51 // pred_fallthru
          _
        %s462 = sand.u32 %s47, 1
        %s463 = scalar_lea.sflag [#allocation3], %s462
        %s464 = sand.u32 %s47, 1
        %s465 = smul.addr %s464, 16
        %s466 = scalar_lea.vmem [#allocation2], %s465
        %p467 = pneg %p60
        %p468 = pneg %p57
        %p469 = pneg %p86
        %p470 = pneg %p83
        %p471 = scmp.lt.s32.totalorder %s31, 0
        %s472 = scalar_select %p471, %s31, 0
        %s473 = smul.addr %s472, 2
        %s474 = scalar_lea.vmem %s2, %s473
        %p475 = pneg %p112
        %p476 = pneg %p109
        %p477 = pneg %p138
        %p478 = pneg %p135
        %p479 = scmp.lt.s32.totalorder %s31, 0
        %s480 = scalar_select %p479, %s31, 0
        %s481 = scalar_lea.vmem %s4, %s480
        %p482 = pneg %p164
        %p483 = pneg %p161
        %p484 = pneg %p190
        %p485 = pneg %p187
        %p486 = pneg %p216
        %p487 = pneg %p213
        %p488 = pneg %p237
        %p489 = pneg %p234
        %p490 = pneg %p265
        %p491 = pneg %p262
        %s492 = sand.u32 %s252, 1
        %s493 = sand.u32 %s252, 1
        %s494 = smul.addr %s493, 16
        %s495 = scalar_lea.vmem [#allocation12], %s494
        %p496 = pneg %p293
        %p497 = pneg %p290
        %s498 = sand.u32 %s280, 1
        %s499 = sand.u32 %s280, 1
        %s500 = smul.addr %s499, 16
        %s501 = scalar_lea.vmem [#allocation13], %s500
        %s502 = smul.u32 2, %s32
        %s503 = ssub.s32 3, %s502
        %p504 = scmp.lt.s32.totalorder %s503, 2
        %s505 = scalar_select %p504, %s503, 2
        %s506 = smul.u32 128, %s505
        %p507 = scmp.lt.s32.totalorder %s31, 0
        %s508 = scalar_select %p507, %s31, 0
        %s509 = smul.addr %s508, 2
        %s510 = scalar_lea.vmem %s2, %s509
        %p511 = scmp.lt.s32.totalorder %s31, 0
        %s512 = scalar_select %p511, %s31, 0
        %s513 = scalar_lea.vmem %s4, %s512
        %s514 = smul.u32 2, %s32
        %s515 = ssub.s32 3, %s514
        %p516 = scmp.lt.s32.totalorder %s515, 2
        %s517 = scalar_select %p516, %s515, 2
        %s518 = smul.u32 128, %s517
        %s519 = smul.u32 2, %s32
        %s520 = ssub.s32 3, %s519
        %p521 = scmp.lt.s32.totalorder %s520, 2
        %s522 = scalar_select %p521, %s520, 2
        %s523 = smul.u32 128, %s522
        %v524 = vld [vmem:[%s437] sm:$0xff]
        %v525 = vld [vmem:[%s437 + $0x8] sm:$0xff]
        %v526 = vld [vmem:[#allocation4] sm:$0xff]
        %v527 = vld [vmem:[#allocation4 + $0x8] sm:$0xff]
        %v528 = vld [vmem:[#allocation4 + $0x10] sm:$0xff]
        %v529 = vld [vmem:[#allocation4 + $0x18] sm:$0xff]
        %v530 = vld [vmem:[#allocation4 + $0x20] sm:$0xff]
        %v531 = vld [vmem:[#allocation4 + $0x28] sm:$0xff]
        %v532 = vld [vmem:[#allocation4 + $0x30] sm:$0xff]
        %v533 = vld [vmem:[#allocation4 + $0x38] sm:$0xff]
        %v534 = vld [vmem:[%s510] sm:$0x3]
        %v536 = vlaneseq
        %v537 = vshrl.u32 %v536, 7
        %v538 = vsub.s32 0, %v537
        %v539 = vrot.slane %v534, %v538
        %v540 = vlaneseq
        %v541 = vshrl.u32 %v540, 7
        %v542 = vsub.s32 1, %v541
        %v543 = vrot.slane %v534, %v542
        %vm546 = vcmask 261120
        %v548 = vsel %vm546, %v524, 0
        %v551 = vsel %vm546, %v525, 0
        %553 = vmatprep.subr.mxu0 %v527
        %554 = vmatpush1.msra.mxu0 %v526
        %555 = vmatprep.subr.mxu0 %v529
        %556 = vmatpush1.msra.mxu0 %v528
        %557 = vmatprep.subr.mxu0 %v531
        %558 = vmatpush1.msra.mxu0 %v530
        %559 = vmatprep.subr.mxu0 %v533
        %560 = vmatpush1.msra.mxu0 %v532
        %561 = vmatprep.subr.mxu0 0.0
        %562 = vmatpush1.msra.mxu0 0.0
        %563 = vmatprep.subr.mxu0 0.0
        %564 = vmatpush1.msra.mxu0 0.0
        %565 = vmatprep.subr.mxu0 0.0
        %566 = vmatpush1.msra.mxu0 0.0
        %567 = vmatprep.subr.mxu0 0.0
        %568 = vmatpush1.msra.mxu0 0.0
        %569 = vmatprep.subr.mxu0 0.0
        %570 = vmatpush1.msra.mxu0 0.0
        %571 = vmatprep.subr.mxu0 0.0
        %572 = vmatpush1.msra.mxu0 0.0
        %573 = vmatprep.subr.mxu0 0.0
        %574 = vmatpush1.msra.mxu0 0.0
        %575 = vmatprep.subr.mxu0 0.0
        %576 = vmatpush1.msra.mxu0 0.0
        %577 = vmatprep.subr.mxu0 0.0
        %578 = vmatpush1.msra.mxu0 0.0
        %579 = vmatprep.subr.mxu0 0.0
        %580 = vmatpush1.msra.mxu0 0.0
        %581 = vmatprep.subr.mxu0 0.0
        %582 = vmatpush1.msra.mxu0 0.0
        %583 = vmatprep.subr.mxu0 0.0
        %584 = vmatpush1.msra.mxu0 0.0
        %585 = vmatprep.subr.mxu0 0.0
        %586 = vmatpush1.msra.mxu0 0.0
        %587 = vmatprep.subr.mxu0 0.0
        %588 = vmatpush1.msra.mxu0 0.0
        %589 = vmatprep.subr.mxu0 0.0
        %590 = vmatpush1.msra.mxu0 0.0
        %591 = vmatprep.subr.mxu0 0.0
        %592 = vmatpush1.msra.mxu0 0.0
        %593 = vmatprep.subr.mxu0 0.0
        %594 = vmatpush1.msra.mxu0 0.0
        %595 = vmatprep.subr.mxu0 0.0
        %596 = vmatpush1.msra.mxu0 0.0
        %597 = vmatprep.subr.mxu0 0.0
        %598 = vmatpush1.msra.mxu0 0.0
        %599 = vmatprep.subr.mxu0 0.0
        %600 = vmatpush1.msra.mxu0 0.0
        %601 = vmatprep.subr.mxu0 0.0
        %602 = vmatpush1.msra.mxu0 0.0
        %603 = vmatprep.subr.mxu0 0.0
        %604 = vmatpush1.msra.mxu0 0.0
        %605 = vmatprep.subr.mxu0 0.0
        %606 = vmatpush1.msra.mxu0 0.0
        %607 = vmatprep.subr.mxu0 0.0
        %608 = vmatpush1.msra.mxu0 0.0
        %609 = vmatprep.subr.mxu0 0.0
        %610 = vmatpush1.msra.mxu0 0.0
        %611 = vmatprep.subr.mxu0 0.0
        %612 = vmatpush1.msra.mxu0 0.0
        %613 = vmatprep.subr.mxu0 0.0
        %614 = vmatpush1.msra.mxu0 0.0
        %615 = vmatprep.subr.mxu0 0.0
        %616 = vmatpush1.msra.mxu0 0.0
        %617 = vmatprep.mubr.f32.mxu0 0.0
        %618 = vmatmul.mubr.f32.gmra.mrb[0].mxu0 %v548
        %v619 = vpop.f32.mrb[0].mxu0
        %v620 = vadd.f32 %v539, %v619
        %v621 = vpop.f32.mrb[0].mxu0
        %v622 = vadd.f32 %v543, %v621
        %623 = vmatprep.mubr.f32.mxu0 0.0
        %624 = vmatmul.mubr.f32.gmra.mrb[0].mxu0 %v551
        %v625 = vpop.f32.mrb[0].mxu0
        %v626 = vadd.f32 %v539, %v625
        %v627 = vpop.f32.mrb[0].mxu0
        %v628 = vadd.f32 %v543, %v627
        %629 = vdwg.mxu0
        %v630 = vxor.u32 %v620, 2147483648
        %v631 = vxor.u32 %v622, 2147483648
        %v632 = vxor.u32 %v626, 2147483648
        %v633 = vxor.u32 %v628, 2147483648
        %v634 = vmul.f32 %v630, 1.442695
        %v635 = vpow.pop %v634
        %v636 = vmul.f32 %v631, 1.442695
        %v637 = vpow.pop %v636
        %v638 = vmul.f32 %v632, 1.442695
        %v639 = vpow.pop %v638
        %v640 = vmul.f32 %v633, 1.442695
        %v641 = vpow.pop %v640
        %v642 = vadd.f32 %v635, 1.0
        %v643 = vadd.f32 %v637, 1.0
        %v644 = vadd.f32 %v639, 1.0
        %v645 = vadd.f32 %v641, 1.0
        %v646 = vrcp.pop %v642
        %v647 = vmul.f32 1.0, %v646
        %v648 = vrcp.pop %v643
        %v649 = vmul.f32 1.0, %v648
        %v650 = vrcp.pop %v644
        %v651 = vmul.f32 1.0, %v650
        %v652 = vrcp.pop %v645
        %v653 = vmul.f32 1.0, %v652
        %v654 = vmul.f32 %v620, %v647
        %v655 = vmul.f32 %v622, %v649
        %v656 = vmul.f32 %v626, %v651
        %v657 = vmul.f32 %v628, %v653
        %v658 = vld [vmem:[#allocation6] sm:$0xff]
        %v659 = vld [vmem:[#allocation6 + $0x8] sm:$0xff]
        %v660 = vld [vmem:[#allocation6 + $0x10] sm:$0xff]
        %v661 = vld [vmem:[#allocation6 + $0x18] sm:$0xff]
        %v662 = vld [vmem:[#allocation6 + $0x20] sm:$0xff]
        %v663 = vld [vmem:[#allocation6 + $0x28] sm:$0xff]
        %v664 = vld [vmem:[#allocation6 + $0x30] sm:$0xff]
        %v665 = vld [vmem:[#allocation6 + $0x38] sm:$0xff]
        %v666 = vld [vmem:[#allocation6 + $0x40] sm:$0xff]
        %v667 = vld [vmem:[#allocation6 + $0x48] sm:$0xff]
        %v668 = vld [vmem:[#allocation6 + $0x50] sm:$0xff]
        %v669 = vld [vmem:[#allocation6 + $0x58] sm:$0xff]
        %v670 = vld [vmem:[#allocation6 + $0x60] sm:$0xff]
        %v671 = vld [vmem:[#allocation6 + $0x68] sm:$0xff]
        %v672 = vld [vmem:[#allocation6 + $0x70] sm:$0xff]
        %v673 = vld [vmem:[#allocation6 + $0x78] sm:$0xff]
        %v674 = vld [vmem:[#allocation6 + $0x80] sm:$0xff]
        %v675 = vld [vmem:[#allocation6 + $0x88] sm:$0xff]
        %v676 = vld [vmem:[#allocation6 + $0x90] sm:$0xff]
        %v677 = vld [vmem:[#allocation6 + $0x98] sm:$0xff]
        %v678 = vld [vmem:[#allocation6 + $0xa0] sm:$0xff]
        %v679 = vld [vmem:[#allocation6 + $0xa8] sm:$0xff]
        %v680 = vld [vmem:[#allocation6 + $0xb0] sm:$0xff]
        %v681 = vld [vmem:[#allocation6 + $0xb8] sm:$0xff]
        %v682 = vld [vmem:[#allocation6 + $0xc0] sm:$0xff]
        %v683 = vld [vmem:[#allocation6 + $0xc8] sm:$0xff]
        %v684 = vld [vmem:[#allocation6 + $0xd0] sm:$0xff]
        %v685 = vld [vmem:[#allocation6 + $0xd8] sm:$0xff]
        %v686 = vld [vmem:[#allocation6 + $0xe0] sm:$0xff]
        %v687 = vld [vmem:[#allocation6 + $0xe8] sm:$0xff]
        %v688 = vld [vmem:[#allocation6 + $0xf0] sm:$0xff]
        %v689 = vld [vmem:[#allocation6 + $0xf8] sm:$0xff]
        %v690 = vld [vmem:[%s513] sm:$0x1]
        %v692 = vlaneseq
        %v693 = vshrl.u32 %v692, 7
        %v694 = vsub.s32 0, %v693
        %v695 = vrot.slane %v690, %v694
        %697 = vmatprep.subr.mxu0 0.0
        %698 = vmatpush1.msra.mxu0 %v658
        %699 = vmatprep.subr.mxu0 0.0
        %700 = vmatpush1.msra.mxu0 %v659
        %701 = vmatprep.subr.mxu0 0.0
        %702 = vmatpush1.msra.mxu0 %v660
        %703 = vmatprep.subr.mxu0 0.0
        %704 = vmatpush1.msra.mxu0 %v661
        %705 = vmatprep.subr.mxu0 0.0
        %706 = vmatpush1.msra.mxu0 %v662
        %707 = vmatprep.subr.mxu0 0.0
        %708 = vmatpush1.msra.mxu0 %v663
        %709 = vmatprep.subr.mxu0 0.0
        %710 = vmatpush1.msra.mxu0 %v664
        %711 = vmatprep.subr.mxu0 0.0
        %712 = vmatpush1.msra.mxu0 %v665
        %713 = vmatprep.subr.mxu0 0.0
        %714 = vmatpush1.msra.mxu0 %v666
        %715 = vmatprep.subr.mxu0 0.0
        %716 = vmatpush1.msra.mxu0 %v667
        %717 = vmatprep.subr.mxu0 0.0
        %718 = vmatpush1.msra.mxu0 %v668
        %719 = vmatprep.subr.mxu0 0.0
        %720 = vmatpush1.msra.mxu0 %v669
        %721 = vmatprep.subr.mxu0 0.0
        %722 = vmatpush1.msra.mxu0 %v670
        %723 = vmatprep.subr.mxu0 0.0
        %724 = vmatpush1.msra.mxu0 %v671
        %725 = vmatprep.subr.mxu0 0.0
        %726 = vmatpush1.msra.mxu0 %v672
        %727 = vmatprep.subr.mxu0 0.0
        %728 = vmatpush1.msra.mxu0 %v673
        %729 = vmatprep.subr.mxu0 0.0
        %730 = vmatpush1.msra.mxu0 %v674
        %731 = vmatprep.subr.mxu0 0.0
        %732 = vmatpush1.msra.mxu0 %v675
        %733 = vmatprep.subr.mxu0 0.0
        %734 = vmatpush1.msra.mxu0 %v676
        %735 = vmatprep.subr.mxu0 0.0
        %736 = vmatpush1.msra.mxu0 %v677
        %737 = vmatprep.subr.mxu0 0.0
        %738 = vmatpush1.msra.mxu0 %v678
        %739 = vmatprep.subr.mxu0 0.0
        %740 = vmatpush1.msra.mxu0 %v679
        %741 = vmatprep.subr.mxu0 0.0
        %742 = vmatpush1.msra.mxu0 %v680
        %743 = vmatprep.subr.mxu0 0.0
        %744 = vmatpush1.msra.mxu0 %v681
        %745 = vmatprep.subr.mxu0 0.0
        %746 = vmatpush1.msra.mxu0 %v682
        %747 = vmatprep.subr.mxu0 0.0
        %748 = vmatpush1.msra.mxu0 %v683
        %749 = vmatprep.subr.mxu0 0.0
        %750 = vmatpush1.msra.mxu0 %v684
        %751 = vmatprep.subr.mxu0 0.0
        %752 = vmatpush1.msra.mxu0 %v685
        %753 = vmatprep.subr.mxu0 0.0
        %754 = vmatpush1.msra.mxu0 %v686
        %755 = vmatprep.subr.mxu0 0.0
        %756 = vmatpush1.msra.mxu0 %v687
        %757 = vmatprep.subr.mxu0 0.0
        %758 = vmatpush1.msra.mxu0 %v688
        %759 = vmatprep.subr.mxu0 0.0
        %760 = vmatpush1.msra.mxu0 %v689
        %761 = vmatprep.mubr.f32.mxu0 %v655
        %762 = vmatmul.mubr.f32.gmra.mrb[0].mxu0 %v654
        %v763 = vpop.f32.mrb[0].mxu0
        %v764 = vadd.f32 %v695, %v763
        %v765 = vpop.f32.mrb[0].mxu0
        %766 = vmatprep.mubr.f32.mxu0 %v657
        %767 = vmatmul.mubr.f32.gmra.mrb[0].mxu0 %v656
        %v768 = vpop.f32.mrb[0].mxu0
        %v769 = vadd.f32 %v695, %v768
        %v770 = vpop.f32.mrb[0].mxu0
        %771 = vdwg.mxu0
        %v772 = vxor.u32 %v764, 2147483648
        %v773 = vxor.u32 %v769, 2147483648
        %v774 = vmul.f32 %v772, 1.442695
        %v775 = vpow.pop %v774
        %v776 = vmul.f32 %v773, 1.442695
        %v777 = vpow.pop %v776
        %v778 = vadd.f32 %v775, 1.0
        %v779 = vadd.f32 %v777, 1.0
        %v780 = vrcp.pop %v778
        %v781 = vmul.f32 1.0, %v780
        %v782 = vrcp.pop %v779
        %v783 = vmul.f32 1.0, %v782
        %v784 = vmul.f32 %v764, %v781
        %v785 = vmul.f32 %v769, %v783
        %v786 = vld [vmem:[#allocation7] sm:$0xff]
        %v787 = vld [vmem:[#allocation7 + $0x8] sm:$0xff]
        %v788 = vld [vmem:[#allocation7 + $0x10] sm:$0xff]
        %v789 = vld [vmem:[#allocation7 + $0x18] sm:$0xff]
        %v790 = vld [vmem:[#allocation7 + $0x20] sm:$0xff]
        %v791 = vld [vmem:[#allocation7 + $0x28] sm:$0xff]
        %v792 = vld [vmem:[#allocation7 + $0x30] sm:$0xff]
        %v793 = vld [vmem:[#allocation7 + $0x38] sm:$0xff]
        %v794 = vld [vmem:[#allocation7 + $0x40] sm:$0xff]
        %v795 = vld [vmem:[#allocation7 + $0x48] sm:$0xff]
        %v796 = vld [vmem:[#allocation7 + $0x50] sm:$0xff]
        %v797 = vld [vmem:[#allocation7 + $0x58] sm:$0xff]
        %v798 = vld [vmem:[#allocation7 + $0x60] sm:$0xff]
        %v799 = vld [vmem:[#allocation7 + $0x68] sm:$0xff]
        %v800 = vld [vmem:[#allocation7 + $0x70] sm:$0xff]
        %v801 = vld [vmem:[#allocation7 + $0x78] sm:$0xff]
        %v802 = vld [vmem:[#allocation9] sm:$0x1]
        %v804 = vlaneseq
        %v805 = vshrl.u32 %v804, 7
        %v806 = vsub.s32 0, %v805
        %v807 = vrot.slane %v802, %v806
        %809 = vmatprep.subr.mxu0 0.0
        %810 = vmatpush1.msra.mxu0 %v786
        %811 = vmatprep.subr.mxu0 0.0
        %812 = vmatpush1.msra.mxu0 %v787
        %813 = vmatprep.subr.mxu0 0.0
        %814 = vmatpush1.msra.mxu0 %v788
        %815 = vmatprep.subr.mxu0 0.0
        %816 = vmatpush1.msra.mxu0 %v789
        %817 = vmatprep.subr.mxu0 0.0
        %818 = vmatpush1.msra.mxu0 %v790
        %819 = vmatprep.subr.mxu0 0.0
        %820 = vmatpush1.msra.mxu0 %v791
        %821 = vmatprep.subr.mxu0 0.0
        %822 = vmatpush1.msra.mxu0 %v792
        %823 = vmatprep.subr.mxu0 0.0
        %824 = vmatpush1.msra.mxu0 %v793
        %825 = vmatprep.subr.mxu0 0.0
        %826 = vmatpush1.msra.mxu0 %v794
        %827 = vmatprep.subr.mxu0 0.0
        %828 = vmatpush1.msra.mxu0 %v795
        %829 = vmatprep.subr.mxu0 0.0
        %830 = vmatpush1.msra.mxu0 %v796
        %831 = vmatprep.subr.mxu0 0.0
        %832 = vmatpush1.msra.mxu0 %v797
        %833 = vmatprep.subr.mxu0 0.0
        %834 = vmatpush1.msra.mxu0 %v798
        %835 = vmatprep.subr.mxu0 0.0
        %836 = vmatpush1.msra.mxu0 %v799
        %837 = vmatprep.subr.mxu0 0.0
        %838 = vmatpush1.msra.mxu0 %v800
        %839 = vmatprep.subr.mxu0 0.0
        %840 = vmatpush1.msra.mxu0 %v801
        %841 = vmatprep.subr.mxu0 0.0
        %842 = vmatpush1.msra.mxu0 0.0
        %843 = vmatprep.subr.mxu0 0.0
        %844 = vmatpush1.msra.mxu0 0.0
        %845 = vmatprep.subr.mxu0 0.0
        %846 = vmatpush1.msra.mxu0 0.0
        %847 = vmatprep.subr.mxu0 0.0
        %848 = vmatpush1.msra.mxu0 0.0
        %849 = vmatprep.subr.mxu0 0.0
        %850 = vmatpush1.msra.mxu0 0.0
        %851 = vmatprep.subr.mxu0 0.0
        %852 = vmatpush1.msra.mxu0 0.0
        %853 = vmatprep.subr.mxu0 0.0
        %854 = vmatpush1.msra.mxu0 0.0
        %855 = vmatprep.subr.mxu0 0.0
        %856 = vmatpush1.msra.mxu0 0.0
        %857 = vmatprep.subr.mxu0 0.0
        %858 = vmatpush1.msra.mxu0 0.0
        %859 = vmatprep.subr.mxu0 0.0
        %860 = vmatpush1.msra.mxu0 0.0
        %861 = vmatprep.subr.mxu0 0.0
        %862 = vmatpush1.msra.mxu0 0.0
        %863 = vmatprep.subr.mxu0 0.0
        %864 = vmatpush1.msra.mxu0 0.0
        %865 = vmatprep.subr.mxu0 0.0
        %866 = vmatpush1.msra.mxu0 0.0
        %867 = vmatprep.subr.mxu0 0.0
        %868 = vmatpush1.msra.mxu0 0.0
        %869 = vmatprep.subr.mxu0 0.0
        %870 = vmatpush1.msra.mxu0 0.0
        %871 = vmatprep.subr.mxu0 0.0
        %872 = vmatpush1.msra.mxu0 0.0
        %873 = vmatprep.mubr.f32.mxu0 0.0
        %874 = vmatmul.mubr.f32.gmra.mrb[0].mxu0 %v784
        %v875 = vpop.f32.mrb[0].mxu0
        %v876 = vadd.f32 %v807, %v875
        %v877 = vpop.f32.mrb[0].mxu0
        %878 = vmatprep.mubr.f32.mxu0 0.0
        %879 = vmatmul.mubr.f32.gmra.mrb[0].mxu0 %v785
        %v880 = vpop.f32.mrb[0].mxu0
        %v881 = vadd.f32 %v807, %v880
        %v882 = vpop.f32.mrb[0].mxu0
        %883 = vdwg.mxu0
        %v884 = vxor.u32 %v876, 2147483648
        %v885 = vxor.u32 %v881, 2147483648
        %v886 = vmul.f32 %v884, 1.442695
        %v887 = vpow.pop %v886
        %v888 = vmul.f32 %v885, 1.442695
        %v889 = vpow.pop %v888
        %v890 = vadd.f32 %v887, 1.0
        %v891 = vadd.f32 %v889, 1.0
        %v892 = vrcp.pop %v890
        %v893 = vmul.f32 1.0, %v892
        %v894 = vrcp.pop %v891
        %v895 = vmul.f32 1.0, %v894
        %v896 = vld [vmem:[#allocation10] sm:$0xff]
        %v897 = vld [vmem:[#allocation10 + $0x8] sm:$0xff]
        %v898 = vld [vmem:[#allocation10 + $0x10] sm:$0xff]
        %v899 = vld [vmem:[#allocation10 + $0x18] sm:$0xff]
        %v900 = vld [vmem:[#allocation10 + $0x20] sm:$0xff]
        %v901 = vld [vmem:[#allocation10 + $0x28] sm:$0xff]
        %v902 = vld [vmem:[#allocation10 + $0x30] sm:$0xff]
        %v903 = vld [vmem:[#allocation10 + $0x38] sm:$0xff]
        %v904 = vld [vmem:[#allocation10 + $0x40] sm:$0xff]
        %v905 = vld [vmem:[#allocation10 + $0x48] sm:$0xff]
        %v906 = vld [vmem:[#allocation10 + $0x50] sm:$0xff]
        %v907 = vld [vmem:[#allocation10 + $0x58] sm:$0xff]
        %v908 = vld [vmem:[#allocation10 + $0x60] sm:$0xff]
        %v909 = vld [vmem:[#allocation10 + $0x68] sm:$0xff]
        %v910 = vld [vmem:[#allocation10 + $0x70] sm:$0xff]
        %v911 = vld [vmem:[#allocation10 + $0x78] sm:$0xff]
        %912 = vmatprep.subr.mxu0 0.0
        %913 = vmatpush1.msra.mxu0 %v896
        %914 = vmatprep.subr.mxu0 0.0
        %915 = vmatpush1.msra.mxu0 %v897
        %916 = vmatprep.subr.mxu0 0.0
        %917 = vmatpush1.msra.mxu0 %v898
        %918 = vmatprep.subr.mxu0 0.0
        %919 = vmatpush1.msra.mxu0 %v899
        %920 = vmatprep.subr.mxu0 0.0
        %921 = vmatpush1.msra.mxu0 %v900
        %922 = vmatprep.subr.mxu0 0.0
        %923 = vmatpush1.msra.mxu0 %v901
        %924 = vmatprep.subr.mxu0 0.0
        %925 = vmatpush1.msra.mxu0 %v902
        %926 = vmatprep.subr.mxu0 0.0
        %927 = vmatpush1.msra.mxu0 %v903
        %928 = vmatprep.subr.mxu0 0.0
        %929 = vmatpush1.msra.mxu0 %v904
        %930 = vmatprep.subr.mxu0 0.0
        %931 = vmatpush1.msra.mxu0 %v905
        %932 = vmatprep.subr.mxu0 0.0
        %933 = vmatpush1.msra.mxu0 %v906
        %934 = vmatprep.subr.mxu0 0.0
        %935 = vmatpush1.msra.mxu0 %v907
        %936 = vmatprep.subr.mxu0 0.0
        %937 = vmatpush1.msra.mxu0 %v908
        %938 = vmatprep.subr.mxu0 0.0
        %939 = vmatpush1.msra.mxu0 %v909
        %940 = vmatprep.subr.mxu0 0.0
        %941 = vmatpush1.msra.mxu0 %v910
        %942 = vmatprep.subr.mxu0 0.0
        %943 = vmatpush1.msra.mxu0 %v911
        %944 = vmatprep.subr.mxu0 0.0
        %945 = vmatpush1.msra.mxu0 0.0
        %946 = vmatprep.subr.mxu0 0.0
        %947 = vmatpush1.msra.mxu0 0.0
        %948 = vmatprep.subr.mxu0 0.0
        %949 = vmatpush1.msra.mxu0 0.0
        %950 = vmatprep.subr.mxu0 0.0
        %951 = vmatpush1.msra.mxu0 0.0
        %952 = vmatprep.subr.mxu0 0.0
        %953 = vmatpush1.msra.mxu0 0.0
        %954 = vmatprep.subr.mxu0 0.0
        %955 = vmatpush1.msra.mxu0 0.0
        %956 = vmatprep.subr.mxu0 0.0
        %957 = vmatpush1.msra.mxu0 0.0
        %958 = vmatprep.subr.mxu0 0.0
        %959 = vmatpush1.msra.mxu0 0.0
        %960 = vmatprep.subr.mxu0 0.0
        %961 = vmatpush1.msra.mxu0 0.0
        %962 = vmatprep.subr.mxu0 0.0
        %963 = vmatpush1.msra.mxu0 0.0
        %964 = vmatprep.subr.mxu0 0.0
        %965 = vmatpush1.msra.mxu0 0.0
        %966 = vmatprep.subr.mxu0 0.0
        %967 = vmatpush1.msra.mxu0 0.0
        %968 = vmatprep.subr.mxu0 0.0
        %969 = vmatpush1.msra.mxu0 0.0
        %970 = vmatprep.subr.mxu0 0.0
        %971 = vmatpush1.msra.mxu0 0.0
        %972 = vmatprep.subr.mxu0 0.0
        %973 = vmatpush1.msra.mxu0 0.0
        %974 = vmatprep.subr.mxu0 0.0
        %975 = vmatpush1.msra.mxu0 0.0
        %976 = vmatprep.mubr.f32.mxu0 0.0
        %977 = vmatmul.mubr.f32.gmra.mrb[0].mxu0 %v893
        %v978 = vpop.f32.mrb[0].mxu0
        %v979 = vadd.f32 0.0, %v978
        %v980 = vpop.f32.mrb[0].mxu0
        %981 = vmatprep.mubr.f32.mxu0 0.0
        %982 = vmatmul.mubr.f32.gmra.mrb[0].mxu0 %v895
        %v983 = vpop.f32.mrb[0].mxu0
        %v984 = vadd.f32 0.0, %v983
        %v985 = vpop.f32.mrb[0].mxu0
        %986 = vdwg.mxu0
        %v987 = vsub.f32 %v654, %v655
        %v988 = vsub.f32 %v656, %v657
        %v989 = vmul.f32 %v979, %v987
        %v990 = vmul.f32 %v984, %v988
        %v991 = vadd.f32 %v655, %v989
        %v992 = vadd.f32 %v657, %v990
        %993 = vst [vmem:[%s495] sm:$0xff] %v991
        %994 = vst [vmem:[%s495 + $0x8] sm:$0xff] %v992
        %995 = vst [vmem:[%s501] sm:$0xff] %v893
        %996 = vst [vmem:[%s501 + $0x8] sm:$0xff] %v895
        %s997 = sand.u32 %s252, 1
        %s998 = sand.u32 %s252, 1
        %s999 = smul.addr %s998, 16
        %s1000 = scalar_lea.vmem [#allocation12], %s999
        %s1001 = sand.u32 %s280, 1
        %s1002 = sand.u32 %s280, 1
        %s1003 = smul.addr %s1002, 16
        %s1004 = scalar_lea.vmem [#allocation13], %s1003
        // Predicated region
        $region77: #{_cbm_forward_impl.1} parent=51 // pred_check
          %p1005 = pneg %p262
        $region78: #{_cbm_forward_impl.1} parent=51 // pred_check_branch
          %1007 = sbr.rel (%p1005) target = $region80
        $region79: #{_cbm_forward_impl.1} parent=51 // pred_region
          %s1008 = smul.u32 2, %s32
          %s1009 = ssub.s32 3, %s1008
          %p1010 = scmp.lt.s32.totalorder %s1009, 2
          %s1011 = scalar_select %p1010, %s1009, 2
          %s1012 = smul.u32 128, %s1011
          %p1013 = scmp.ne.s32.totalorder 0, %s1012
          %s1014 = sadd.s32 %s31, %s1008
          %s1015 = smul.addr %s1014, 8
          %s1016 = scalar_lea.vmem %s8, %s1015
          // Predicated region
          $region81: #{_cbm_forward_impl.1} parent=79 // pred_check
            %p1017 = pneg %p1013
          $region82: #{_cbm_forward_impl.1} parent=79 // pred_check_branch
            %1019 = sbr.rel (%p1017) target = $region84
          $region83: #{_cbm_forward_impl.1} parent=79 // pred_region
            // Predicated region
            $region85: #{_cbm_forward_impl.1} parent=83 // pred_check
              _
            $region86: #{_cbm_forward_impl.1} parent=83 // pred_check_branch
              %1021 = sbr.rel (0) target = $region88
            $region87: #{_cbm_forward_impl.1} parent=83 // pred_region
              // Predicated region
              $region107: #{_cbm_forward_impl.1} parent=87 // pred_check
                _
              $region108: #{_cbm_forward_impl.1} parent=87 // pred_check_branch
                %1072 = sbr.rel (0) target = $region110
              $region109: #{_cbm_forward_impl.1} parent=87 // pred_region
                %s1073 = sshrl.u32 %s1011, 1
                // While loop
                $region111: #{_cbm_forward_impl.1} parent=109 // loop_pre_header
                  _
                $region112: #{_cbm_forward_impl.1} parent=109 // loop_header
                  %s1075 = sphi 0, %s1077
                  %p1076 = scmp.ge.s32.totalorder %s1075, %s1073
                  %s1080 = sphi 0, %s1089
                  %s1081 = sphi %s1000, %s1092
                  %s1082 = sphi %s1016, %s1093
                $region113: #{_cbm_forward_impl.1} parent=109 // loop_header_branch
                  %1079 = sbr.rel (%p1076) target = $region117
                $region114: #{_cbm_forward_impl.1} parent=109 // loop_body
                  %v1083 = vld [vmem:[%s1081] sm:$0xff]
                  %1084 = vst [vmem:[%s1082] sm:$0xff] %v1083
                  %v1085 = vld [vmem:[%s1081 + $0x8] sm:$0xff]
                  %1086 = vst [vmem:[%s1082 + $0x8] sm:$0xff] %v1085
                  %s1087 = sadd.s32 1, %s1080
                  %p1088 = scmp.ge.s32.totalorder %s1087, %s1073
                  %s1089 = scalar_select %p1088, 0, %s1087
                  %s1090 = smul.u32 %s1089, 16
                  %s1091 = smul.u32 %s1089, 16
                  %s1092 = scalar_lea.vmem %s1000, %s1090 [#allocation12]
                  %s1093 = scalar_lea.vmem %s1016, %s1091
                $region115: #{_cbm_forward_impl.1} parent=109 // loop_footer
                  %s1077 = sadd.s32 %s1075, 1
                $region116: #{_cbm_forward_impl.1} parent=109 // loop_footer_branch
                  %1074 = sbr.rel target = $region112
                $region117: #{_cbm_forward_impl.1} parent=109 // loop_exit
                  _
                %s1094 = sshrl.u32 %s1011, 1
                %s1095 = sand.u32 %s1011, 1
                %s1096 = smul.u32 %s1094, 2
                %s1097 = smul.u32 8, %s1096
                %s1098 = scalar_lea.vmem %s1000, %s1097 [#allocation12]
                %s1099 = smul.u32 8, %s1096
                %s1100 = scalar_lea.vmem %s1016, %s1099
                // While loop
                $region118: #{_cbm_forward_impl.1} parent=109 // loop_pre_header
                  _
                $region119: #{_cbm_forward_impl.1} parent=109 // loop_header
                  %s1102 = sphi 0, %s1104
                  %p1103 = scmp.ge.s32.totalorder %s1102, %s1095
                  %s1107 = sphi 0, %s1114
                  %s1108 = sphi %s1098, %s1117
                  %s1109 = sphi %s1100, %s1118
                $region120: #{_cbm_forward_impl.1} parent=109 // loop_header_branch
                  %1106 = sbr.rel (%p1103) target = $region124
                $region121: #{_cbm_forward_impl.1} parent=109 // loop_body
                  %v1110 = vld [vmem:[%s1108] sm:$0xff]
                  %1111 = vst [vmem:[%s1109] sm:$0xff] %v1110
                  %s1112 = sadd.s32 1, %s1107
                  %p1113 = scmp.ge.s32.totalorder %s1112, %s1095
                  %s1114 = scalar_select %p1113, 0, %s1112
                  %s1115 = smul.u32 %s1114, 8
                  %s1116 = smul.u32 %s1114, 8
                  %s1117 = scalar_lea.vmem %s1098, %s1115 [#allocation12]
                  %s1118 = scalar_lea.vmem %s1100, %s1116
                $region122: #{_cbm_forward_impl.1} parent=109 // loop_footer
                  %s1104 = sadd.s32 %s1102, 1
                $region123: #{_cbm_forward_impl.1} parent=109 // loop_footer_branch
                  %1101 = sbr.rel target = $region119
                $region124: #{_cbm_forward_impl.1} parent=109 // loop_exit
                  _
              $region110: #{_cbm_forward_impl.1} parent=87 // pred_fallthru
                _
              // Predicated region
              $region125: #{_cbm_forward_impl.1} parent=87 // pred_check
                _
              $region126: #{_cbm_forward_impl.1} parent=87 // pred_check_branch
                %1120 = sbr.rel target = $region128
              $region127: #{_cbm_forward_impl.1} parent=87 // pred_region
                _
              $region128: #{_cbm_forward_impl.1} parent=87 // pred_fallthru
                _
            $region88: #{_cbm_forward_impl.1} parent=83 // pred_fallthru
              _
            // Predicated region
            $region89: #{_cbm_forward_impl.1} parent=83 // pred_check
              _
            $region90: #{_cbm_forward_impl.1} parent=83 // pred_check_branch
              %1023 = sbr.rel target = $region92
            $region91: #{_cbm_forward_impl.1} parent=83 // pred_region
              %s1025 = sshrl.u32 %s1011, 1
              // While loop
              $region93: #{_cbm_forward_impl.1} parent=91 // loop_pre_header
                _
              $region94: #{_cbm_forward_impl.1} parent=91 // loop_header
                %s1027 = sphi 0, %s1029
                %p1028 = scmp.ge.s32.totalorder %s1027, %s1025
                %s1032 = sphi 0, %s1041
                %s1033 = sphi %s1000, %s1044
                %s1034 = sphi %s1016, %s1045
              $region95: #{_cbm_forward_impl.1} parent=91 // loop_header_branch
                %1031 = sbr.rel (%p1028) target = $region99
              $region96: #{_cbm_forward_impl.1} parent=91 // loop_body
                %v1035 = vld [vmem:[%s1033] sm:$0xff]
                %1036 = vst [vmem:[%s1034] sm:$0xff] %v1035
                %v1037 = vld [vmem:[%s1033 + $0x8] sm:$0xff]
                %1038 = vst [vmem:[%s1034 + $0x8] sm:$0xff] %v1037
                %s1039 = sadd.s32 1, %s1032
                %p1040 = scmp.ge.s32.totalorder %s1039, %s1025
                %s1041 = scalar_select %p1040, 0, %s1039
                %s1042 = smul.u32 %s1041, 16
                %s1043 = smul.u32 %s1041, 16
                %s1044 = scalar_lea.vmem %s1000, %s1042 [#allocation12]
                %s1045 = scalar_lea.vmem %s1016, %s1043
              $region97: #{_cbm_forward_impl.1} parent=91 // loop_footer
                %s1029 = sadd.s32 %s1027, 1
              $region98: #{_cbm_forward_impl.1} parent=91 // loop_footer_branch
                %1026 = sbr.rel target = $region94
              $region99: #{_cbm_forward_impl.1} parent=91 // loop_exit
                _
              %s1046 = sshrl.u32 %s1011, 1
              %s1047 = sand.u32 %s1011, 1
              %s1048 = smul.u32 %s1046, 2
              %s1049 = smul.u32 8, %s1048
              %s1050 = scalar_lea.vmem %s1000, %s1049 [#allocation12]
              %s1051 = smul.u32 8, %s1048
              %s1052 = scalar_lea.vmem %s1016, %s1051
              // While loop
              $region100: #{_cbm_forward_impl.1} parent=91 // loop_pre_header
                _
              $region101: #{_cbm_forward_impl.1} parent=91 // loop_header
                %s1054 = sphi 0, %s1056
                %p1055 = scmp.ge.s32.totalorder %s1054, %s1047
                %s1059 = sphi 0, %s1066
                %s1060 = sphi %s1050, %s1069
                %s1061 = sphi %s1052, %s1070
              $region102: #{_cbm_forward_impl.1} parent=91 // loop_header_branch
                %1058 = sbr.rel (%p1055) target = $region106
              $region103: #{_cbm_forward_impl.1} parent=91 // loop_body
                %v1062 = vld [vmem:[%s1060] sm:$0xff]
                %1063 = vst [vmem:[%s1061] sm:$0xff] %v1062
                %s1064 = sadd.s32 1, %s1059
                %p1065 = scmp.ge.s32.totalorder %s1064, %s1047
                %s1066 = scalar_select %p1065, 0, %s1064
                %s1067 = smul.u32 %s1066, 8
                %s1068 = smul.u32 %s1066, 8
                %s1069 = scalar_lea.vmem %s1050, %s1067 [#allocation12]
                %s1070 = scalar_lea.vmem %s1052, %s1068
              $region104: #{_cbm_forward_impl.1} parent=91 // loop_footer
                %s1056 = sadd.s32 %s1054, 1
              $region105: #{_cbm_forward_impl.1} parent=91 // loop_footer_branch
                %1053 = sbr.rel target = $region101
              $region106: #{_cbm_forward_impl.1} parent=91 // loop_exit
                _
            $region92: #{_cbm_forward_impl.1} parent=83 // pred_fallthru
              _
          $region84: #{_cbm_forward_impl.1} parent=79 // pred_fallthru
            _
          %1121 = vnop
        $region80: #{_cbm_forward_impl.1} parent=51 // pred_fallthru
          _
        // Predicated region
        $region129: #{_cbm_forward_impl.1} parent=51 // pred_check
          %p1122 = pneg %p290
        $region130: #{_cbm_forward_impl.1} parent=51 // pred_check_branch
          %1124 = sbr.rel (%p1122) target = $region132
        $region131: #{_cbm_forward_impl.1} parent=51 // pred_region
          %s1125 = smul.u32 2, %s32
          %s1126 = ssub.s32 3, %s1125
          %p1127 = scmp.lt.s32.totalorder %s1126, 2
          %s1128 = scalar_select %p1127, %s1126, 2
          %s1129 = smul.u32 128, %s1128
          %p1130 = scmp.ne.s32.totalorder 0, %s1129
          %s1131 = sadd.s32 %s31, %s1125
          %s1132 = smul.addr %s1131, 8
          %s1133 = scalar_lea.vmem %s9, %s1132
          // Predicated region
          $region133: #{_cbm_forward_impl.1} parent=131 // pred_check
            %p1134 = pneg %p1130
          $region134: #{_cbm_forward_impl.1} parent=131 // pred_check_branch
            %1136 = sbr.rel (%p1134) target = $region136
          $region135: #{_cbm_forward_impl.1} parent=131 // pred_region
            // Predicated region
            $region137: #{_cbm_forward_impl.1} parent=135 // pred_check
              _
            $region138: #{_cbm_forward_impl.1} parent=135 // pred_check_branch
              %1138 = sbr.rel (0) target = $region140
            $region139: #{_cbm_forward_impl.1} parent=135 // pred_region
              // Predicated region
              $region159: #{_cbm_forward_impl.1} parent=139 // pred_check
                _
              $region160: #{_cbm_forward_impl.1} parent=139 // pred_check_branch
                %1189 = sbr.rel (0) target = $region162
              $region161: #{_cbm_forward_impl.1} parent=139 // pred_region
                %s1190 = sshrl.u32 %s1128, 1
                // While loop
                $region163: #{_cbm_forward_impl.1} parent=161 // loop_pre_header
                  _
                $region164: #{_cbm_forward_impl.1} parent=161 // loop_header
                  %s1192 = sphi 0, %s1194
                  %p1193 = scmp.ge.s32.totalorder %s1192, %s1190
                  %s1197 = sphi 0, %s1206
                  %s1198 = sphi %s1004, %s1209
                  %s1199 = sphi %s1133, %s1210
                $region165: #{_cbm_forward_impl.1} parent=161 // loop_header_branch
                  %1196 = sbr.rel (%p1193) target = $region169
                $region166: #{_cbm_forward_impl.1} parent=161 // loop_body
                  %v1200 = vld [vmem:[%s1198] sm:$0xff]
                  %1201 = vst [vmem:[%s1199] sm:$0xff] %v1200
                  %v1202 = vld [vmem:[%s1198 + $0x8] sm:$0xff]
                  %1203 = vst [vmem:[%s1199 + $0x8] sm:$0xff] %v1202
                  %s1204 = sadd.s32 1, %s1197
                  %p1205 = scmp.ge.s32.totalorder %s1204, %s1190
                  %s1206 = scalar_select %p1205, 0, %s1204
                  %s1207 = smul.u32 %s1206, 16
                  %s1208 = smul.u32 %s1206, 16
                  %s1209 = scalar_lea.vmem %s1004, %s1207 [#allocation13]
                  %s1210 = scalar_lea.vmem %s1133, %s1208
                $region167: #{_cbm_forward_impl.1} parent=161 // loop_footer
                  %s1194 = sadd.s32 %s1192, 1
                $region168: #{_cbm_forward_impl.1} parent=161 // loop_footer_branch
                  %1191 = sbr.rel target = $region164
                $region169: #{_cbm_forward_impl.1} parent=161 // loop_exit
                  _
                %s1211 = sshrl.u32 %s1128, 1
                %s1212 = sand.u32 %s1128, 1
                %s1213 = smul.u32 %s1211, 2
                %s1214 = smul.u32 8, %s1213
                %s1215 = scalar_lea.vmem %s1004, %s1214 [#allocation13]
                %s1216 = smul.u32 8, %s1213
                %s1217 = scalar_lea.vmem %s1133, %s1216
                // While loop
                $region170: #{_cbm_forward_impl.1} parent=161 // loop_pre_header
                  _
                $region171: #{_cbm_forward_impl.1} parent=161 // loop_header
                  %s1219 = sphi 0, %s1221
                  %p1220 = scmp.ge.s32.totalorder %s1219, %s1212
                  %s1224 = sphi 0, %s1231
                  %s1225 = sphi %s1215, %s1234
                  %s1226 = sphi %s1217, %s1235
                $region172: #{_cbm_forward_impl.1} parent=161 // loop_header_branch
                  %1223 = sbr.rel (%p1220) target = $region176
                $region173: #{_cbm_forward_impl.1} parent=161 // loop_body
                  %v1227 = vld [vmem:[%s1225] sm:$0xff]
                  %1228 = vst [vmem:[%s1226] sm:$0xff] %v1227
                  %s1229 = sadd.s32 1, %s1224
                  %p1230 = scmp.ge.s32.totalorder %s1229, %s1212
                  %s1231 = scalar_select %p1230, 0, %s1229
                  %s1232 = smul.u32 %s1231, 8
                  %s1233 = smul.u32 %s1231, 8
                  %s1234 = scalar_lea.vmem %s1215, %s1232 [#allocation13]
                  %s1235 = scalar_lea.vmem %s1217, %s1233
                $region174: #{_cbm_forward_impl.1} parent=161 // loop_footer
                  %s1221 = sadd.s32 %s1219, 1
                $region175: #{_cbm_forward_impl.1} parent=161 // loop_footer_branch
                  %1218 = sbr.rel target = $region171
                $region176: #{_cbm_forward_impl.1} parent=161 // loop_exit
                  _
              $region162: #{_cbm_forward_impl.1} parent=139 // pred_fallthru
                _
              // Predicated region
              $region177: #{_cbm_forward_impl.1} parent=139 // pred_check
                _
              $region178: #{_cbm_forward_impl.1} parent=139 // pred_check_branch
                %1237 = sbr.rel target = $region180
              $region179: #{_cbm_forward_impl.1} parent=139 // pred_region
                _
              $region180: #{_cbm_forward_impl.1} parent=139 // pred_fallthru
                _
            $region140: #{_cbm_forward_impl.1} parent=135 // pred_fallthru
              _
            // Predicated region
            $region141: #{_cbm_forward_impl.1} parent=135 // pred_check
              _
            $region142: #{_cbm_forward_impl.1} parent=135 // pred_check_branch
              %1140 = sbr.rel target = $region144
            $region143: #{_cbm_forward_impl.1} parent=135 // pred_region
              %s1142 = sshrl.u32 %s1128, 1
              // While loop
              $region145: #{_cbm_forward_impl.1} parent=143 // loop_pre_header
                _
              $region146: #{_cbm_forward_impl.1} parent=143 // loop_header
                %s1144 = sphi 0, %s1146
                %p1145 = scmp.ge.s32.totalorder %s1144, %s1142
                %s1149 = sphi 0, %s1158
                %s1150 = sphi %s1004, %s1161
                %s1151 = sphi %s1133, %s1162
              $region147: #{_cbm_forward_impl.1} parent=143 // loop_header_branch
                %1148 = sbr.rel (%p1145) target = $region151
              $region148: #{_cbm_forward_impl.1} parent=143 // loop_body
                %v1152 = vld [vmem:[%s1150] sm:$0xff]
                %1153 = vst [vmem:[%s1151] sm:$0xff] %v1152
                %v1154 = vld [vmem:[%s1150 + $0x8] sm:$0xff]
                %1155 = vst [vmem:[%s1151 + $0x8] sm:$0xff] %v1154
                %s1156 = sadd.s32 1, %s1149
                %p1157 = scmp.ge.s32.totalorder %s1156, %s1142
                %s1158 = scalar_select %p1157, 0, %s1156
                %s1159 = smul.u32 %s1158, 16
                %s1160 = smul.u32 %s1158, 16
                %s1161 = scalar_lea.vmem %s1004, %s1159 [#allocation13]
                %s1162 = scalar_lea.vmem %s1133, %s1160
              $region149: #{_cbm_forward_impl.1} parent=143 // loop_footer
                %s1146 = sadd.s32 %s1144, 1
              $region150: #{_cbm_forward_impl.1} parent=143 // loop_footer_branch
                %1143 = sbr.rel target = $region146
              $region151: #{_cbm_forward_impl.1} parent=143 // loop_exit
                _
              %s1163 = sshrl.u32 %s1128, 1
              %s1164 = sand.u32 %s1128, 1
              %s1165 = smul.u32 %s1163, 2
              %s1166 = smul.u32 8, %s1165
              %s1167 = scalar_lea.vmem %s1004, %s1166 [#allocation13]
              %s1168 = smul.u32 8, %s1165
              %s1169 = scalar_lea.vmem %s1133, %s1168
              // While loop
              $region152: #{_cbm_forward_impl.1} parent=143 // loop_pre_header
                _
              $region153: #{_cbm_forward_impl.1} parent=143 // loop_header
                %s1171 = sphi 0, %s1173
                %p1172 = scmp.ge.s32.totalorder %s1171, %s1164
                %s1176 = sphi 0, %s1183
                %s1177 = sphi %s1167, %s1186
                %s1178 = sphi %s1169, %s1187
              $region154: #{_cbm_forward_impl.1} parent=143 // loop_header_branch
                %1175 = sbr.rel (%p1172) target = $region158
              $region155: #{_cbm_forward_impl.1} parent=143 // loop_body
                %v1179 = vld [vmem:[%s1177] sm:$0xff]
                %1180 = vst [vmem:[%s1178] sm:$0xff] %v1179
                %s1181 = sadd.s32 1, %s1176
                %p1182 = scmp.ge.s32.totalorder %s1181, %s1164
                %s1183 = scalar_select %p1182, 0, %s1181
                %s1184 = smul.u32 %s1183, 8
                %s1185 = smul.u32 %s1183, 8
                %s1186 = scalar_lea.vmem %s1167, %s1184 [#allocation13]
                %s1187 = scalar_lea.vmem %s1169, %s1185
              $region156: #{_cbm_forward_impl.1} parent=143 // loop_footer
                %s1173 = sadd.s32 %s1171, 1
              $region157: #{_cbm_forward_impl.1} parent=143 // loop_footer_branch
                %1170 = sbr.rel target = $region153
              $region158: #{_cbm_forward_impl.1} parent=143 // loop_exit
                _
            $region144: #{_cbm_forward_impl.1} parent=135 // pred_fallthru
              _
          $region136: #{_cbm_forward_impl.1} parent=131 // pred_fallthru
            _
          %1238 = vnop
        $region132: #{_cbm_forward_impl.1} parent=51 // pred_fallthru
          _
      $region52: #{_cbm_forward_impl.1} parent=5 // pred_fallthru
        _
      %p1239 = scmp.le.s32.totalorder 2, %s22
      // Predicated region
      $region181: #{_cbm_forward_impl.1} parent=5 // pred_check
        %p1240 = pneg %p1239
      $region182: #{_cbm_forward_impl.1} parent=5 // pred_check_branch
        %1242 = sbr.rel (%p1240) target = $region184
      $region183: #{_cbm_forward_impl.1} parent=5 // pred_region
        %s1243 = ssub.s32 %s22, 2
        // Predicated region
        $region185: #{_cbm_forward_impl.1} parent=183 // pred_check
          %p1244 = pneg %p268
        $region186: #{_cbm_forward_impl.1} parent=183 // pred_check_branch
          %1246 = sbr.rel (%p1244) target = $region188
        $region187: #{_cbm_forward_impl.1} parent=183 // pred_region
          %s1247 = sand.u32 %s253, 1
          %s1248 = sand.u32 %s253, 1
          %s1249 = smul.addr %s1248, 16
          %s1250 = scalar_lea.vmem [#allocation12], %s1249
        $region188: #{_cbm_forward_impl.1} parent=183 // pred_fallthru
          _
        // Predicated region
        $region189: #{_cbm_forward_impl.1} parent=183 // pred_check
          %p1251 = pneg %p296
        $region190: #{_cbm_forward_impl.1} parent=183 // pred_check_branch
          %1253 = sbr.rel (%p1251) target = $region192
        $region191: #{_cbm_forward_impl.1} parent=183 // pred_region
          %s1254 = sand.u32 %s281, 1
          %s1255 = sand.u32 %s281, 1
          %s1256 = smul.addr %s1255, 16
          %s1257 = scalar_lea.vmem [#allocation13], %s1256
        $region192: #{_cbm_forward_impl.1} parent=183 // pred_fallthru
          _
      $region184: #{_cbm_forward_impl.1} parent=5 // pred_fallthru
        _
    $region6: #{_cbm_forward_impl.1} parent=1 // loop_footer
      %s26 = sadd.s32 1, %s22
    $region7: #{_cbm_forward_impl.1} parent=1 // loop_footer_branch
      %21 = sbr.rel target = $region3
    $region8: #{_cbm_forward_impl.1} parent=1 // loop_exit
      _
    %1258 = vsyncpa [#allocation3], 1
    %s1259 = scalar_lea.sflag [#allocation3], 1
    %1260 = vsyncpa %s1259, 1
    %1261 = vsyncpa [#allocation5], 1
    %1262 = vsyncpa [#allocation8], 1
    %1263 = vsyncpa [#allocation11], 1

// kernel: _cbm_forward_impl.1
$region0: #{_cbm_forward_impl.1}
  #allocation0 [shape = 'u32[]', space=smem, size = 0x4, offset = 0x4, fixed_abs, tag = 'smem constant byte address 0x4 - core index']
  #allocation1 [shape = 'u32[144,128]{1,0:T(1,128)}', space=vmem, size = 0x12000, scoped, tag = 'internal scratch']
  %s0 = inlined_call_operand.hbm [shape: f32[24,32], index: 0, kind: input, shape index: {}]
  %s1 = inlined_call_operand.hbm [shape: f32[1,32,256], index: 1, kind: input, shape index: {}]
  %s2 = inlined_call_operand.vmem [shape: f32[1,1,256], index: 2, kind: input, shape index: {}]
  %s3 = inlined_call_operand.hbm [shape: f32[1,256,128], index: 3, kind: input, shape index: {}]
  %s4 = inlined_call_operand.vmem [shape: f32[1,1,128], index: 4, kind: input, shape index: {}]
  %s5 = inlined_call_operand.hbm [shape: f32[1,128,128], index: 5, kind: input, shape index: {}]
  %s6 = inlined_call_operand.hbm [shape: f32[1,1,128], index: 6, kind: input, shape index: {}]
  %s7 = inlined_call_operand.hbm [shape: f32[128,128], index: 7, kind: input, shape index: {}]
  %s8 = inlined_call_operand.vmem [shape: f32[24,128], index: 8, kind: output, shape index: {0}]
  %s9 = inlined_call_operand.vmem [shape: f32[24,128], index: 9, kind: output, shape index: {1}]
  %10 = xla_tuple %s8, %s9
  %s11 = sld [smem:[#allocation0]]
  $region193: #{_cbm_forward_impl.1} parent=0
    _
  %s13 = ssub.s32 1, %s11
  %s14 = scalar_select 0, %s13, %s11
  $region1: #{_cbm_forward_impl.1} parent=0
    #allocation2 [shape = 'u8[16384]{0}', space=vmem, size = 0x4000, scoped, tag = 'input window, operand 0']
    #allocation3 [shape = 's32[2]{0}', space=sflag, size = 0x8, scoped, tag = 'scoped memory for _cbm_forward_impl.1']
    #allocation4 [shape = 'u8[32768]{0}', space=vmem, size = 0x8000, scoped, tag = 'input window, operand 1, single buffered']
    #allocation5 [shape = 's32[1]{0}', space=sflag, size = 0x4, scoped, tag = 'scoped memory for _cbm_forward_impl.1']
    #allocation6 [shape = 'u8[131072]{0}', space=vmem, size = 0x20000, scoped, tag = 'input window, operand 3, single buffered']
    #allocation7 [shape = 'u8[65536]{0}', space=vmem, size = 0x10000, scoped, tag = 'input window, operand 5, single buffered']
    #allocation8 [shape = 's32[1]{0}', space=sflag, size = 0x4, scoped, tag = 'scoped memory for _cbm_forward_impl.1']
    #allocation9 [shape = 'u8[512]{0}', space=vmem, size = 0x400, scoped, tag = 'input window, operand 6, single buffered']
    #allocation10 [shape = 'u8[65536]{0}', space=vmem, size = 0x10000, scoped, tag = 'input window, operand 7, single buffered']
    #allocation11 [shape = 's32[1]{0}', space=sflag, size = 0x4, scoped, tag = 'scoped memory for _cbm_forward_impl.1']
    #allocation12 [shape = 'u8[16384]{0}', space=vmem, size = 0x4000, scoped, tag = 'output window, operand 0']
    #allocation13 [shape = 'u8[16384]{0}', space=vmem, size = 0x4000, scoped, tag = 'output window, operand 1']
    %15 = vsyncpa [#allocation3], 0
    %s16 = scalar_lea.sflag [#allocation3], 1
    %17 = vsyncpa %s16, 0
    %18 = vsyncpa [#allocation5], 0
    %19 = vsyncpa [#allocation8], 0
    %20 = vsyncpa [#allocation11], 0
    loop: start=0, step=1, limit=4
    $region2: #{_cbm_forward_impl.1} parent=1 // loop_pre_header
      _
    $region3: #{_cbm_forward_impl.1} parent=1 // loop_header
      %s22 = sphi 0, %s26
      %p23 = scmp.ge.s32.totalorder %s22, 4
      %s29 = sphi 0, %s41
      %s30 = sphi 0, %s37
      %s31 = sphi 0, %s29
      %s32 = sphi 0, %s30
      %s33 = sphi 0, %s31
      %s34 = sphi 0, %s32
      %s44 = sphi 0, %s46
      %s47 = sphi 0, %s44
      %s48 = sphi 0, %s47
      %s64 = sphi 0, %s48
      %s70 = sphi 0, %s72
      %s73 = sphi 0, %s70
      %s74 = sphi 0, %s73
      %s90 = sphi 0, %s74
      %s96 = sphi 0, %s98
      %s99 = sphi 0, %s96
      %s100 = sphi 0, %s99
      %s116 = sphi 0, %s100
      %s122 = sphi 0, %s124
      %s125 = sphi 0, %s122
      %s126 = sphi 0, %s125
      %s142 = sphi 0, %s126
      %s148 = sphi 0, %s150
      %s151 = sphi 0, %s148
      %s152 = sphi 0, %s151
      %s168 = sphi 0, %s152
      %s174 = sphi 0, %s176
      %s177 = sphi 0, %s174
      %s178 = sphi 0, %s177
      %s194 = sphi 0, %s178
      %s200 = sphi 0, %s202
      %s203 = sphi 0, %s200
      %s204 = sphi 0, %s203
      %s220 = sphi 0, %s204
      %s224 = sphi 0, %s224
      %s226 = sphi 0, %s224
      %s227 = sphi 0, %s226
      %s241 = sphi 0, %s227
      %s249 = sphi 0, %s251
      %s252 = sphi 0, %s249
      %s253 = sphi 0, %s252
      %s269 = sphi 0, %s253
      %s277 = sphi 0, %s279
      %s280 = sphi 0, %s277
      %s281 = sphi 0, %s280
      %s297 = sphi 0, %s281
    $region4: #{_cbm_forward_impl.1} parent=1 // loop_header_branch
      %25 = sbr.rel (%p23) target = $region8
    $region5: #{_cbm_forward_impl.1} parent=1 // loop_body
      %s27 = ssub.s32 %s22, 1
      %s28 = ssub.s32 %s22, 2
      %s35 = sadd.s32 1, %s30
      %p36 = scmp.ge.s32.totalorder %s35, 2
      %s37 = scalar_select %p36, 0, %s35
      %s38 = sadd.s32 1, %s29
      %s39 = scalar_select %p36, %s38, %s29
      %p40 = scmp.ge.s32.totalorder %s39, 1
      %s41 = scalar_select %p40, 0, %s39
      %s42 = ssub.s32 %s30, %s37
      %p43 = scmp.eq.s32.totalorder %s42, 0
      %s45 = sadd.s32 %s44, 1
      %s46 = scalar_select %p43, %s44, %s45
      %p49 = pneg %p43
      %p50 = scmp.eq.s32.totalorder %s22, 1
      %p51 = por %p49, %p50
      %p52 = scmp.ne.s32.totalorder %s44, %s47
      %p53 = scmp.eq.s32.totalorder %s22, 0
      %p54 = por %p52, %p53
      %p55 = scmp.ne.s32.totalorder %s44, %s47
      %p56 = scmp.eq.s32.totalorder %s27, 1
      %p57 = por %p55, %p56
      %p58 = scmp.ne.s32.totalorder %s47, %s48
      %p59 = scmp.eq.s32.totalorder %s27, 0
      %p60 = por %p58, %p59
      %p61 = scmp.ne.s32.totalorder %s47, %s48
      %p62 = scmp.eq.s32.totalorder %s28, 1
      %p63 = por %p61, %p62
      %p65 = scmp.ne.s32.totalorder %s48, %s64
      %p66 = scmp.eq.s32.totalorder %s28, 0
      %p67 = por %p65, %p66
      %s68 = ssub.s32 %s29, %s41
      %p69 = scmp.eq.s32.totalorder %s68, 0
      %s71 = sadd.s32 %s70, 1
      %s72 = scalar_select %p69, %s70, %s71
      %p75 = pneg %p69
      %p76 = scmp.eq.s32.totalorder %s22, 1
      %p77 = por %p75, %p76
      %p78 = scmp.ne.s32.totalorder %s70, %s73
      %p79 = scmp.eq.s32.totalorder %s22, 0
      %p80 = por %p78, %p79
      %p81 = scmp.ne.s32.totalorder %s70, %s73
      %p82 = scmp.eq.s32.totalorder %s27, 1
      %p83 = por %p81, %p82
      %p84 = scmp.ne.s32.totalorder %s73, %s74
      %p85 = scmp.eq.s32.totalorder %s27, 0
      %p86 = por %p84, %p85
      %p87 = scmp.ne.s32.totalorder %s73, %s74
      %p88 = scmp.eq.s32.totalorder %s28, 1
      %p89 = por %p87, %p88
      %p91 = scmp.ne.s32.totalorder %s74, %s90
      %p92 = scmp.eq.s32.totalorder %s28, 0
      %p93 = por %p91, %p92
      %s94 = ssub.s32 %s29, %s41
      %p95 = scmp.eq.s32.totalorder %s94, 0
      %s97 = sadd.s32 %s96, 1
      %s98 = scalar_select %p95, %s96, %s97
      %p101 = pneg %p95
      %p102 = scmp.eq.s32.totalorder %s22, 1
      %p103 = por %p101, %p102
      %p104 = scmp.ne.s32.totalorder %s96, %s99
      %p105 = scmp.eq.s32.totalorder %s22, 0
      %p106 = por %p104, %p105
      %p107 = scmp.ne.s32.totalorder %s96, %s99
      %p108 = scmp.eq.s32.totalorder %s27, 1
      %p109 = por %p107, %p108
      %p110 = scmp.ne.s32.totalorder %s99, %s100
      %p111 = scmp.eq.s32.totalorder %s27, 0
      %p112 = por %p110, %p111
      %p113 = scmp.ne.s32.totalorder %s99, %s100
      %p114 = scmp.eq.s32.totalorder %s28, 1
      %p115 = por %p113, %p114
      %p117 = scmp.ne.s32.totalorder %s100, %s116
      %p118 = scmp.eq.s32.totalorder %s28, 0
      %p119 = por %p117, %p118
      %s120 = ssub.s32 %s29, %s41
      %p121 = scmp.eq.s32.totalorder %s120, 0
      %s123 = sadd.s32 %s122, 1
      %s124 = scalar_select %p121, %s122, %s123
      %p127 = pneg %p121
      %p128 = scmp.eq.s32.totalorder %s22, 1
      %p129 = por %p127, %p128
      %p130 = scmp.ne.s32.totalorder %s122, %s125
      %p131 = scmp.eq.s32.totalorder %s22, 0
      %p132 = por %p130, %p131
      %p133 = scmp.ne.s32.totalorder %s122, %s125
      %p134 = scmp.eq.s32.totalorder %s27, 1
      %p135 = por %p133, %p134
      %p136 = scmp.ne.s32.totalorder %s125, %s126
      %p137 = scmp.eq.s32.totalorder %s27, 0
      %p138 = por %p136, %p137
      %p139 = scmp.ne.s32.totalorder %s125, %s126
      %p140 = scmp.eq.s32.totalorder %s28, 1
      %p141 = por %p139, %p140
      %p143 = scmp.ne.s32.totalorder %s126, %s142
      %p144 = scmp.eq.s32.totalorder %s28, 0
      %p145 = por %p143, %p144
      %s146 = ssub.s32 %s29, %s41
      %p147 = scmp.eq.s32.totalorder %s146, 0
      %s149 = sadd.s32 %s148, 1
      %s150 = scalar_select %p147, %s148, %s149
      %p153 = pneg %p147
      %p154 = scmp.eq.s32.totalorder %s22, 1
      %p155 = por %p153, %p154
      %p156 = scmp.ne.s32.totalorder %s148, %s151
      %p157 = scmp.eq.s32.totalorder %s22, 0
      %p158 = por %p156, %p157
      %p159 = scmp.ne.s32.totalorder %s148, %s151
      %p160 = scmp.eq.s32.totalorder %s27, 1
      %p161 = por %p159, %p160
      %p162 = scmp.ne.s32.totalorder %s151, %s152
      %p163 = scmp.eq.s32.totalorder %s27, 0
      %p164 = por %p162, %p163
      %p165 = scmp.ne.s32.totalorder %s151, %s152
      %p166 = scmp.eq.s32.totalorder %s28, 1
      %p167 = por %p165, %p166
      %p169 = scmp.ne.s32.totalorder %s152, %s168
      %p170 = scmp.eq.s32.totalorder %s28, 0
      %p171 = por %p169, %p170
      %s172 = ssub.s32 %s29, %s41
      %p173 = scmp.eq.s32.totalorder %s172, 0
      %s175 = sadd.s32 %s174, 1
      %s176 = scalar_select %p173, %s174, %s175
      %p179 = pneg %p173
      %p180 = scmp.eq.s32.totalorder %s22, 1
      %p181 = por %p179, %p180
      %p182 = scmp.ne.s32.totalorder %s174, %s177
      %p183 = scmp.eq.s32.totalorder %s22, 0
      %p184 = por %p182, %p183
      %p185 = scmp.ne.s32.totalorder %s174, %s177
      %p186 = scmp.eq.s32.totalorder %s27, 1
      %p187 = por %p185, %p186
      %p188 = scmp.ne.s32.totalorder %s177, %s178
      %p189 = scmp.eq.s32.totalorder %s27, 0
      %p190 = por %p188, %p189
      %p191 = scmp.ne.s32.totalorder %s177, %s178
      %p192 = scmp.eq.s32.totalorder %s28, 1
      %p193 = por %p191, %p192
      %p195 = scmp.ne.s32.totalorder %s178, %s194
      %p196 = scmp.eq.s32.totalorder %s28, 0
      %p197 = por %p195, %p196
      %s198 = ssub.s32 %s29, %s41
      %p199 = scmp.eq.s32.totalorder %s198, 0
      %s201 = sadd.s32 %s200, 1
      %s202 = scalar_select %p199, %s200, %s201
      %p205 = pneg %p199
      %p206 = scmp.eq.s32.totalorder %s22, 1
      %p207 = por %p205, %p206
      %p208 = scmp.ne.s32.totalorder %s200, %s203
      %p209 = scmp.eq.s32.totalorder %s22, 0
      %p210 = por %p208, %p209
      %p211 = scmp.ne.s32.totalorder %s200, %s203
      %p212 = scmp.eq.s32.totalorder %s27, 1
      %p213 = por %p211, %p212
      %p214 = scmp.ne.s32.totalorder %s203, %s204
      %p215 = scmp.eq.s32.totalorder %s27, 0
      %p216 = por %p214, %p215
      %p217 = scmp.ne.s32.totalorder %s203, %s204
      %p218 = scmp.eq.s32.totalorder %s28, 1
      %p219 = por %p217, %p218
      %p221 = scmp.ne.s32.totalorder %s204, %s220
      %p222 = scmp.eq.s32.totalorder %s28, 0
      %p223 = por %p221, %p222
      %s225 = sadd.s32 %s224, 1
      %p228 = scmp.eq.s32.totalorder %s22, 1
      %p229 = scmp.ne.s32.totalorder %s224, %s226
      %p230 = scmp.eq.s32.totalorder %s22, 0
      %p231 = por %p229, %p230
      %p232 = scmp.ne.s32.totalorder %s224, %s226
      %p233 = scmp.eq.s32.totalorder %s27, 1
      %p234 = por %p232, %p233
      %p235 = scmp.ne.s32.totalorder %s226, %s227
      %p236 = scmp.eq.s32.totalorder %s27, 0
      %p237 = por %p235, %p236
      %p238 = scmp.ne.s32.totalorder %s226, %s227
      %p239 = scmp.eq.s32.totalorder %s28, 1
      %p240 = por %p238, %p239
      %p242 = scmp.ne.s32.totalorder %s227, %s241
      %p243 = scmp.eq.s32.totalorder %s28, 0
      %p244 = por %p242, %p243
      %s245 = ssub.s32 %s30, %s37
      %s246 = ssub.s32 %s29, %s41
      %s247 = sor.u32 %s245, %s246
      %p248 = scmp.eq.s32.totalorder %s247, 0
      %s250 = sadd.s32 %s249, 1
      %s251 = scalar_select %p248, %s249, %s250
      %p254 = pneg %p248
      %p255 = scmp.eq.s32.totalorder %s22, 1
      %p256 = por %p254, %p255
      %p257 = scmp.ne.s32.totalorder %s249, %s252
      %p258 = scmp.eq.s32.totalorder %s22, 0
      %p259 = por %p257, %p258
      %p260 = scmp.ne.s32.totalorder %s249, %s252
      %p261 = scmp.eq.s32.totalorder %s27, 1
      %p262 = por %p260, %p261
      %p263 = scmp.ne.s32.totalorder %s252, %s253
      %p264 = scmp.eq.s32.totalorder %s27, 0
      %p265 = por %p263, %p264
      %p266 = scmp.ne.s32.totalorder %s252, %s253
      %p267 = scmp.eq.s32.totalorder %s28, 1
      %p268 = por %p266, %p267
      %p270 = scmp.ne.s32.totalorder %s253, %s269
      %p271 = scmp.eq.s32.totalorder %s28, 0
      %p272 = por %p270, %p271
      %s273 = ssub.s32 %s30, %s37
      %s274 = ssub.s32 %s29, %s41
      %s275 = sor.u32 %s273, %s274
      %p276 = scmp.eq.s32.totalorder %s275, 0
      %s278 = sadd.s32 %s277, 1
      %s279 = scalar_select %p276, %s277, %s278
      %p282 = pneg %p276
      %p283 = scmp.eq.s32.totalorder %s22, 1
      %p284 = por %p282, %p283
      %p285 = scmp.ne.s32.totalorder %s277, %s280
      %p286 = scmp.eq.s32.totalorder %s22, 0
      %p287 = por %p285, %p286
      %p288 = scmp.ne.s32.totalorder %s277, %s280
      %p289 = scmp.eq.s32.totalorder %s27, 1
      %p290 = por %p288, %p289
      %p291 = scmp.ne.s32.totalorder %s280, %s281
      %p292 = scmp.eq.s32.totalorder %s27, 0
      %p293 = por %p291, %p292
      %p294 = scmp.ne.s32.totalorder %s280, %s281
      %p295 = scmp.eq.s32.totalorder %s28, 1
      %p296 = por %p294, %p295
      %p298 = scmp.ne.s32.totalorder %s281, %s297
      %p299 = scmp.eq.s32.totalorder %s28, 0
      %p300 = por %p298, %p299
      %p301 = scmp.le.s32.totalorder 1, %s22
      %p302 = scmp.lt.s32.totalorder %s22, 3
      %p303 = pnand %p301, %p302
      %p304 = pneg %p303
      // Predicated region
      $region9: #{_cbm_forward_impl.1} parent=5 // pred_check
        _
      $region10: #{_cbm_forward_impl.1} parent=5 // pred_check_branch
        %306 = sbr.rel (%p303) target = $region12
      $region11: #{_cbm_forward_impl.1} parent=5 // pred_region
        %s307 = ssub.s32 %s22, 1
        // Predicated region
        $region13: #{_cbm_forward_impl.1} parent=11 // pred_check
          %p308 = pneg %p86
        $region14: #{_cbm_forward_impl.1} parent=11 // pred_check_branch
          %310 = sbr.rel (%p308) target = $region16
        $region15: #{_cbm_forward_impl.1} parent=11 // pred_region
          %s312 = ssub.s32 1024, 1024
          %313 = vsyncadd [#allocation5], %s312
          %s314 = smul.addr %s31, 8
          %s315 = smul.addr %s314, 128
          %s316 = scalar_lea.hbm %s1, %s315
          %s317 = sshll.u32 [#allocation4], 4
          %s318 = int_to_ptr.vmem [resolvable:$true] %s317
          %323 = dma.hbm_to_vmem [thread:$0]  %s316, 1024, %s318, [#allocation5], 256, 256, 16
        $region16: #{_cbm_forward_impl.1} parent=11 // pred_fallthru
          _
        // Predicated region
        $region17: #{_cbm_forward_impl.1} parent=11 // pred_check
          %p324 = pneg %p112
        $region18: #{_cbm_forward_impl.1} parent=11 // pred_check_branch
          %326 = sbr.rel (%p324) target = $region20
        $region19: #{_cbm_forward_impl.1} parent=11 // pred_region
          %p327 = scmp.lt.s32.totalorder %s31, 0
          %s328 = scalar_select %p327, %s31, 0
          %s329 = smul.addr %s328, 2
          %s330 = scalar_lea.vmem %s2, %s329
        $region20: #{_cbm_forward_impl.1} parent=11 // pred_fallthru
          _
        // Predicated region
        $region21: #{_cbm_forward_impl.1} parent=11 // pred_check
          %p331 = pneg %p138
        $region22: #{_cbm_forward_impl.1} parent=11 // pred_check_branch
          %333 = sbr.rel (%p331) target = $region24
        $region23: #{_cbm_forward_impl.1} parent=11 // pred_region
          %s335 = ssub.s32 4096, 4096
          %336 = vsyncadd [#allocation5], %s335
          %s337 = smul.addr %s31, 32
          %s338 = smul.addr %s337, 128
          %s339 = scalar_lea.hbm %s3, %s338
          %s340 = sshll.u32 [#allocation6], 4
          %s341 = int_to_ptr.vmem [resolvable:$true] %s340
          %346 = dma.hbm_to_vmem [thread:$0]  %s339, 4096, %s341, [#allocation5], 128, 128, 8
        $region24: #{_cbm_forward_impl.1} parent=11 // pred_fallthru
          _
        // Predicated region
        $region25: #{_cbm_forward_impl.1} parent=11 // pred_check
          %p347 = pneg %p164
        $region26: #{_cbm_forward_impl.1} parent=11 // pred_check_branch
          %349 = sbr.rel (%p347) target = $region28
        $region27: #{_cbm_forward_impl.1} parent=11 // pred_region
          %p350 = scmp.lt.s32.totalorder %s31, 0
          %s351 = scalar_select %p350, %s31, 0
          %s352 = scalar_lea.vmem %s4, %s351
        $region28: #{_cbm_forward_impl.1} parent=11 // pred_fallthru
          _
        // Predicated region
        $region29: #{_cbm_forward_impl.1} parent=11 // pred_check
          %p353 = pneg %p190
        $region30: #{_cbm_forward_impl.1} parent=11 // pred_check_branch
          %355 = sbr.rel (%p353) target = $region32
        $region31: #{_cbm_forward_impl.1} parent=11 // pred_region
          %s357 = ssub.s32 2048, 2048
          %358 = vsyncadd [#allocation8], %s357
          %s359 = smul.addr %s31, 16
          %s360 = smul.addr %s359, 128
          %s361 = scalar_lea.hbm %s5, %s360
          %s362 = sshll.u32 [#allocation7], 4
          %s363 = int_to_ptr.vmem [resolvable:$true] %s362
          %368 = dma.hbm_to_vmem [thread:$0]  %s361, 2048, %s363, [#allocation8], 128, 128, 8
        $region32: #{_cbm_forward_impl.1} parent=11 // pred_fallthru
          _
        // Predicated region
        $region33: #{_cbm_forward_impl.1} parent=11 // pred_check
          %p369 = pneg %p216
        $region34: #{_cbm_forward_impl.1} parent=11 // pred_check_branch
          %371 = sbr.rel (%p369) target = $region36
        $region35: #{_cbm_forward_impl.1} parent=11 // pred_region
          %s373 = ssub.s32 16, 16
          %374 = vsyncadd [#allocation8], %s373
          %s375 = smul.addr %s31, 16
          %s376 = scalar_lea.hbm %s6, %s375
          %s378 = sshll.u32 [#allocation9], 4
          %s379 = int_to_ptr.vmem [resolvable:$true] %s378
          %381 = dma.hbm_to_vmem [thread:$0]  %s376, 16, %s379, [#allocation8]
        $region36: #{_cbm_forward_impl.1} parent=11 // pred_fallthru
          _
        // Predicated region
        $region37: #{_cbm_forward_impl.1} parent=11 // pred_check
          %p382 = pneg %p237
        $region38: #{_cbm_forward_impl.1} parent=11 // pred_check_branch
          %384 = sbr.rel (%p382) target = $region40
        $region39: #{_cbm_forward_impl.1} parent=11 // pred_region
          %s386 = ssub.s32 2048, 2048
          %387 = vsyncadd [#allocation11], %s386
          %s388 = sshll.u32 [#allocation10], 4
          %s389 = int_to_ptr.vmem [resolvable:$true] %s388
          %394 = dma.hbm_to_vmem [thread:$0]  %s7, 2048, %s389, [#allocation11], 128, 128, 8
        $region40: #{_cbm_forward_impl.1} parent=11 // pred_fallthru
          _
      $region12: #{_cbm_forward_impl.1} parent=5 // pred_fallthru
        _
      %p395 = scmp.lt.s32.totalorder %s22, 2
      // Predicated region
      $region41: #{_cbm_forward_impl.1} parent=5 // pred_check
        %p396 = pneg %p395
      $region42: #{_cbm_forward_impl.1} parent=5 // pred_check_branch
        %398 = sbr.rel (%p396) target = $region44
      $region43: #{_cbm_forward_impl.1} parent=5 // pred_region
        // Predicated region
        $region45: #{_cbm_forward_impl.1} parent=43 // pred_check
          %p399 = pneg %p54
        $region46: #{_cbm_forward_impl.1} parent=43 // pred_check_branch
          %401 = sbr.rel (%p399) target = $region48
        $region47: #{_cbm_forward_impl.1} parent=43 // pred_region
          %s402 = sand.u32 %s44, 1
          %s403 = scalar_lea.sflag [#allocation3], %s402
          %s404 = sand.u32 %s44, 1
          %s405 = smul.addr %s404, 16
          %s406 = scalar_lea.vmem [#allocation2], %s405
          %s407 = smul.u32 2, %s30
          %s408 = ssub.s32 3, %s407
          %p409 = scmp.lt.s32.totalorder %s408, 2
          %s410 = scalar_select %p409, %s408, 2
          %s411 = smul.u32 128, %s410
          %s413 = ssub.s32 256, %s411
          %414 = vsyncadd %s403, %s413
          %p415 = scmp.ne.s32.totalorder 0, %s411
          %s416 = smul.addr %s407, 128
          %s417 = scalar_lea.hbm %s0, %s416
          %s418 = smul.u32 8, %s410
          %s419 = sshll.u32 %s406, 4
          %s420 = int_to_ptr.vmem [resolvable:$true] %s419
          %s421 = sshll.u32 %s418, 4
          %425 = dma.hbm_to_vmem [thread:$0]  (%p415), %s417, %s421, %s420, %s403, 128, 128, 8
        $region48: #{_cbm_forward_impl.1} parent=43 // pred_fallthru
          _
      $region44: #{_cbm_forward_impl.1} parent=5 // pred_fallthru
        _
      %p426 = scmp.le.s32.totalorder 1, %s22
      %p427 = scmp.lt.s32.totalorder %s22, 3
      %p428 = pnand %p426, %p427
      %p429 = pneg %p428
      // Predicated region
      $region49: #{_cbm_forward_impl.1} parent=5 // pred_check
        _
      $region50: #{_cbm_forward_impl.1} parent=5 // pred_check_branch
        %431 = sbr.rel (%p428) target = $region52
      $region51: #{_cbm_forward_impl.1} parent=5 // pred_region
        %s432 = ssub.s32 %s22, 1
        %s433 = sand.u32 %s47, 1
        %s434 = scalar_lea.sflag [#allocation3], %s433
        %s435 = sand.u32 %s47, 1
        %s436 = smul.addr %s435, 16
        %s437 = scalar_lea.vmem [#allocation2], %s436
        // Predicated region
        $region53: #{_cbm_forward_impl.1} parent=51 // pred_check
          %p438 = pneg %p60
        $region54: #{_cbm_forward_impl.1} parent=51 // pred_check_branch
          %440 = sbr.rel (%p438) target = $region56
        $region55: #{_cbm_forward_impl.1} parent=51 // pred_region
          %441 = dma.done %s434, 256
        $region56: #{_cbm_forward_impl.1} parent=51 // pred_fallthru
          _
        // Predicated region
        $region57: #{_cbm_forward_impl.1} parent=51 // pred_check
          %p442 = pneg %p86
        $region58: #{_cbm_forward_impl.1} parent=51 // pred_check_branch
          %444 = sbr.rel (%p442) target = $region60
        $region59: #{_cbm_forward_impl.1} parent=51 // pred_region
          %445 = dma.done [#allocation5], 1024
        $region60: #{_cbm_forward_impl.1} parent=51 // pred_fallthru
          _
        // Predicated region
        $region61: #{_cbm_forward_impl.1} parent=51 // pred_check
          %p446 = pneg %p138
        $region62: #{_cbm_forward_impl.1} parent=51 // pred_check_branch
          %448 = sbr.rel (%p446) target = $region64
        $region63: #{_cbm_forward_impl.1} parent=51 // pred_region
          %449 = dma.done [#allocation5], 4096
        $region64: #{_cbm_forward_impl.1} parent=51 // pred_fallthru
          _
        // Predicated region
        $region65: #{_cbm_forward_impl.1} parent=51 // pred_check
          %p450 = pneg %p190
        $region66: #{_cbm_forward_impl.1} parent=51 // pred_check_branch
          %452 = sbr.rel (%p450) target = $region68
        $region67: #{_cbm_forward_impl.1} parent=51 // pred_region
          %453 = dma.done [#allocation8], 2048
        $region68: #{_cbm_forward_impl.1} parent=51 // pred_fallthru
          _
        // Predicated region
        $region69: #{_cbm_forward_impl.1} parent=51 // pred_check
          %p454 = pneg %p216
        $region70: #{_cbm_forward_impl.1} parent=51 // pred_check_branch
          %456 = sbr.rel (%p454) target = $region72
        $region71: #{_cbm_forward_impl.1} parent=51 // pred_region
          %457 = dma.done [#allocation8], 16
        $region72: #{_cbm_forward_impl.1} parent=51 // pred_fallthru
          _
        // Predicated region
        $region73: #{_cbm_forward_impl.1} parent=51 // pred_check
          %p458 = pneg %p237
        $region74: #{_cbm_forward_impl.1} parent=51 // pred_check_branch
          %460 = sbr.rel (%p458) target = $region76
        $region75: #{_cbm_forward_impl.1} parent=51 // pred_region
          %461 = dma.done [#allocation11], 2048
        $region76: #{_cbm_forward_impl.1} parent=51 // pred_fallthru
          _
        %s462 = sand.u32 %s47, 1
        %s463 = scalar_lea.sflag [#allocation3], %s462
        %s464 = sand.u32 %s47, 1
        %s465 = smul.addr %s464, 16
        %s466 = scalar_lea.vmem [#allocation2], %s465
        %p467 = pneg %p60
        %p468 = pneg %p57
        %p469 = pneg %p86
        %p470 = pneg %p83
        %p471 = scmp.lt.s32.totalorder %s31, 0
        %s472 = scalar_select %p471, %s31, 0
        %s473 = smul.addr %s472, 2
        %s474 = scalar_lea.vmem %s2, %s473
        %p475 = pneg %p112
        %p476 = pneg %p109
        %p477 = pneg %p138
        %p478 = pneg %p135
        %p479 = scmp.lt.s32.totalorder %s31, 0
        %s480 = scalar_select %p479, %s31, 0
        %s481 = scalar_lea.vmem %s4, %s480
        %p482 = pneg %p164
        %p483 = pneg %p161
        %p484 = pneg %p190
        %p485 = pneg %p187
        %p486 = pneg %p216
        %p487 = pneg %p213
        %p488 = pneg %p237
        %p489 = pneg %p234
        %p490 = pneg %p265
        %p491 = pneg %p262
        %s492 = sand.u32 %s252, 1
        %s493 = sand.u32 %s252, 1
        %s494 = smul.addr %s493, 16
        %s495 = scalar_lea.vmem [#allocation12], %s494
        %p496 = pneg %p293
        %p497 = pneg %p290
        %s498 = sand.u32 %s280, 1
        %s499 = sand.u32 %s280, 1
        %s500 = smul.addr %s499, 16
        %s501 = scalar_lea.vmem [#allocation13], %s500
        %s502 = smul.u32 2, %s32
        %s503 = ssub.s32 3, %s502
        %p504 = scmp.lt.s32.totalorder %s503, 2
        %s505 = scalar_select %p504, %s503, 2
        %s506 = smul.u32 128, %s505
        %p507 = scmp.lt.s32.totalorder %s31, 0
        %s508 = scalar_select %p507, %s31, 0
        %s509 = smul.addr %s508, 2
        %s510 = scalar_lea.vmem %s2, %s509
        %p511 = scmp.lt.s32.totalorder %s31, 0
        %s512 = scalar_select %p511, %s31, 0
        %s513 = scalar_lea.vmem %s4, %s512
        %s514 = smul.u32 2, %s32
        %s515 = ssub.s32 3, %s514
        %p516 = scmp.lt.s32.totalorder %s515, 2
        %s517 = scalar_select %p516, %s515, 2
        %s518 = smul.u32 128, %s517
        %s519 = smul.u32 2, %s32
        %s520 = ssub.s32 3, %s519
        %p521 = scmp.lt.s32.totalorder %s520, 2
        %s522 = scalar_select %p521, %s520, 2
        %s523 = smul.u32 128, %s522
        %v524 = vld [vmem:[%s437] sm:$0xff]
        %v525 = vld [vmem:[%s437 + $0x8] sm:$0xff]
        %v526 = vld [vmem:[#allocation4] sm:$0xff]
        %v527 = vld [vmem:[#allocation4 + $0x8] sm:$0xff]
        %v528 = vld [vmem:[#allocation4 + $0x10] sm:$0xff]
        %v529 = vld [vmem:[#allocation4 + $0x18] sm:$0xff]
        %v530 = vld [vmem:[#allocation4 + $0x20] sm:$0xff]
        %v531 = vld [vmem:[#allocation4 + $0x28] sm:$0xff]
        %v532 = vld [vmem:[#allocation4 + $0x30] sm:$0xff]
        %v533 = vld [vmem:[#allocation4 + $0x38] sm:$0xff]
        %v534 = vld [vmem:[%s510] sm:$0x3]
        %v536 = vlaneseq
        %v537 = vshrl.u32 %v536, 7
        %v538 = vsub.s32 0, %v537
        %v539 = vrot.slane %v534, %v538
        %v540 = vlaneseq
        %v541 = vshrl.u32 %v540, 7
        %v542 = vsub.s32 1, %v541
        %v543 = vrot.slane %v534, %v542
        %vm546 = vcmask 261120
        %v548 = vsel %vm546, %v524, 0
        %v551 = vsel %vm546, %v525, 0
        %553 = vmatprep.subr.mxu0 %v527
        %554 = vmatpush1.msra.mxu0 %v526
        %555 = vmatprep.subr.mxu0 %v529
        %556 = vmatpush1.msra.mxu0 %v528
        %557 = vmatprep.subr.mxu0 %v531
        %558 = vmatpush1.msra.mxu0 %v530
        %559 = vmatprep.subr.mxu0 %v533
        %560 = vmatpush1.msra.mxu0 %v532
        %561 = vmatprep.subr.mxu0 0.0
        %562 = vmatpush1.msra.mxu0 0.0
        %563 = vmatprep.subr.mxu0 0.0
        %564 = vmatpush1.msra.mxu0 0.0
        %565 = vmatprep.subr.mxu0 0.0
        %566 = vmatpush1.msra.mxu0 0.0
        %567 = vmatprep.subr.mxu0 0.0
        %568 = vmatpush1.msra.mxu0 0.0
        %569 = vmatprep.subr.mxu0 0.0
        %570 = vmatpush1.msra.mxu0 0.0
        %571 = vmatprep.subr.mxu0 0.0
        %572 = vmatpush1.msra.mxu0 0.0
        %573 = vmatprep.subr.mxu0 0.0
        %574 = vmatpush1.msra.mxu0 0.0
        %575 = vmatprep.subr.mxu0 0.0
        %576 = vmatpush1.msra.mxu0 0.0
        %577 = vmatprep.subr.mxu0 0.0
        %578 = vmatpush1.msra.mxu0 0.0
        %579 = vmatprep.subr.mxu0 0.0
        %580 = vmatpush1.msra.mxu0 0.0
        %581 = vmatprep.subr.mxu0 0.0
        %582 = vmatpush1.msra.mxu0 0.0
        %583 = vmatprep.subr.mxu0 0.0
        %584 = vmatpush1.msra.mxu0 0.0
        %585 = vmatprep.subr.mxu0 0.0
        %586 = vmatpush1.msra.mxu0 0.0
        %587 = vmatprep.subr.mxu0 0.0
        %588 = vmatpush1.msra.mxu0 0.0
        %589 = vmatprep.subr.mxu0 0.0
        %590 = vmatpush1.msra.mxu0 0.0
        %591 = vmatprep.subr.mxu0 0.0
        %592 = vmatpush1.msra.mxu0 0.0
        %593 = vmatprep.subr.mxu0 0.0
        %594 = vmatpush1.msra.mxu0 0.0
        %595 = vmatprep.subr.mxu0 0.0
        %596 = vmatpush1.msra.mxu0 0.0
        %597 = vmatprep.subr.mxu0 0.0
        %598 = vmatpush1.msra.mxu0 0.0
        %599 = vmatprep.subr.mxu0 0.0
        %600 = vmatpush1.msra.mxu0 0.0
        %601 = vmatprep.subr.mxu0 0.0
        %602 = vmatpush1.msra.mxu0 0.0
        %603 = vmatprep.subr.mxu0 0.0
        %604 = vmatpush1.msra.mxu0 0.0
        %605 = vmatprep.subr.mxu0 0.0
        %606 = vmatpush1.msra.mxu0 0.0
        %607 = vmatprep.subr.mxu0 0.0
        %608 = vmatpush1.msra.mxu0 0.0
        %609 = vmatprep.subr.mxu0 0.0
        %610 = vmatpush1.msra.mxu0 0.0
        %611 = vmatprep.subr.mxu0 0.0
        %612 = vmatpush1.msra.mxu0 0.0
        %613 = vmatprep.subr.mxu0 0.0
        %614 = vmatpush1.msra.mxu0 0.0
        %615 = vmatprep.subr.mxu0 0.0
        %616 = vmatpush1.msra.mxu0 0.0
        %617 = vmatprep.mubr.f32.mxu0 0.0
        %618 = vmatmul.mubr.f32.gmra.mrb[0].mxu0 %v548
        %v619 = vpop.f32.mrb[0].mxu0
        %v620 = vadd.f32 %v539, %v619
        %v621 = vpop.f32.mrb[0].mxu0
        %v622 = vadd.f32 %v543, %v621
        %623 = vmatprep.mubr.f32.mxu0 0.0
        %624 = vmatmul.mubr.f32.gmra.mrb[0].mxu0 %v551
        %v625 = vpop.f32.mrb[0].mxu0
        %v626 = vadd.f32 %v539, %v625
        %v627 = vpop.f32.mrb[0].mxu0
        %v628 = vadd.f32 %v543, %v627
        %629 = vdwg.mxu0
        %v630 = vxor.u32 %v620, 2147483648
        %v631 = vxor.u32 %v622, 2147483648
        %v632 = vxor.u32 %v626, 2147483648
        %v633 = vxor.u32 %v628, 2147483648
        %v634 = vmul.f32 %v630, 1.442695
        %v635 = vpow.pop %v634
        %v636 = vmul.f32 %v631, 1.442695
        %v637 = vpow.pop %v636
        %v638 = vmul.f32 %v632, 1.442695
        %v639 = vpow.pop %v638
        %v640 = vmul.f32 %v633, 1.442695
        %v641 = vpow.pop %v640
        %v642 = vadd.f32 %v635, 1.0
        %v643 = vadd.f32 %v637, 1.0
        %v644 = vadd.f32 %v639, 1.0
        %v645 = vadd.f32 %v641, 1.0
        %v646 = vrcp.pop %v642
        %v647 = vmul.f32 1.0, %v646
        %v648 = vrcp.pop %v643
        %v649 = vmul.f32 1.0, %v648
        %v650 = vrcp.pop %v644
        %v651 = vmul.f32 1.0, %v650
        %v652 = vrcp.pop %v645
        %v653 = vmul.f32 1.0, %v652
        %v654 = vmul.f32 %v620, %v647
        %v655 = vmul.f32 %v622, %v649
        %v656 = vmul.f32 %v626, %v651
        %v657 = vmul.f32 %v628, %v653
        %v658 = vld [vmem:[#allocation6] sm:$0xff]
        %v659 = vld [vmem:[#allocation6 + $0x8] sm:$0xff]
        %v660 = vld [vmem:[#allocation6 + $0x10] sm:$0xff]
        %v661 = vld [vmem:[#allocation6 + $0x18] sm:$0xff]
        %v662 = vld [vmem:[#allocation6 + $0x20] sm:$0xff]
        %v663 = vld [vmem:[#allocation6 + $0x28] sm:$0xff]
        %v664 = vld [vmem:[#allocation6 + $0x30] sm:$0xff]
        %v665 = vld [vmem:[#allocation6 + $0x38] sm:$0xff]
        %v666 = vld [vmem:[#allocation6 + $0x40] sm:$0xff]
        %v667 = vld [vmem:[#allocation6 + $0x48] sm:$0xff]
        %v668 = vld [vmem:[#allocation6 + $0x50] sm:$0xff]
        %v669 = vld [vmem:[#allocation6 + $0x58] sm:$0xff]
        %v670 = vld [vmem:[#allocation6 + $0x60] sm:$0xff]
        %v671 = vld [vmem:[#allocation6 + $0x68] sm:$0xff]
        %v672 = vld [vmem:[#allocation6 + $0x70] sm:$0xff]
        %v673 = vld [vmem:[#allocation6 + $0x78] sm:$0xff]
        %v674 = vld [vmem:[#allocation6 + $0x80] sm:$0xff]
        %v675 = vld [vmem:[#allocation6 + $0x88] sm:$0xff]
        %v676 = vld [vmem:[#allocation6 + $0x90] sm:$0xff]
        %v677 = vld [vmem:[#allocation6 + $0x98] sm:$0xff]
        %v678 = vld [vmem:[#allocation6 + $0xa0] sm:$0xff]
        %v679 = vld [vmem:[#allocation6 + $0xa8] sm:$0xff]
        %v680 = vld [vmem:[#allocation6 + $0xb0] sm:$0xff]
        %v681 = vld [vmem:[#allocation6 + $0xb8] sm:$0xff]
        %v682 = vld [vmem:[#allocation6 + $0xc0] sm:$0xff]
        %v683 = vld [vmem:[#allocation6 + $0xc8] sm:$0xff]
        %v684 = vld [vmem:[#allocation6 + $0xd0] sm:$0xff]
        %v685 = vld [vmem:[#allocation6 + $0xd8] sm:$0xff]
        %v686 = vld [vmem:[#allocation6 + $0xe0] sm:$0xff]
        %v687 = vld [vmem:[#allocation6 + $0xe8] sm:$0xff]
        %v688 = vld [vmem:[#allocation6 + $0xf0] sm:$0xff]
        %v689 = vld [vmem:[#allocation6 + $0xf8] sm:$0xff]
        %v690 = vld [vmem:[%s513] sm:$0x1]
        %v692 = vlaneseq
        %v693 = vshrl.u32 %v692, 7
        %v694 = vsub.s32 0, %v693
        %v695 = vrot.slane %v690, %v694
        %697 = vmatprep.subr.mxu0 0.0
        %698 = vmatpush1.msra.mxu0 %v658
        %699 = vmatprep.subr.mxu0 0.0
        %700 = vmatpush1.msra.mxu0 %v659
        %701 = vmatprep.subr.mxu0 0.0
        %702 = vmatpush1.msra.mxu0 %v660
        %703 = vmatprep.subr.mxu0 0.0
        %704 = vmatpush1.msra.mxu0 %v661
        %705 = vmatprep.subr.mxu0 0.0
        %706 = vmatpush1.msra.mxu0 %v662
        %707 = vmatprep.subr.mxu0 0.0
        %708 = vmatpush1.msra.mxu0 %v663
        %709 = vmatprep.subr.mxu0 0.0
        %710 = vmatpush1.msra.mxu0 %v664
        %711 = vmatprep.subr.mxu0 0.0
        %712 = vmatpush1.msra.mxu0 %v665
        %713 = vmatprep.subr.mxu0 0.0
        %714 = vmatpush1.msra.mxu0 %v666
        %715 = vmatprep.subr.mxu0 0.0
        %716 = vmatpush1.msra.mxu0 %v667
        %717 = vmatprep.subr.mxu0 0.0
        %718 = vmatpush1.msra.mxu0 %v668
        %719 = vmatprep.subr.mxu0 0.0
        %720 = vmatpush1.msra.mxu0 %v669
        %721 = vmatprep.subr.mxu0 0.0
        %722 = vmatpush1.msra.mxu0 %v670
        %723 = vmatprep.subr.mxu0 0.0
        %724 = vmatpush1.msra.mxu0 %v671
        %725 = vmatprep.subr.mxu0 0.0
        %726 = vmatpush1.msra.mxu0 %v672
        %727 = vmatprep.subr.mxu0 0.0
        %728 = vmatpush1.msra.mxu0 %v673
        %729 = vmatprep.subr.mxu0 0.0
        %730 = vmatpush1.msra.mxu0 %v674
        %731 = vmatprep.subr.mxu0 0.0
        %732 = vmatpush1.msra.mxu0 %v675
        %733 = vmatprep.subr.mxu0 0.0
        %734 = vmatpush1.msra.mxu0 %v676
        %735 = vmatprep.subr.mxu0 0.0
        %736 = vmatpush1.msra.mxu0 %v677
        %737 = vmatprep.subr.mxu0 0.0
        %738 = vmatpush1.msra.mxu0 %v678
        %739 = vmatprep.subr.mxu0 0.0
        %740 = vmatpush1.msra.mxu0 %v679
        %741 = vmatprep.subr.mxu0 0.0
        %742 = vmatpush1.msra.mxu0 %v680
        %743 = vmatprep.subr.mxu0 0.0
        %744 = vmatpush1.msra.mxu0 %v681
        %745 = vmatprep.subr.mxu0 0.0
        %746 = vmatpush1.msra.mxu0 %v682
        %747 = vmatprep.subr.mxu0 0.0
        %748 = vmatpush1.msra.mxu0 %v683
        %749 = vmatprep.subr.mxu0 0.0
        %750 = vmatpush1.msra.mxu0 %v684
        %751 = vmatprep.subr.mxu0 0.0
        %752 = vmatpush1.msra.mxu0 %v685
        %753 = vmatprep.subr.mxu0 0.0
        %754 = vmatpush1.msra.mxu0 %v686
        %755 = vmatprep.subr.mxu0 0.0
        %756 = vmatpush1.msra.mxu0 %v687
        %757 = vmatprep.subr.mxu0 0.0
        %758 = vmatpush1.msra.mxu0 %v688
        %759 = vmatprep.subr.mxu0 0.0
        %760 = vmatpush1.msra.mxu0 %v689
        %761 = vmatprep.mubr.f32.mxu0 %v655
        %762 = vmatmul.mubr.f32.gmra.mrb[0].mxu0 %v654
        %v763 = vpop.f32.mrb[0].mxu0
        %v764 = vadd.f32 %v695, %v763
        %v765 = vpop.f32.mrb[0].mxu0
        %766 = vmatprep.mubr.f32.mxu0 %v657
        %767 = vmatmul.mubr.f32.gmra.mrb[0].mxu0 %v656
        %v768 = vpop.f32.mrb[0].mxu0
        %v769 = vadd.f32 %v695, %v768
        %v770 = vpop.f32.mrb[0].mxu0
        %771 = vdwg.mxu0
        %v772 = vxor.u32 %v764, 2147483648
        %v773 = vxor.u32 %v769, 2147483648
        %v774 = vmul.f32 %v772, 1.442695
        %v775 = vpow.pop %v774
        %v776 = vmul.f32 %v773, 1.442695
        %v777 = vpow.pop %v776
        %v778 = vadd.f32 %v775, 1.0
        %v779 = vadd.f32 %v777, 1.0
        %v780 = vrcp.pop %v778
        %v781 = vmul.f32 1.0, %v780
        %v782 = vrcp.pop %v779
        %v783 = vmul.f32 1.0, %v782
        %v784 = vmul.f32 %v764, %v781
        %v785 = vmul.f32 %v769, %v783
        %v786 = vld [vmem:[#allocation7] sm:$0xff]
        %v787 = vld [vmem:[#allocation7 + $0x8] sm:$0xff]
        %v788 = vld [vmem:[#allocation7 + $0x10] sm:$0xff]
        %v789 = vld [vmem:[#allocation7 + $0x18] sm:$0xff]
        %v790 = vld [vmem:[#allocation7 + $0x20] sm:$0xff]
        %v791 = vld [vmem:[#allocation7 + $0x28] sm:$0xff]
        %v792 = vld [vmem:[#allocation7 + $0x30] sm:$0xff]
        %v793 = vld [vmem:[#allocation7 + $0x38] sm:$0xff]
        %v794 = vld [vmem:[#allocation7 + $0x40] sm:$0xff]
        %v795 = vld [vmem:[#allocation7 + $0x48] sm:$0xff]
        %v796 = vld [vmem:[#allocation7 + $0x50] sm:$0xff]
        %v797 = vld [vmem:[#allocation7 + $0x58] sm:$0xff]
        %v798 = vld [vmem:[#allocation7 + $0x60] sm:$0xff]
        %v799 = vld [vmem:[#allocation7 + $0x68] sm:$0xff]
        %v800 = vld [vmem:[#allocation7 + $0x70] sm:$0xff]
        %v801 = vld [vmem:[#allocation7 + $0x78] sm:$0xff]
        %v802 = vld [vmem:[#allocation9] sm:$0x1]
        %v804 = vlaneseq
        %v805 = vshrl.u32 %v804, 7
        %v806 = vsub.s32 0, %v805
        %v807 = vrot.slane %v802, %v806
        %809 = vmatprep.subr.mxu0 0.0
        %810 = vmatpush1.msra.mxu0 %v786
        %811 = vmatprep.subr.mxu0 0.0
        %812 = vmatpush1.msra.mxu0 %v787
        %813 = vmatprep.subr.mxu0 0.0
        %814 = vmatpush1.msra.mxu0 %v788
        %815 = vmatprep.subr.mxu0 0.0
        %816 = vmatpush1.msra.mxu0 %v789
        %817 = vmatprep.subr.mxu0 0.0
        %818 = vmatpush1.msra.mxu0 %v790
        %819 = vmatprep.subr.mxu0 0.0
        %820 = vmatpush1.msra.mxu0 %v791
        %821 = vmatprep.subr.mxu0 0.0
        %822 = vmatpush1.msra.mxu0 %v792
        %823 = vmatprep.subr.mxu0 0.0
        %824 = vmatpush1.msra.mxu0 %v793
        %825 = vmatprep.subr.mxu0 0.0
        %826 = vmatpush1.msra.mxu0 %v794
        %827 = vmatprep.subr.mxu0 0.0
        %828 = vmatpush1.msra.mxu0 %v795
        %829 = vmatprep.subr.mxu0 0.0
        %830 = vmatpush1.msra.mxu0 %v796
        %831 = vmatprep.subr.mxu0 0.0
        %832 = vmatpush1.msra.mxu0 %v797
        %833 = vmatprep.subr.mxu0 0.0
        %834 = vmatpush1.msra.mxu0 %v798
        %835 = vmatprep.subr.mxu0 0.0
        %836 = vmatpush1.msra.mxu0 %v799
        %837 = vmatprep.subr.mxu0 0.0
        %838 = vmatpush1.msra.mxu0 %v800
        %839 = vmatprep.subr.mxu0 0.0
        %840 = vmatpush1.msra.mxu0 %v801
        %841 = vmatprep.subr.mxu0 0.0
        %842 = vmatpush1.msra.mxu0 0.0
        %843 = vmatprep.subr.mxu0 0.0
        %844 = vmatpush1.msra.mxu0 0.0
        %845 = vmatprep.subr.mxu0 0.0
        %846 = vmatpush1.msra.mxu0 0.0
        %847 = vmatprep.subr.mxu0 0.0
        %848 = vmatpush1.msra.mxu0 0.0
        %849 = vmatprep.subr.mxu0 0.0
        %850 = vmatpush1.msra.mxu0 0.0
        %851 = vmatprep.subr.mxu0 0.0
        %852 = vmatpush1.msra.mxu0 0.0
        %853 = vmatprep.subr.mxu0 0.0
        %854 = vmatpush1.msra.mxu0 0.0
        %855 = vmatprep.subr.mxu0 0.0
        %856 = vmatpush1.msra.mxu0 0.0
        %857 = vmatprep.subr.mxu0 0.0
        %858 = vmatpush1.msra.mxu0 0.0
        %859 = vmatprep.subr.mxu0 0.0
        %860 = vmatpush1.msra.mxu0 0.0
        %861 = vmatprep.subr.mxu0 0.0
        %862 = vmatpush1.msra.mxu0 0.0
        %863 = vmatprep.subr.mxu0 0.0
        %864 = vmatpush1.msra.mxu0 0.0
        %865 = vmatprep.subr.mxu0 0.0
        %866 = vmatpush1.msra.mxu0 0.0
        %867 = vmatprep.subr.mxu0 0.0
        %868 = vmatpush1.msra.mxu0 0.0
        %869 = vmatprep.subr.mxu0 0.0
        %870 = vmatpush1.msra.mxu0 0.0
        %871 = vmatprep.subr.mxu0 0.0
        %872 = vmatpush1.msra.mxu0 0.0
        %873 = vmatprep.mubr.f32.mxu0 0.0
        %874 = vmatmul.mubr.f32.gmra.mrb[0].mxu0 %v784
        %v875 = vpop.f32.mrb[0].mxu0
        %v876 = vadd.f32 %v807, %v875
        %v877 = vpop.f32.mrb[0].mxu0
        %878 = vmatprep.mubr.f32.mxu0 0.0
        %879 = vmatmul.mubr.f32.gmra.mrb[0].mxu0 %v785
        %v880 = vpop.f32.mrb[0].mxu0
        %v881 = vadd.f32 %v807, %v880
        %v882 = vpop.f32.mrb[0].mxu0
        %883 = vdwg.mxu0
        %v884 = vxor.u32 %v876, 2147483648
        %v885 = vxor.u32 %v881, 2147483648
        %v886 = vmul.f32 %v884, 1.442695
        %v887 = vpow.pop %v886
        %v888 = vmul.f32 %v885, 1.442695
        %v889 = vpow.pop %v888
        %v890 = vadd.f32 %v887, 1.0
        %v891 = vadd.f32 %v889, 1.0
        %v892 = vrcp.pop %v890
        %v893 = vmul.f32 1.0, %v892
        %v894 = vrcp.pop %v891
        %v895 = vmul.f32 1.0, %v894
        %v896 = vld [vmem:[#allocation10] sm:$0xff]
        %v897 = vld [vmem:[#allocation10 + $0x8] sm:$0xff]
        %v898 = vld [vmem:[#allocation10 + $0x10] sm:$0xff]
        %v899 = vld [vmem:[#allocation10 + $0x18] sm:$0xff]
        %v900 = vld [vmem:[#allocation10 + $0x20] sm:$0xff]
        %v901 = vld [vmem:[#allocation10 + $0x28] sm:$0xff]
        %v902 = vld [vmem:[#allocation10 + $0x30] sm:$0xff]
        %v903 = vld [vmem:[#allocation10 + $0x38] sm:$0xff]
        %v904 = vld [vmem:[#allocation10 + $0x40] sm:$0xff]
        %v905 = vld [vmem:[#allocation10 + $0x48] sm:$0xff]
        %v906 = vld [vmem:[#allocation10 + $0x50] sm:$0xff]
        %v907 = vld [vmem:[#allocation10 + $0x58] sm:$0xff]
        %v908 = vld [vmem:[#allocation10 + $0x60] sm:$0xff]
        %v909 = vld [vmem:[#allocation10 + $0x68] sm:$0xff]
        %v910 = vld [vmem:[#allocation10 + $0x70] sm:$0xff]
        %v911 = vld [vmem:[#allocation10 + $0x78] sm:$0xff]
        %912 = vmatprep.subr.mxu0 0.0
        %913 = vmatpush1.msra.mxu0 %v896
        %914 = vmatprep.subr.mxu0 0.0
        %915 = vmatpush1.msra.mxu0 %v897
        %916 = vmatprep.subr.mxu0 0.0
        %917 = vmatpush1.msra.mxu0 %v898
        %918 = vmatprep.subr.mxu0 0.0
        %919 = vmatpush1.msra.mxu0 %v899
        %920 = vmatprep.subr.mxu0 0.0
        %921 = vmatpush1.msra.mxu0 %v900
        %922 = vmatprep.subr.mxu0 0.0
        %923 = vmatpush1.msra.mxu0 %v901
        %924 = vmatprep.subr.mxu0 0.0
        %925 = vmatpush1.msra.mxu0 %v902
        %926 = vmatprep.subr.mxu0 0.0
        %927 = vmatpush1.msra.mxu0 %v903
        %928 = vmatprep.subr.mxu0 0.0
        %929 = vmatpush1.msra.mxu0 %v904
        %930 = vmatprep.subr.mxu0 0.0
        %931 = vmatpush1.msra.mxu0 %v905
        %932 = vmatprep.subr.mxu0 0.0
        %933 = vmatpush1.msra.mxu0 %v906
        %934 = vmatprep.subr.mxu0 0.0
        %935 = vmatpush1.msra.mxu0 %v907
        %936 = vmatprep.subr.mxu0 0.0
        %937 = vmatpush1.msra.mxu0 %v908
        %938 = vmatprep.subr.mxu0 0.0
        %939 = vmatpush1.msra.mxu0 %v909
        %940 = vmatprep.subr.mxu0 0.0
        %941 = vmatpush1.msra.mxu0 %v910
        %942 = vmatprep.subr.mxu0 0.0
        %943 = vmatpush1.msra.mxu0 %v911
        %944 = vmatprep.subr.mxu0 0.0
        %945 = vmatpush1.msra.mxu0 0.0
        %946 = vmatprep.subr.mxu0 0.0
        %947 = vmatpush1.msra.mxu0 0.0
        %948 = vmatprep.subr.mxu0 0.0
        %949 = vmatpush1.msra.mxu0 0.0
        %950 = vmatprep.subr.mxu0 0.0
        %951 = vmatpush1.msra.mxu0 0.0
        %952 = vmatprep.subr.mxu0 0.0
        %953 = vmatpush1.msra.mxu0 0.0
        %954 = vmatprep.subr.mxu0 0.0
        %955 = vmatpush1.msra.mxu0 0.0
        %956 = vmatprep.subr.mxu0 0.0
        %957 = vmatpush1.msra.mxu0 0.0
        %958 = vmatprep.subr.mxu0 0.0
        %959 = vmatpush1.msra.mxu0 0.0
        %960 = vmatprep.subr.mxu0 0.0
        %961 = vmatpush1.msra.mxu0 0.0
        %962 = vmatprep.subr.mxu0 0.0
        %963 = vmatpush1.msra.mxu0 0.0
        %964 = vmatprep.subr.mxu0 0.0
        %965 = vmatpush1.msra.mxu0 0.0
        %966 = vmatprep.subr.mxu0 0.0
        %967 = vmatpush1.msra.mxu0 0.0
        %968 = vmatprep.subr.mxu0 0.0
        %969 = vmatpush1.msra.mxu0 0.0
        %970 = vmatprep.subr.mxu0 0.0
        %971 = vmatpush1.msra.mxu0 0.0
        %972 = vmatprep.subr.mxu0 0.0
        %973 = vmatpush1.msra.mxu0 0.0
        %974 = vmatprep.subr.mxu0 0.0
        %975 = vmatpush1.msra.mxu0 0.0
        %976 = vmatprep.mubr.f32.mxu0 0.0
        %977 = vmatmul.mubr.f32.gmra.mrb[0].mxu0 %v893
        %v978 = vpop.f32.mrb[0].mxu0
        %v979 = vadd.f32 0.0, %v978
        %v980 = vpop.f32.mrb[0].mxu0
        %981 = vmatprep.mubr.f32.mxu0 0.0
        %982 = vmatmul.mubr.f32.gmra.mrb[0].mxu0 %v895
        %v983 = vpop.f32.mrb[0].mxu0
        %v984 = vadd.f32 0.0, %v983
        %v985 = vpop.f32.mrb[0].mxu0
        %986 = vdwg.mxu0
        %v987 = vsub.f32 %v654, %v655
        %v988 = vsub.f32 %v656, %v657
        %v989 = vmul.f32 %v979, %v987
        %v990 = vmul.f32 %v984, %v988
        %v991 = vadd.f32 %v655, %v989
        %v992 = vadd.f32 %v657, %v990
        %993 = vst [vmem:[%s495] sm:$0xff] %v991
        %994 = vst [vmem:[%s495 + $0x8] sm:$0xff] %v992
        %995 = vst [vmem:[%s501] sm:$0xff] %v893
        %996 = vst [vmem:[%s501 + $0x8] sm:$0xff] %v895
        %s997 = sand.u32 %s252, 1
        %s998 = sand.u32 %s252, 1
        %s999 = smul.addr %s998, 16
        %s1000 = scalar_lea.vmem [#allocation12], %s999
        %s1001 = sand.u32 %s280, 1
        %s1002 = sand.u32 %s280, 1
        %s1003 = smul.addr %s1002, 16
        %s1004 = scalar_lea.vmem [#allocation13], %s1003
        // Predicated region
        $region77: #{_cbm_forward_impl.1} parent=51 // pred_check
          %p1005 = pneg %p262
        $region78: #{_cbm_forward_impl.1} parent=51 // pred_check_branch
          %1007 = sbr.rel (%p1005) target = $region80
        $region79: #{_cbm_forward_impl.1} parent=51 // pred_region
          %s1008 = smul.u32 2, %s32
          %s1009 = ssub.s32 3, %s1008
          %p1010 = scmp.lt.s32.totalorder %s1009, 2
          %s1011 = scalar_select %p1010, %s1009, 2
          %s1012 = smul.u32 128, %s1011
          %p1013 = scmp.ne.s32.totalorder 0, %s1012
          %s1014 = sadd.s32 %s31, %s1008
          %s1015 = smul.addr %s1014, 8
          %s1016 = scalar_lea.vmem %s8, %s1015
          // Predicated region
          $region81: #{_cbm_forward_impl.1} parent=79 // pred_check
            %p1017 = pneg %p1013
          $region82: #{_cbm_forward_impl.1} parent=79 // pred_check_branch
            %1019 = sbr.rel (%p1017) target = $region84
          $region83: #{_cbm_forward_impl.1} parent=79 // pred_region
            // Predicated region
            $region85: #{_cbm_forward_impl.1} parent=83 // pred_check
              _
            $region86: #{_cbm_forward_impl.1} parent=83 // pred_check_branch
              %1021 = sbr.rel (0) target = $region88
            $region87: #{_cbm_forward_impl.1} parent=83 // pred_region
              // Predicated region
              $region107: #{_cbm_forward_impl.1} parent=87 // pred_check
                _
              $region108: #{_cbm_forward_impl.1} parent=87 // pred_check_branch
                %1072 = sbr.rel (0) target = $region110
              $region109: #{_cbm_forward_impl.1} parent=87 // pred_region
                %s1073 = sshrl.u32 %s1011, 1
                // While loop
                $region111: #{_cbm_forward_impl.1} parent=109 // loop_pre_header
                  _
                $region112: #{_cbm_forward_impl.1} parent=109 // loop_header
                  %s1075 = sphi 0, %s1077
                  %p1076 = scmp.ge.s32.totalorder %s1075, %s1073
                  %s1080 = sphi 0, %s1089
                  %s1081 = sphi %s1000, %s1092
                  %s1082 = sphi %s1016, %s1093
                $region113: #{_cbm_forward_impl.1} parent=109 // loop_header_branch
                  %1079 = sbr.rel (%p1076) target = $region117
                $region114: #{_cbm_forward_impl.1} parent=109 // loop_body
                  %v1083 = vld [vmem:[%s1081] sm:$0xff]
                  %1084 = vst [vmem:[%s1082] sm:$0xff] %v1083
                  %v1085 = vld [vmem:[%s1081 + $0x8] sm:$0xff]
                  %1086 = vst [vmem:[%s1082 + $0x8] sm:$0xff] %v1085
                  %s1087 = sadd.s32 1, %s1080
                  %p1088 = scmp.ge.s32.totalorder %s1087, %s1073
                  %s1089 = scalar_select %p1088, 0, %s1087
                  %s1090 = smul.u32 %s1089, 16
                  %s1091 = smul.u32 %s1089, 16
                  %s1092 = scalar_lea.vmem %s1000, %s1090 [#allocation12]
                  %s1093 = scalar_lea.vmem %s1016, %s1091
                $region115: #{_cbm_forward_impl.1} parent=109 // loop_footer
                  %s1077 = sadd.s32 %s1075, 1
                $region116: #{_cbm_forward_impl.1} parent=109 // loop_footer_branch
                  %1074 = sbr.rel target = $region112
                $region117: #{_cbm_forward_impl.1} parent=109 // loop_exit
                  _
                %s1094 = sshrl.u32 %s1011, 1
                %s1095 = sand.u32 %s1011, 1
                %s1096 = smul.u32 %s1094, 2
                %s1097 = smul.u32 8, %s1096
                %s1098 = scalar_lea.vmem %s1000, %s1097 [#allocation12]
                %s1099 = smul.u32 8, %s1096
                %s1100 = scalar_lea.vmem %s1016, %s1099
                // While loop
                $region118: #{_cbm_forward_impl.1} parent=109 // loop_pre_header
                  _
                $region119: #{_cbm_forward_impl.1} parent=109 // loop_header
                  %s1102 = sphi 0, %s1104
                  %p1103 = scmp.ge.s32.totalorder %s1102, %s1095
                  %s1107 = sphi 0, %s1114
                  %s1108 = sphi %s1098, %s1117
                  %s1109 = sphi %s1100, %s1118
                $region120: #{_cbm_forward_impl.1} parent=109 // loop_header_branch
                  %1106 = sbr.rel (%p1103) target = $region124
                $region121: #{_cbm_forward_impl.1} parent=109 // loop_body
                  %v1110 = vld [vmem:[%s1108] sm:$0xff]
                  %1111 = vst [vmem:[%s1109] sm:$0xff] %v1110
                  %s1112 = sadd.s32 1, %s1107
                  %p1113 = scmp.ge.s32.totalorder %s1112, %s1095
                  %s1114 = scalar_select %p1113, 0, %s1112
                  %s1115 = smul.u32 %s1114, 8
                  %s1116 = smul.u32 %s1114, 8
                  %s1117 = scalar_lea.vmem %s1098, %s1115 [#allocation12]
                  %s1118 = scalar_lea.vmem %s1100, %s1116
                $region122: #{_cbm_forward_impl.1} parent=109 // loop_footer
                  %s1104 = sadd.s32 %s1102, 1
                $region123: #{_cbm_forward_impl.1} parent=109 // loop_footer_branch
                  %1101 = sbr.rel target = $region119
                $region124: #{_cbm_forward_impl.1} parent=109 // loop_exit
                  _
              $region110: #{_cbm_forward_impl.1} parent=87 // pred_fallthru
                _
              // Predicated region
              $region125: #{_cbm_forward_impl.1} parent=87 // pred_check
                _
              $region126: #{_cbm_forward_impl.1} parent=87 // pred_check_branch
                %1120 = sbr.rel target = $region128
              $region127: #{_cbm_forward_impl.1} parent=87 // pred_region
                _
              $region128: #{_cbm_forward_impl.1} parent=87 // pred_fallthru
                _
            $region88: #{_cbm_forward_impl.1} parent=83 // pred_fallthru
              _
            // Predicated region
            $region89: #{_cbm_forward_impl.1} parent=83 // pred_check
              _
            $region90: #{_cbm_forward_impl.1} parent=83 // pred_check_branch
              %1023 = sbr.rel target = $region92
            $region91: #{_cbm_forward_impl.1} parent=83 // pred_region
              %s1025 = sshrl.u32 %s1011, 1
              // While loop
              $region93: #{_cbm_forward_impl.1} parent=91 // loop_pre_header
                _
              $region94: #{_cbm_forward_impl.1} parent=91 // loop_header
                %s1027 = sphi 0, %s1029
                %p1028 = scmp.ge.s32.totalorder %s1027, %s1025
                %s1032 = sphi 0, %s1041
                %s1033 = sphi %s1000, %s1044
                %s1034 = sphi %s1016, %s1045
              $region95: #{_cbm_forward_impl.1} parent=91 // loop_header_branch
                %1031 = sbr.rel (%p1028) target = $region99
              $region96: #{_cbm_forward_impl.1} parent=91 // loop_body
                %v1035 = vld [vmem:[%s1033] sm:$0xff]
                %1036 = vst [vmem:[%s1034] sm:$0xff] %v1035
                %v1037 = vld [vmem:[%s1033 + $0x8] sm:$0xff]
                %1038 = vst [vmem:[%s1034 + $0x8] sm:$0xff] %v1037
                %s1039 = sadd.s32 1, %s1032
                %p1040 = scmp.ge.s32.totalorder %s1039, %s1025
                %s1041 = scalar_select %p1040, 0, %s1039
                %s1042 = smul.u32 %s1041, 16
                %s1043 = smul.u32 %s1041, 16
                %s1044 = scalar_lea.vmem %s1000, %s1042 [#allocation12]
                %s1045 = scalar_lea.vmem %s1016, %s1043
              $region97: #{_cbm_forward_impl.1} parent=91 // loop_footer
                %s1029 = sadd.s32 %s1027, 1
              $region98: #{_cbm_forward_impl.1} parent=91 // loop_footer_branch
                %1026 = sbr.rel target = $region94
              $region99: #{_cbm_forward_impl.1} parent=91 // loop_exit
                _
              %s1046 = sshrl.u32 %s1011, 1
              %s1047 = sand.u32 %s1011, 1
              %s1048 = smul.u32 %s1046, 2
              %s1049 = smul.u32 8, %s1048
              %s1050 = scalar_lea.vmem %s1000, %s1049 [#allocation12]
              %s1051 = smul.u32 8, %s1048
              %s1052 = scalar_lea.vmem %s1016, %s1051
              // While loop
              $region100: #{_cbm_forward_impl.1} parent=91 // loop_pre_header
                _
              $region101: #{_cbm_forward_impl.1} parent=91 // loop_header
                %s1054 = sphi 0, %s1056
                %p1055 = scmp.ge.s32.totalorder %s1054, %s1047
                %s1059 = sphi 0, %s1066
                %s1060 = sphi %s1050, %s1069
                %s1061 = sphi %s1052, %s1070
              $region102: #{_cbm_forward_impl.1} parent=91 // loop_header_branch
                %1058 = sbr.rel (%p1055) target = $region106
              $region103: #{_cbm_forward_impl.1} parent=91 // loop_body
                %v1062 = vld [vmem:[%s1060] sm:$0xff]
                %1063 = vst [vmem:[%s1061] sm:$0xff] %v1062
                %s1064 = sadd.s32 1, %s1059
                %p1065 = scmp.ge.s32.totalorder %s1064, %s1047
                %s1066 = scalar_select %p1065, 0, %s1064
                %s1067 = smul.u32 %s1066, 8
                %s1068 = smul.u32 %s1066, 8
                %s1069 = scalar_lea.vmem %s1050, %s1067 [#allocation12]
                %s1070 = scalar_lea.vmem %s1052, %s1068
              $region104: #{_cbm_forward_impl.1} parent=91 // loop_footer
                %s1056 = sadd.s32 %s1054, 1
              $region105: #{_cbm_forward_impl.1} parent=91 // loop_footer_branch
                %1053 = sbr.rel target = $region101
              $region106: #{_cbm_forward_impl.1} parent=91 // loop_exit
                _
            $region92: #{_cbm_forward_impl.1} parent=83 // pred_fallthru
              _
          $region84: #{_cbm_forward_impl.1} parent=79 // pred_fallthru
            _
          %1121 = vnop
        $region80: #{_cbm_forward_impl.1} parent=51 // pred_fallthru
          _
        // Predicated region
        $region129: #{_cbm_forward_impl.1} parent=51 // pred_check
          %p1122 = pneg %p290
        $region130: #{_cbm_forward_impl.1} parent=51 // pred_check_branch
          %1124 = sbr.rel (%p1122) target = $region132
        $region131: #{_cbm_forward_impl.1} parent=51 // pred_region
          %s1125 = smul.u32 2, %s32
          %s1126 = ssub.s32 3, %s1125
          %p1127 = scmp.lt.s32.totalorder %s1126, 2
          %s1128 = scalar_select %p1127, %s1126, 2
          %s1129 = smul.u32 128, %s1128
          %p1130 = scmp.ne.s32.totalorder 0, %s1129
          %s1131 = sadd.s32 %s31, %s1125
          %s1132 = smul.addr %s1131, 8
          %s1133 = scalar_lea.vmem %s9, %s1132
          // Predicated region
          $region133: #{_cbm_forward_impl.1} parent=131 // pred_check
            %p1134 = pneg %p1130
          $region134: #{_cbm_forward_impl.1} parent=131 // pred_check_branch
            %1136 = sbr.rel (%p1134) target = $region136
          $region135: #{_cbm_forward_impl.1} parent=131 // pred_region
            // Predicated region
            $region137: #{_cbm_forward_impl.1} parent=135 // pred_check
              _
            $region138: #{_cbm_forward_impl.1} parent=135 // pred_check_branch
              %1138 = sbr.rel (0) target = $region140
            $region139: #{_cbm_forward_impl.1} parent=135 // pred_region
              // Predicated region
              $region159: #{_cbm_forward_impl.1} parent=139 // pred_check
                _
              $region160: #{_cbm_forward_impl.1} parent=139 // pred_check_branch
                %1189 = sbr.rel (0) target = $region162
              $region161: #{_cbm_forward_impl.1} parent=139 // pred_region
                %s1190 = sshrl.u32 %s1128, 1
                // While loop
                $region163: #{_cbm_forward_impl.1} parent=161 // loop_pre_header
                  _
                $region164: #{_cbm_forward_impl.1} parent=161 // loop_header
                  %s1192 = sphi 0, %s1194
                  %p1193 = scmp.ge.s32.totalorder %s1192, %s1190
                  %s1197 = sphi 0, %s1206
                  %s1198 = sphi %s1004, %s1209
                  %s1199 = sphi %s1133, %s1210
                $region165: #{_cbm_forward_impl.1} parent=161 // loop_header_branch
                  %1196 = sbr.rel (%p1193) target = $region169
                $region166: #{_cbm_forward_impl.1} parent=161 // loop_body
                  %v1200 = vld [vmem:[%s1198] sm:$0xff]
                  %1201 = vst [vmem:[%s1199] sm:$0xff] %v1200
                  %v1202 = vld [vmem:[%s1198 + $0x8] sm:$0xff]
                  %1203 = vst [vmem:[%s1199 + $0x8] sm:$0xff] %v1202
                  %s1204 = sadd.s32 1, %s1197
                  %p1205 = scmp.ge.s32.totalorder %s1204, %s1190
                  %s1206 = scalar_select %p1205, 0, %s1204
                  %s1207 = smul.u32 %s1206, 16
                  %s1208 = smul.u32 %s1206, 16
                  %s1209 = scalar_lea.vmem %s1004, %s1207 [#allocation13]
                  %s1210 = scalar_lea.vmem %s1133, %s1208
                $region167: #{_cbm_forward_impl.1} parent=161 // loop_footer
                  %s1194 = sadd.s32 %s1192, 1
                $region168: #{_cbm_forward_impl.1} parent=161 // loop_footer_branch
                  %1191 = sbr.rel target = $region164
                $region169: #{_cbm_forward_impl.1} parent=161 // loop_exit
                  _
                %s1211 = sshrl.u32 %s1128, 1
                %s1212 = sand.u32 %s1128, 1
                %s1213 = smul.u32 %s1211, 2
                %s1214 = smul.u32 8, %s1213
                %s1215 = scalar_lea.vmem %s1004, %s1214 [#allocation13]
                %s1216 = smul.u32 8, %s1213
                %s1217 = scalar_lea.vmem %s1133, %s1216
                // While loop
                $region170: #{_cbm_forward_impl.1} parent=161 // loop_pre_header
                  _
                $region171: #{_cbm_forward_impl.1} parent=161 // loop_header
                  %s1219 = sphi 0, %s1221
                  %p1220 = scmp.ge.s32.totalorder %s1219, %s1212
                  %s1224 = sphi 0, %s1231
                  %s1225 = sphi %s1215, %s1234
                  %s1226 = sphi %s1217, %s1235
                $region172: #{_cbm_forward_impl.1} parent=161 // loop_header_branch
                  %1223 = sbr.rel (%p1220) target = $region176
                $region173: #{_cbm_forward_impl.1} parent=161 // loop_body
                  %v1227 = vld [vmem:[%s1225] sm:$0xff]
                  %1228 = vst [vmem:[%s1226] sm:$0xff] %v1227
                  %s1229 = sadd.s32 1, %s1224
                  %p1230 = scmp.ge.s32.totalorder %s1229, %s1212
                  %s1231 = scalar_select %p1230, 0, %s1229
                  %s1232 = smul.u32 %s1231, 8
                  %s1233 = smul.u32 %s1231, 8
                  %s1234 = scalar_lea.vmem %s1215, %s1232 [#allocation13]
                  %s1235 = scalar_lea.vmem %s1217, %s1233
                $region174: #{_cbm_forward_impl.1} parent=161 // loop_footer
                  %s1221 = sadd.s32 %s1219, 1
                $region175: #{_cbm_forward_impl.1} parent=161 // loop_footer_branch
                  %1218 = sbr.rel target = $region171
                $region176: #{_cbm_forward_impl.1} parent=161 // loop_exit
                  _
              $region162: #{_cbm_forward_impl.1} parent=139 // pred_fallthru
                _
              // Predicated region
              $region177: #{_cbm_forward_impl.1} parent=139 // pred_check
                _
              $region178: #{_cbm_forward_impl.1} parent=139 // pred_check_branch
                %1237 = sbr.rel target = $region180
              $region179: #{_cbm_forward_impl.1} parent=139 // pred_region
                _
              $region180: #{_cbm_forward_impl.1} parent=139 // pred_fallthru
                _
            $region140: #{_cbm_forward_impl.1} parent=135 // pred_fallthru
              _
            // Predicated region
            $region141: #{_cbm_forward_impl.1} parent=135 // pred_check
              _
            $region142: #{_cbm_forward_impl.1} parent=135 // pred_check_branch
              %1140 = sbr.rel target = $region144
            $region143: #{_cbm_forward_impl.1} parent=135 // pred_region
              %s1142 = sshrl.u32 %s1128, 1
              // While loop
              $region145: #{_cbm_forward_impl.1} parent=143 // loop_pre_header
                _
              $region146: #{_cbm_forward_impl.1} parent=143 // loop_header
                %s1144 = sphi 0, %s1146
                %p1145 = scmp.ge.s32.totalorder %s1144, %s1142
                %s1149 = sphi 0, %s1158
                %s1150 = sphi %s1004, %s1161
                %s1151 = sphi %s1133, %s1162
              $region147: #{_cbm_forward_impl.1} parent=143 // loop_header_branch
                %1148 = sbr.rel (%p1145) target = $region151
              $region148: #{_cbm_forward_impl.1} parent=143 // loop_body
                %v1152 = vld [vmem:[%s1150] sm:$0xff]
                %1153 = vst [vmem:[%s1151] sm:$0xff] %v1152
                %v1154 = vld [vmem:[%s1150 + $0x8] sm:$0xff]
                %1155 = vst [vmem:[%s1151 + $0x8] sm:$0xff] %v1154
                %s1156 = sadd.s32 1, %s1149
                %p1157 = scmp.ge.s32.totalorder %s1156, %s1142
                %s1158 = scalar_select %p1157, 0, %s1156
                %s1159 = smul.u32 %s1158, 16
                %s1160 = smul.u32 %s1158, 16
                %s1161 = scalar_lea.vmem %s1004, %s1159 [#allocation13]
                %s1162 = scalar_lea.vmem %s1133, %s1160
              $region149: #{_cbm_forward_impl.1} parent=143 // loop_footer
                %s1146 = sadd.s32 %s1144, 1
              $region150: #{_cbm_forward_impl.1} parent=143 // loop_footer_branch
                %1143 = sbr.rel target = $region146
              $region151: #{_cbm_forward_impl.1} parent=143 // loop_exit
                _
              %s1163 = sshrl.u32 %s1128, 1
              %s1164 = sand.u32 %s1128, 1
              %s1165 = smul.u32 %s1163, 2
              %s1166 = smul.u32 8, %s1165
              %s1167 = scalar_lea.vmem %s1004, %s1166 [#allocation13]
              %s1168 = smul.u32 8, %s1165
              %s1169 = scalar_lea.vmem %s1133, %s1168
              // While loop
              $region152: #{_cbm_forward_impl.1} parent=143 // loop_pre_header
                _
              $region153: #{_cbm_forward_impl.1} parent=143 // loop_header
                %s1171 = sphi 0, %s1173
                %p1172 = scmp.ge.s32.totalorder %s1171, %s1164
                %s1176 = sphi 0, %s1183
                %s1177 = sphi %s1167, %s1186
                %s1178 = sphi %s1169, %s1187
              $region154: #{_cbm_forward_impl.1} parent=143 // loop_header_branch
                %1175 = sbr.rel (%p1172) target = $region158
              $region155: #{_cbm_forward_impl.1} parent=143 // loop_body
                %v1179 = vld [vmem:[%s1177] sm:$0xff]
                %1180 = vst [vmem:[%s1178] sm:$0xff] %v1179
                %s1181 = sadd.s32 1, %s1176
                %p1182 = scmp.ge.s32.totalorder %s1181, %s1164
                %s1183 = scalar_select %p1182, 0, %s1181
                %s1184 = smul.u32 %s1183, 8
                %s1185 = smul.u32 %s1183, 8
                %s1186 = scalar_lea.vmem %s1167, %s1184 [#allocation13]
                %s1187 = scalar_lea.vmem %s1169, %s1185
              $region156: #{_cbm_forward_impl.1} parent=143 // loop_footer
                %s1173 = sadd.s32 %s1171, 1
              $region157: #{_cbm_forward_impl.1} parent=143 // loop_footer_branch
                %1170 = sbr.rel target = $region153
              $region158: #{_cbm_forward_impl.1} parent=143 // loop_exit
                _
            $region144: #{_cbm_forward_impl.1} parent=135 // pred_fallthru
              _
          $region136: #{_cbm_forward_impl.1} parent=131 // pred_fallthru
            _
          %1238 = vnop
        $region132: #{_cbm_forward_impl.1} parent=51 // pred_fallthru
          _
      $region52: #{_cbm_forward_impl.1} parent=5 // pred_fallthru
        _
      %p1239 = scmp.le.s32.totalorder 2, %s22
      // Predicated region
      $region181: #{_cbm_forward_impl.1} parent=5 // pred_check
        %p1240 = pneg %p1239
      $region182: #{_cbm_forward_impl.1} parent=5 // pred_check_branch
        %1242 = sbr.rel (%p1240) target = $region184
      $region183: #{_cbm_forward_impl.1} parent=5 // pred_region
        %s1243 = ssub.s32 %s22, 2
        // Predicated region
        $region185: #{_cbm_forward_impl.1} parent=183 // pred_check
          %p1244 = pneg %p268
        $region186: #{_cbm_forward_impl.1} parent=183 // pred_check_branch
          %1246 = sbr.rel (%p1244) target = $region188
        $region187: #{_cbm_forward_impl.1} parent=183 // pred_region
          %s1247 = sand.u32 %s253, 1
          %s1248 = sand.u32 %s253, 1
          %s1249 = smul.addr %s1248, 16
          %s1250 = scalar_lea.vmem [#allocation12], %s1249
        $region188: #{_cbm_forward_impl.1} parent=183 // pred_fallthru
          _
        // Predicated region
        $region189: #{_cbm_forward_impl.1} parent=183 // pred_check
          %p1251 = pneg %p296
        $region190: #{_cbm_forward_impl.1} parent=183 // pred_check_branch
          %1253 = sbr.rel (%p1251) target = $region192
        $region191: #{_cbm_forward_impl.1} parent=183 // pred_region
          %s1254 = sand.u32 %s281, 1
          %s1255 = sand.u32 %s281, 1
          %s1256 = smul.addr %s1255, 16
          %s1257 = scalar_lea.vmem [#allocation13], %s1256
        $region192: #{_cbm_forward_impl.1} parent=183 // pred_fallthru
          _
      $region184: #{_cbm_forward_impl.1} parent=5 // pred_fallthru
        _
    $region6: #{_cbm_forward_impl.1} parent=1 // loop_footer
      %s26 = sadd.s32 1, %s22
    $region7: #{_cbm_forward_impl.1} parent=1 // loop_footer_branch
      %21 = sbr.rel target = $region3
    $region8: #{_cbm_forward_impl.1} parent=1 // loop_exit
      _
    %1258 = vsyncpa [#allocation3], 1
    %s1259 = scalar_lea.sflag [#allocation3], 1
    %1260 = vsyncpa %s1259, 1
    %1261 = vsyncpa [#allocation5], 1
    %1262 = vsyncpa [#allocation8], 1
    %1263 = vsyncpa [#allocation11], 1

</llo_original>
